<compile_context>
chip_gen: v7x
topology: tpu7x:2x2x1
jax: 0.10.0
libtpu: 0.0.40
codegen_flags: <defaults>
</compile_context>

<pallas_src>
import functools

import jax
import jax.numpy as jnp
from jax.experimental import pallas as pl
from jax.experimental.pallas import tpu as pltpu

_VMEM_LIMIT = 48 * 1024 * 1024  # leave headroom on v7x's 64 MiB physical VMEM


def _round_up(v, m):
    return (v + m - 1) // m * m


def _choose_tiling(n):
    """Target row/K tile and padded node dim (pad UP to the tile, never 128)."""
    tile = 512 if n > 256 else 256
    return tile, _round_up(n, tile)


def _tile_from_padded(n_pad):
    return 512 if n_pad % 512 == 0 else 256


# -----------------------------------------------------------------------------
# Fused per-layer kernel:  out = act(A_hat @ (X @ W) + b)
#   grid = (row tiles, K tiles);  A_hat tile streamed, X / W / b resident.
# -----------------------------------------------------------------------------
def _make_fused_layer_kernel(activation, valid_cols, tk):
    def kernel(a_ref, x_ref, w_ref, b_ref, out_ref, acc_ref):
        k = pl.program_id(1)

        @pl.when(k == 0)
        def _():
            acc_ref[...] = jnp.zeros_like(acc_ref)

        # k-th (tk, F) slice of the resident layer input, transformed on the fly.
        start = pl.multiple_of(k * tk, tk)
        x_blk = x_ref[pl.ds(start, tk), :]                         # (tk, F) bf16
        xw = jnp.dot(
            x_blk, w_ref[...], preferred_element_type=jnp.float32
        ).astype(jnp.bfloat16)                                     # (tk, H) bf16
        acc_ref[...] += jnp.dot(
            a_ref[...], xw, preferred_element_type=jnp.float32
        )

        @pl.when(k == pl.num_programs(1) - 1)
        def _():
            z = acc_ref[...] + b_ref[...]                          # f32 finalize
            if activation == "relu":
                out_ref[...] = jnp.maximum(z, 0.0).astype(out_ref.dtype)
            else:  # log_softmax over the first `valid_cols` real classes
                col = jax.lax.broadcasted_iota(jnp.int32, z.shape, 1)
                z = jnp.where(col < valid_cols, z, -1e30)          # mask lane pad
                m = jnp.max(z, axis=1, keepdims=True)
                s = z - m
                lse = jnp.log(jnp.sum(jnp.exp(s), axis=1, keepdims=True))
                out_ref[...] = (s - lse).astype(out_ref.dtype)

    return kernel


def _gcn_layer(a_pad, x_pad, w_pad, b_pad, tm, tk, *, activation, valid_cols,
               out_dtype):
    n_pad = a_pad.shape[0]
    f_pad = x_pad.shape[1]
    h_pad = w_pad.shape[1]
    grid = (n_pad // tm, n_pad // tk)

    flops = 2 * n_pad * n_pad * h_pad + 2 * grid[0] * n_pad * f_pad * h_pad
    bytes_accessed = int(
        a_pad.size * a_pad.dtype.itemsize          # A_hat streamed exactly once
        + x_pad.size * x_pad.dtype.itemsize        # resident layer input, read once
        + w_pad.size * w_pad.dtype.itemsize
        + n_pad * h_pad * jnp.dtype(out_dtype).itemsize
    )

    return pl.pallas_call(
        _make_fused_layer_kernel(activation, valid_cols, tk),
        out_shape=jax.ShapeDtypeStruct((n_pad, h_pad), out_dtype),
        grid_spec=pltpu.PrefetchScalarGridSpec(
            num_scalar_prefetch=0,
            grid=grid,
            in_specs=[
                pl.BlockSpec((tm, tk), lambda i, k: (i, k)),        # A_hat tile
                pl.BlockSpec((n_pad, f_pad), lambda i, k: (0, 0)),  # X (resident)
                pl.BlockSpec((f_pad, h_pad), lambda i, k: (0, 0)),  # W (resident)
                pl.BlockSpec((1, h_pad), lambda i, k: (0, 0)),      # bias (resident)
            ],
            out_specs=pl.BlockSpec((tm, h_pad), lambda i, k: (i, 0)),
            scratch_shapes=[pltpu.VMEM((tm, h_pad), jnp.float32)],
        ),
        compiler_params=pltpu.CompilerParams(
            dimension_semantics=("parallel", "arbitrary"),
            vmem_limit_bytes=_VMEM_LIMIT,
        ),
        cost_estimate=pl.CostEstimate(
            flops=flops,
            transcendentals=n_pad * h_pad if activation == "log_softmax" else 0,
            bytes_accessed=bytes_accessed,
        ),
    )(a_pad, x_pad, w_pad, b_pad)


# -----------------------------------------------------------------------------
# Graph prep (done ONCE per graph, outside the per-forward path).
# -----------------------------------------------------------------------------
def build_norm_adj(edge_index, n):
    """Dense D^-1/2 (A + I) D^-1/2 from a (2, E) edge_index (src row 0, dst row 1)."""
    # TODO(synk): for truly sparse graphs a scalar-prefetch gather formulation
    # (CSR neighbor lists in SMEM driving the XW block index_map) would replace
    # this dense O(N^2) propagation.
    src = edge_index[0]
    dst = edge_index[1]
    a = jnp.zeros((n, n), jnp.float32)
    a = a.at[dst, src].add(1.0)                    # scatter-add, matches PyG message passing
    a = a + jnp.eye(n, dtype=jnp.float32)          # self loops
    deg = jnp.sum(a, axis=1)
    dinv = jnp.where(deg > 0, 1.0 / jnp.sqrt(deg), 0.0)
    return dinv[:, None] * a * dinv[None, :]


def prepare_adjacency(a_hat):
    """Pad + cast A_hat once per graph (cache this; it is a full N^2 HBM pass)."""
    n = a_hat.shape[0]
    _, n_pad = _choose_tiling(n)
    return jnp.zeros((n_pad, n_pad), jnp.bfloat16).at[:n, :n].set(
        a_hat.astype(jnp.bfloat16)
    )


# -----------------------------------------------------------------------------
# Full forward: pad/cast the small tensors, run 2 fused layer kernels, unpad.
# -----------------------------------------------------------------------------
@jax.jit
def gcn_forward(a_pad, x, w1, b1, w2, b2):
    n, f = x.shape
    h = w1.shape[1]
    c = w2.shape[1]
    n_pad = a_pad.shape[0]
    tm = tk = _tile_from_padded(n_pad)

    f_pad = _round_up(f, 128)
    h_pad = _round_up(h, 128)
    c_pad = _round_up(c, 128)

    bf16 = jnp.bfloat16
    x_p = jnp.zeros((n_pad, f_pad), bf16).at[:n, :f].set(x.astype(bf16))
    w1_p = jnp.zeros((f_pad, h_pad), bf16).at[:f, :h].set(w1.astype(bf16))
    b1_p = jnp.zeros((1, h_pad), jnp.float32).at[:, :h].set(b1.astype(jnp.float32))
    w2_p = jnp.zeros((h_pad, c_pad), bf16).at[:h, :c].set(w2.astype(bf16))
    b2_p = jnp.zeros((1, c_pad), jnp.float32).at[:, :c].set(b2.astype(jnp.float32))

    # Layer 1: relu(A_hat @ (X @ W1) + b1)   -- single fused pallas_call
    h1 = _gcn_layer(a_pad, x_p, w1_p, b1_p, tm, tk,
                    activation="relu", valid_cols=h, out_dtype=bf16)
    # TODO(synk): F.dropout(p, training=self.training) — identity in eval mode.

    # Layer 2: log_softmax(A_hat @ (H1 @ W2) + b2, dim=1)  -- single fused call
    z = _gcn_layer(a_pad, h1, w2_p, b2_p, tm, tk,
                   activation="log_softmax", valid_cols=c, out_dtype=jnp.float32)
    return z[:n, :c]


# -----------------------------------------------------------------------------
# Helpers for the demo problem.
# -----------------------------------------------------------------------------
def glorot(key, fan_in, fan_out):
    lim = jnp.sqrt(6.0 / (fan_in + fan_out))
    return jax.random.uniform(key, (fan_in, fan_out), jnp.float32, -lim, lim)


if __name__ == "__main__":
    # Small deterministic problem: 300 nodes, 16 features, hidden=32, 7 classes.
    # Pads to N=512 -> one 512x512 A_hat tile per layer (lane-dense, aligned).
    N, F_IN, HID, C = 300, 16, 32, 7

    key = jax.random.PRNGKey(0)
    kx, kw1, kb1, kw2, kb2 = jax.random.split(key, 5)

    # Node features.
    x = jax.random.normal(kx, (N, F_IN), jnp.float32)

    # Deterministic symmetric graph: ring + a few chords (both directions).
    idx = jnp.arange(N)
    ring_src = jnp.concatenate([idx, (idx + 1) % N])
    ring_dst = jnp.concatenate([(idx + 1) % N, idx])
    chord_src = jnp.array([0, 150, 37, 211, 99, 250], jnp.int32)
    chord_dst = jnp.array([150, 0, 211, 37, 250, 99], jnp.int32)
    edge_index = jnp.stack([
        jnp.concatenate([ring_src, chord_src]).astype(jnp.int32),
        jnp.concatenate([ring_dst, chord_dst]).astype(jnp.int32),
    ])

    a_hat = build_norm_adj(edge_index, N)
    a_pad = jax.block_until_ready(prepare_adjacency(a_hat))  # once per graph

    # GCNConv parameters, stored (in_features, out_features).
    w1 = glorot(kw1, F_IN, HID)
    b1 = 0.1 * jax.random.normal(kb1, (1, HID), jnp.float32)
    w2 = glorot(kw2, HID, C)
    b2 = 0.1 * jax.random.normal(kb2, (1, C), jnp.float32)

    out = jax.block_until_ready(gcn_forward(a_pad, x, w1, b1, w2, b2))

    # Pure-JAX f32 reference of the same forward (kernel uses bf16 MXU operands,
    # so compare with a bf16-appropriate tolerance).
    h_ref = jnp.maximum(a_hat @ (x @ w1) + b1, 0.0)
    z_ref = a_hat @ (h_ref @ w2) + b2
    ref = jax.nn.log_softmax(z_ref, axis=1)

    assert out.shape == (N, C)
    err = float(jnp.max(jnp.abs(out - ref)))
    assert err < 5e-2, f"max abs err {err}"

    print("KERNEL_OK")
</pallas_src>

<mosaic_0001>
module attributes {stable_mosaic.version = 11 : i64} {
  func.func @kernel(%arg0: i32, %arg1: i32, %arg2: memref<512x512xbf16, #tpu.memory_space<vmem>>, %arg3: memref<512x128xbf16, #tpu.memory_space<vmem>>, %arg4: memref<128x128xbf16, #tpu.memory_space<vmem>>, %arg5: memref<1x128xf32, #tpu.memory_space<vmem>>, %arg6: memref<512x128xbf16, #tpu.memory_space<vmem>>, %arg7: memref<512x128xf32, #tpu.memory_space<vmem>>) attributes {dimension_semantics = [#tpu.dimension_semantics<parallel>, #tpu.dimension_semantics<arbitrary>], iteration_bounds = array<i64: 1, 1>, scalar_prefetch = 0 : i64, scratch_operands = 1 : i64, tpu.core_type = #tpu.core_type<tc>, window_params = [{transform_indices = @transform_0, window_bounds = array<i64: 512, 512>}, {pipeline_mode = #tpu.pipeline_mode<synchronous>, transform_indices = @transform_1, window_bounds = array<i64: 512, 128>}, {pipeline_mode = #tpu.pipeline_mode<synchronous>, transform_indices = @transform_2, window_bounds = array<i64: 128, 128>}, {pipeline_mode = #tpu.pipeline_mode<synchronous>, transform_indices = @transform_3, window_bounds = array<i64: 1, 128>}, {transform_indices = @transform_4, window_bounds = array<i64: 512, 128>}]} {
    %c0_i32 = arith.constant 0 : i32
    %0 = arith.cmpi eq, %arg1, %c0_i32 : i32
    %1 = arith.extui %0 : i1 to i32
    %c0_i32_0 = arith.constant 0 : i32
    %2 = arith.cmpi ne, %1, %c0_i32_0 : i32
    scf.if %2 {
      %cst_12 = arith.constant 0.000000e+00 : f32
      %18 = vector.broadcast %cst_12 : f32 to vector<512x128xf32>
      %c0_13 = arith.constant 0 : index
      %c0_14 = arith.constant 0 : index
      %19 = vector.load %arg7[%c0_13, %c0_14] : memref<512x128xf32, #tpu.memory_space<vmem>>, vector<512x128xf32>
      tpu.vector_store %arg7[%c0_13, %c0_14], %18 {strides = array<i32>} : memref<512x128xf32, #tpu.memory_space<vmem>>, vector<512x128xf32>,
    } else {
    }
    %c512_i32 = arith.constant 512 : i32
    %3 = arith.muli %arg1, %c512_i32 : i32
    %4 = tpu.assume_multiple %3, 512 : i32
    %5 = arith.index_cast %4 : i32 to index
    %c0 = arith.constant 0 : index
    %6 = vector.load %arg3[%5, %c0] : memref<512x128xbf16, #tpu.memory_space<vmem>>, vector<512x128xbf16>
    %c0_1 = arith.constant 0 : index
    %c0_2 = arith.constant 0 : index
    %7 = vector.load %arg4[%c0_1, %c0_2] : memref<128x128xbf16, #tpu.memory_space<vmem>>, vector<128x128xbf16>
    %cst = arith.constant dense<0.000000e+00> : vector<512x128xf32>
    %8 = tpu.matmul %6, %7, %cst {dimension_numbers = #tpu.dot_dimension_numbers<[1], [0], [0], [1], [0, 0, 1, 1], [], []>} : vector<512x128xbf16>, vector<128x128xbf16>, vector<512x128xf32> -> vector<512x128xf32>
    %9 = arith.truncf %8 : vector<512x128xf32> to vector<512x128xbf16>
    %c0_3 = arith.constant 0 : index
    %c0_4 = arith.constant 0 : index
    %10 = vector.load %arg7[%c0_3, %c0_4] : memref<512x128xf32, #tpu.memory_space<vmem>>, vector<512x128xf32>
    %c0_5 = arith.constant 0 : index
    %c0_6 = arith.constant 0 : index
    %11 = vector.load %arg2[%c0_5, %c0_6] : memref<512x512xbf16, #tpu.memory_space<vmem>>, vector<512x512xbf16>
    %cst_7 = arith.constant dense<0.000000e+00> : vector<512x128xf32>
    %12 = tpu.matmul %11, %9, %cst_7 {dimension_numbers = #tpu.dot_dimension_numbers<[1], [0], [0], [1], [0, 0, 1, 1], [], []>} : vector<512x512xbf16>, vector<512x128xbf16>, vector<512x128xf32> -> vector<512x128xf32>
    %13 = arith.addf %10, %12 : vector<512x128xf32>
    %c0_8 = arith.constant 0 : index
    %c0_9 = arith.constant 0 : index
    %14 = vector.load %arg7[%c0_8, %c0_9] : memref<512x128xf32, #tpu.memory_space<vmem>>, vector<512x128xf32>
    tpu.vector_store %arg7[%c0_8, %c0_9], %13 {strides = array<i32>} : memref<512x128xf32, #tpu.memory_space<vmem>>, vector<512x128xf32>,
    %c0_i32_10 = arith.constant 0 : i32
    %15 = arith.cmpi eq, %arg1, %c0_i32_10 : i32
    %16 = arith.extui %15 : i1 to i32
    %c0_i32_11 = arith.constant 0 : i32
    %17 = arith.cmpi ne, %16, %c0_i32_11 : i32
    scf.if %17 {
      %c0_12 = arith.constant 0 : index
      %c0_13 = arith.constant 0 : index
      %18 = vector.load %arg7[%c0_12, %c0_13] : memref<512x128xf32, #tpu.memory_space<vmem>>, vector<512x128xf32>
      %c0_14 = arith.constant 0 : index
      %c0_15 = arith.constant 0 : index
      %19 = vector.load %arg5[%c0_14, %c0_15] : memref<1x128xf32, #tpu.memory_space<vmem>>, vector<1x128xf32>
      %20 = vector.broadcast %19 : vector<1x128xf32> to vector<512x128xf32>
      %21 = arith.addf %18, %20 : vector<512x128xf32>
      %cst_16 = arith.constant 0.000000e+00 : f32
      %22 = vector.broadcast %cst_16 : f32 to vector<512x128xf32>
      %23 = arith.maximumf %21, %22 : vector<512x128xf32>
      %24 = arith.truncf %23 : vector<512x128xf32> to vector<512x128xbf16>
      %c0_17 = arith.constant 0 : index
      %c0_18 = arith.constant 0 : index
      %25 = vector.load %arg6[%c0_17, %c0_18] : memref<512x128xbf16, #tpu.memory_space<vmem>>, vector<512x128xbf16>
      tpu.vector_store %arg6[%c0_17, %c0_18], %24 {strides = array<i32>} : memref<512x128xbf16, #tpu.memory_space<vmem>>, vector<512x128xbf16>,
    } else {
    }
    return
  }
  func.func @transform_0(%arg0: i32, %arg1: i32) -> (i32, i32) {
    %c0_i32 = arith.constant 0 : i32
    return %arg0, %arg1 : i32, i32
  }
  func.func @transform_1(%arg0: i32, %arg1: i32) -> (i32, i32) {
    %c0_i32 = arith.constant 0 : i32
    %c0_i32_0 = arith.constant 0 : i32
    %c0_i32_1 = arith.constant 0 : i32
    return %c0_i32, %c0_i32_0 : i32, i32
  }
  func.func @transform_2(%arg0: i32, %arg1: i32) -> (i32, i32) {
    %c0_i32 = arith.constant 0 : i32
    %c0_i32_0 = arith.constant 0 : i32
    %c0_i32_1 = arith.constant 0 : i32
    return %c0_i32, %c0_i32_0 : i32, i32
  }
  func.func @transform_3(%arg0: i32, %arg1: i32) -> (i32, i32) {
    %c0_i32 = arith.constant 0 : i32
    %c0_i32_0 = arith.constant 0 : i32
    %c0_i32_1 = arith.constant 0 : i32
    return %c0_i32, %c0_i32_0 : i32, i32
  }
  func.func @transform_4(%arg0: i32, %arg1: i32) -> (i32, i32) {
    %c0_i32 = arith.constant 0 : i32
    %c0_i32_0 = arith.constant 0 : i32
    return %arg0, %c0_i32 : i32, i32
  }
}

module attributes {stable_mosaic.version = 11 : i64} {
  func.func @kernel(%arg0: i32, %arg1: i32, %arg2: memref<512x512xbf16, #tpu.memory_space<vmem>>, %arg3: memref<512x128xbf16, #tpu.memory_space<vmem>>, %arg4: memref<128x128xbf16, #tpu.memory_space<vmem>>, %arg5: memref<1x128xf32, #tpu.memory_space<vmem>>, %arg6: memref<512x128xf32, #tpu.memory_space<vmem>>, %arg7: memref<512x128xf32, #tpu.memory_space<vmem>>) attributes {dimension_semantics = [#tpu.dimension_semantics<parallel>, #tpu.dimension_semantics<arbitrary>], iteration_bounds = array<i64: 1, 1>, scalar_prefetch = 0 : i64, scratch_operands = 1 : i64, tpu.core_type = #tpu.core_type<tc>, window_params = [{transform_indices = @transform_0, window_bounds = array<i64: 512, 512>}, {pipeline_mode = #tpu.pipeline_mode<synchronous>, transform_indices = @transform_1, window_bounds = array<i64: 512, 128>}, {pipeline_mode = #tpu.pipeline_mode<synchronous>, transform_indices = @transform_2, window_bounds = array<i64: 128, 128>}, {pipeline_mode = #tpu.pipeline_mode<synchronous>, transform_indices = @transform_3, window_bounds = array<i64: 1, 128>}, {transform_indices = @transform_4, window_bounds = array<i64: 512, 128>}]} {
    %c0_i32 = arith.constant 0 : i32
    %0 = arith.cmpi eq, %arg1, %c0_i32 : i32
    %1 = arith.extui %0 : i1 to i32
    %c0_i32_0 = arith.constant 0 : i32
    %2 = arith.cmpi ne, %1, %c0_i32_0 : i32
    scf.if %2 {
      %cst_12 = arith.constant 0.000000e+00 : f32
      %18 = vector.broadcast %cst_12 : f32 to vector<512x128xf32>
      %c0_13 = arith.constant 0 : index
      %c0_14 = arith.constant 0 : index
      %19 = vector.load %arg7[%c0_13, %c0_14] : memref<512x128xf32, #tpu.memory_space<vmem>>, vector<512x128xf32>
      tpu.vector_store %arg7[%c0_13, %c0_14], %18 {strides = array<i32>} : memref<512x128xf32, #tpu.memory_space<vmem>>, vector<512x128xf32>,
    } else {
    }
    %c512_i32 = arith.constant 512 : i32
    %3 = arith.muli %arg1, %c512_i32 : i32
    %4 = tpu.assume_multiple %3, 512 : i32
    %5 = arith.index_cast %4 : i32 to index
    %c0 = arith.constant 0 : index
    %6 = vector.load %arg3[%5, %c0] : memref<512x128xbf16, #tpu.memory_space<vmem>>, vector<512x128xbf16>
    %c0_1 = arith.constant 0 : index
    %c0_2 = arith.constant 0 : index
    %7 = vector.load %arg4[%c0_1, %c0_2] : memref<128x128xbf16, #tpu.memory_space<vmem>>, vector<128x128xbf16>
    %cst = arith.constant dense<0.000000e+00> : vector<512x128xf32>
    %8 = tpu.matmul %6, %7, %cst {dimension_numbers = #tpu.dot_dimension_numbers<[1], [0], [0], [1], [0, 0, 1, 1], [], []>} : vector<512x128xbf16>, vector<128x128xbf16>, vector<512x128xf32> -> vector<512x128xf32>
    %9 = arith.truncf %8 : vector<512x128xf32> to vector<512x128xbf16>
    %c0_3 = arith.constant 0 : index
    %c0_4 = arith.constant 0 : index
    %10 = vector.load %arg7[%c0_3, %c0_4] : memref<512x128xf32, #tpu.memory_space<vmem>>, vector<512x128xf32>
    %c0_5 = arith.constant 0 : index
    %c0_6 = arith.constant 0 : index
    %11 = vector.load %arg2[%c0_5, %c0_6] : memref<512x512xbf16, #tpu.memory_space<vmem>>, vector<512x512xbf16>
    %cst_7 = arith.constant dense<0.000000e+00> : vector<512x128xf32>
    %12 = tpu.matmul %11, %9, %cst_7 {dimension_numbers = #tpu.dot_dimension_numbers<[1], [0], [0], [1], [0, 0, 1, 1], [], []>} : vector<512x512xbf16>, vector<512x128xbf16>, vector<512x128xf32> -> vector<512x128xf32>
    %13 = arith.addf %10, %12 : vector<512x128xf32>
    %c0_8 = arith.constant 0 : index
    %c0_9 = arith.constant 0 : index
    %14 = vector.load %arg7[%c0_8, %c0_9] : memref<512x128xf32, #tpu.memory_space<vmem>>, vector<512x128xf32>
    tpu.vector_store %arg7[%c0_8, %c0_9], %13 {strides = array<i32>} : memref<512x128xf32, #tpu.memory_space<vmem>>, vector<512x128xf32>,
    %c0_i32_10 = arith.constant 0 : i32
    %15 = arith.cmpi eq, %arg1, %c0_i32_10 : i32
    %16 = arith.extui %15 : i1 to i32
    %c0_i32_11 = arith.constant 0 : i32
    %17 = arith.cmpi ne, %16, %c0_i32_11 : i32
    scf.if %17 {
      %c0_12 = arith.constant 0 : index
      %c0_13 = arith.constant 0 : index
      %18 = vector.load %arg7[%c0_12, %c0_13] : memref<512x128xf32, #tpu.memory_space<vmem>>, vector<512x128xf32>
      %c0_14 = arith.constant 0 : index
      %c0_15 = arith.constant 0 : index
      %19 = vector.load %arg5[%c0_14, %c0_15] : memref<1x128xf32, #tpu.memory_space<vmem>>, vector<1x128xf32>
      %20 = vector.broadcast %19 : vector<1x128xf32> to vector<512x128xf32>
      %21 = arith.addf %18, %20 : vector<512x128xf32>
      %22 = tpu.iota {dimensions = array<i32: 1>} : vector<512x128xi32>
      %c7_i32 = arith.constant 7 : i32
      %23 = vector.broadcast %c7_i32 : i32 to vector<512x128xi32>
      %24 = arith.cmpi slt, %22, %23 : vector<512x128xi32>
      %cst_16 = arith.constant -1.000000e+30 : f32
      %25 = vector.broadcast %cst_16 : f32 to vector<512x128xf32>
      %26 = arith.select %24, %21, %25 : vector<512x128xi1>, vector<512x128xf32>
      %cst_17 = arith.constant dense<0xFF800000> : vector<512xf32>
      %27 = vector.multi_reduction <maximumf>, %26, %cst_17 [1] : vector<512x128xf32> to vector<512xf32>
      %28 = vector.shape_cast %27 : vector<512xf32> to vector<512x1xf32>
      %29 = vector.broadcast %28 : vector<512x1xf32> to vector<512x128xf32>
      %30 = arith.subf %26, %29 : vector<512x128xf32>
      %31 = math.exp %30 : vector<512x128xf32>
      %cst_18 = arith.constant dense<0.000000e+00> : vector<512xf32>
      %32 = vector.multi_reduction <add>, %31, %cst_18 [1] : vector<512x128xf32> to vector<512xf32>
      %33 = vector.shape_cast %32 : vector<512xf32> to vector<512x1xf32>
      %34 = math.log %33 : vector<512x1xf32>
      %35 = vector.broadcast %34 : vector<512x1xf32> to vector<512x128xf32>
      %36 = arith.subf %30, %35 : vector<512x128xf32>
      %c0_19 = arith.constant 0 : index
      %c0_20 = arith.constant 0 : index
      %37 = vector.load %arg6[%c0_19, %c0_20] : memref<512x128xf32, #tpu.memory_space<vmem>>, vector<512x128xf32>
      tpu.vector_store %arg6[%c0_19, %c0_20], %36 {strides = array<i32>} : memref<512x128xf32, #tpu.memory_space<vmem>>, vector<512x128xf32>,
    } else {
    }
    return
  }
  func.func @transform_0(%arg0: i32, %arg1: i32) -> (i32, i32) {
    %c0_i32 = arith.constant 0 : i32
    return %arg0, %arg1 : i32, i32
  }
  func.func @transform_1(%arg0: i32, %arg1: i32) -> (i32, i32) {
    %c0_i32 = arith.constant 0 : i32
    %c0_i32_0 = arith.constant 0 : i32
    %c0_i32_1 = arith.constant 0 : i32
    return %c0_i32, %c0_i32_0 : i32, i32
  }
  func.func @transform_2(%arg0: i32, %arg1: i32) -> (i32, i32) {
    %c0_i32 = arith.constant 0 : i32
    %c0_i32_0 = arith.constant 0 : i32
    %c0_i32_1 = arith.constant 0 : i32
    return %c0_i32, %c0_i32_0 : i32, i32
  }
  func.func @transform_3(%arg0: i32, %arg1: i32) -> (i32, i32) {
    %c0_i32 = arith.constant 0 : i32
    %c0_i32_0 = arith.constant 0 : i32
    %c0_i32_1 = arith.constant 0 : i32
    return %c0_i32, %c0_i32_0 : i32, i32
  }
  func.func @transform_4(%arg0: i32, %arg1: i32) -> (i32, i32) {
    %c0_i32 = arith.constant 0 : i32
    %c0_i32_0 = arith.constant 0 : i32
    return %arg0, %c0_i32 : i32, i32
  }
}

</mosaic_0001>

<llo_original>
// kernel: gcn_forward.3
$region0: #{gcn_forward.3}
  #allocation0 [shape = 'u32[]', space=smem, size = 0x4, offset = 0x4, fixed_abs, tag = 'smem constant byte address 0x4 - core index']
  #allocation1 [shape = 'u32[144,128]{1,0:T(1,128)}', space=vmem, size = 0x12000, scoped, tag = 'internal scratch']
  #allocation2 [shape = 'f32[512,128]{1,0:T(8,128)}', space=vmem, size = 0x40000, scoped, tag = 'scratch operand']
  %s0 = inlined_call_operand.vmem [shape: bf16[512,512], index: 0, kind: input, shape index: {}]
  %s1 = inlined_call_operand.vmem [shape: bf16[512,128], index: 1, kind: input, shape index: {}]
  %s2 = inlined_call_operand.vmem [shape: bf16[128,128], index: 2, kind: input, shape index: {}]
  %s3 = inlined_call_operand.vmem [shape: f32[1,128], index: 3, kind: input, shape index: {}]
  %s4 = inlined_call_operand.vmem [shape: f32[512,128], index: 4, kind: output, shape index: {}]
  %s5 = sld [smem:[#allocation0]]
  $region34: #{gcn_forward.3} parent=0
    _
  %s7 = ssub.s32 1, %s5
  %s8 = scalar_select 0, %s7, %s5
  // Predicated region
  $region2: #{gcn_forward.3} parent=0 // pred_check
    _
  $region3: #{gcn_forward.3} parent=0 // pred_check_branch
    %10 = sbr.rel (0) target = $region5
  $region4: #{gcn_forward.3} parent=0 // pred_region
    _
  $region5: #{gcn_forward.3} parent=0 // pred_fallthru
    _
  // Predicated region
  $region6: #{gcn_forward.3} parent=0 // pred_check
    _
  $region7: #{gcn_forward.3} parent=0 // pred_check_branch
    %12 = sbr.rel (0) target = $region9
  $region8: #{gcn_forward.3} parent=0 // pred_region
    _
  $region9: #{gcn_forward.3} parent=0 // pred_fallthru
    _
  // Predicated region
  $region10: #{gcn_forward.3} parent=0 // pred_check
    _
  $region11: #{gcn_forward.3} parent=0 // pred_check_branch
    %14 = sbr.rel (0) target = $region13
  $region12: #{gcn_forward.3} parent=0 // pred_region
    _
  $region13: #{gcn_forward.3} parent=0 // pred_fallthru
    _
  // Predicated region
  $region14: #{gcn_forward.3} parent=0 // pred_check
    _
  $region15: #{gcn_forward.3} parent=0 // pred_check_branch
    %16 = sbr.rel (0) target = $region17
  $region16: #{gcn_forward.3} parent=0 // pred_region
    _
  $region17: #{gcn_forward.3} parent=0 // pred_fallthru
    _
  %p18 = scmp.eq.s32.totalorder 0, 0
  // Predicated region
  $region18: #{gcn_forward.3} parent=0 // pred_check
    %p19 = pneg %p18
  $region19: #{gcn_forward.3} parent=0 // pred_check_branch
    %21 = sbr.rel (%p19) target = $region21
  $region20: #{gcn_forward.3} parent=0 // pred_region
    %22 = vst [vmem:[#allocation2] sm:$0xff] 0.0
    %23 = vst [vmem:[#allocation2 + $0x8] sm:$0xff] 0.0
    %24 = vst [vmem:[#allocation2 + $0x10] sm:$0xff] 0.0
    %25 = vst [vmem:[#allocation2 + $0x18] sm:$0xff] 0.0
    %26 = vst [vmem:[#allocation2 + $0x20] sm:$0xff] 0.0
    %27 = vst [vmem:[#allocation2 + $0x28] sm:$0xff] 0.0
    %28 = vst [vmem:[#allocation2 + $0x30] sm:$0xff] 0.0
    %29 = vst [vmem:[#allocation2 + $0x38] sm:$0xff] 0.0
    %30 = vst [vmem:[#allocation2 + $0x40] sm:$0xff] 0.0
    %31 = vst [vmem:[#allocation2 + $0x48] sm:$0xff] 0.0
    %32 = vst [vmem:[#allocation2 + $0x50] sm:$0xff] 0.0
    %33 = vst [vmem:[#allocation2 + $0x58] sm:$0xff] 0.0
    %34 = vst [vmem:[#allocation2 + $0x60] sm:$0xff] 0.0
    %35 = vst [vmem:[#allocation2 + $0x68] sm:$0xff] 0.0
    %36 = vst [vmem:[#allocation2 + $0x70] sm:$0xff] 0.0
    %37 = vst [vmem:[#allocation2 + $0x78] sm:$0xff] 0.0
    %38 = vst [vmem:[#allocation2 + $0x80] sm:$0xff] 0.0
    %39 = vst [vmem:[#allocation2 + $0x88] sm:$0xff] 0.0
    %40 = vst [vmem:[#allocation2 + $0x90] sm:$0xff] 0.0
    %41 = vst [vmem:[#allocation2 + $0x98] sm:$0xff] 0.0
    %42 = vst [vmem:[#allocation2 + $0xa0] sm:$0xff] 0.0
    %43 = vst [vmem:[#allocation2 + $0xa8] sm:$0xff] 0.0
    %44 = vst [vmem:[#allocation2 + $0xb0] sm:$0xff] 0.0
    %45 = vst [vmem:[#allocation2 + $0xb8] sm:$0xff] 0.0
    %46 = vst [vmem:[#allocation2 + $0xc0] sm:$0xff] 0.0
    %47 = vst [vmem:[#allocation2 + $0xc8] sm:$0xff] 0.0
    %48 = vst [vmem:[#allocation2 + $0xd0] sm:$0xff] 0.0
    %49 = vst [vmem:[#allocation2 + $0xd8] sm:$0xff] 0.0
    %50 = vst [vmem:[#allocation2 + $0xe0] sm:$0xff] 0.0
    %51 = vst [vmem:[#allocation2 + $0xe8] sm:$0xff] 0.0
    %52 = vst [vmem:[#allocation2 + $0xf0] sm:$0xff] 0.0
    %53 = vst [vmem:[#allocation2 + $0xf8] sm:$0xff] 0.0
    %54 = vst [vmem:[#allocation2 + $0x100] sm:$0xff] 0.0
    %55 = vst [vmem:[#allocation2 + $0x108] sm:$0xff] 0.0
    %56 = vst [vmem:[#allocation2 + $0x110] sm:$0xff] 0.0
    %57 = vst [vmem:[#allocation2 + $0x118] sm:$0xff] 0.0
    %58 = vst [vmem:[#allocation2 + $0x120] sm:$0xff] 0.0
    %59 = vst [vmem:[#allocation2 + $0x128] sm:$0xff] 0.0
    %60 = vst [vmem:[#allocation2 + $0x130] sm:$0xff] 0.0
    %61 = vst [vmem:[#allocation2 + $0x138] sm:$0xff] 0.0
    %62 = vst [vmem:[#allocation2 + $0x140] sm:$0xff] 0.0
    %63 = vst [vmem:[#allocation2 + $0x148] sm:$0xff] 0.0
    %64 = vst [vmem:[#allocation2 + $0x150] sm:$0xff] 0.0
    %65 = vst [vmem:[#allocation2 + $0x158] sm:$0xff] 0.0
    %66 = vst [vmem:[#allocation2 + $0x160] sm:$0xff] 0.0
    %67 = vst [vmem:[#allocation2 + $0x168] sm:$0xff] 0.0
    %68 = vst [vmem:[#allocation2 + $0x170] sm:$0xff] 0.0
    %69 = vst [vmem:[#allocation2 + $0x178] sm:$0xff] 0.0
    %70 = vst [vmem:[#allocation2 + $0x180] sm:$0xff] 0.0
    %71 = vst [vmem:[#allocation2 + $0x188] sm:$0xff] 0.0
    %72 = vst [vmem:[#allocation2 + $0x190] sm:$0xff] 0.0
    %73 = vst [vmem:[#allocation2 + $0x198] sm:$0xff] 0.0
    %74 = vst [vmem:[#allocation2 + $0x1a0] sm:$0xff] 0.0
    %75 = vst [vmem:[#allocation2 + $0x1a8] sm:$0xff] 0.0
    %76 = vst [vmem:[#allocation2 + $0x1b0] sm:$0xff] 0.0
    %77 = vst [vmem:[#allocation2 + $0x1b8] sm:$0xff] 0.0
    %78 = vst [vmem:[#allocation2 + $0x1c0] sm:$0xff] 0.0
    %79 = vst [vmem:[#allocation2 + $0x1c8] sm:$0xff] 0.0
    %80 = vst [vmem:[#allocation2 + $0x1d0] sm:$0xff] 0.0
    %81 = vst [vmem:[#allocation2 + $0x1d8] sm:$0xff] 0.0
    %82 = vst [vmem:[#allocation2 + $0x1e0] sm:$0xff] 0.0
    %83 = vst [vmem:[#allocation2 + $0x1e8] sm:$0xff] 0.0
    %84 = vst [vmem:[#allocation2 + $0x1f0] sm:$0xff] 0.0
    %85 = vst [vmem:[#allocation2 + $0x1f8] sm:$0xff] 0.0
  $region21: #{gcn_forward.3} parent=0 // pred_fallthru
    _
  %s86 = smul.u32 0, 512
  %s87 = sshra.s32 %s86, 3
  %s88 = sand.u32 %s86, 7
  %s89 = smul.addr %s87, 4
  %s90 = scalar_lea.vmem %s1, %s89
  %v91 = vld [vmem:[%s90] sm:$0xf]
  %v92 = vld [vmem:[%s90 + $0x4] sm:$0xf]
  %v93 = vld [vmem:[%s90 + $0x8] sm:$0xf]
  %v94 = vld [vmem:[%s90 + $0xc] sm:$0xf]
  %v95 = vld [vmem:[%s90 + $0x10] sm:$0xf]
  %v96 = vld [vmem:[%s90 + $0x14] sm:$0xf]
  %v97 = vld [vmem:[%s90 + $0x18] sm:$0xf]
  %v98 = vld [vmem:[%s90 + $0x1c] sm:$0xf]
  %v99 = vld [vmem:[%s90 + $0x20] sm:$0xf]
  %v100 = vld [vmem:[%s90 + $0x24] sm:$0xf]
  %v101 = vld [vmem:[%s90 + $0x28] sm:$0xf]
  %v102 = vld [vmem:[%s90 + $0x2c] sm:$0xf]
  %v103 = vld [vmem:[%s90 + $0x30] sm:$0xf]
  %v104 = vld [vmem:[%s90 + $0x34] sm:$0xf]
  %v105 = vld [vmem:[%s90 + $0x38] sm:$0xf]
  %v106 = vld [vmem:[%s90 + $0x3c] sm:$0xf]
  %v107 = vld [vmem:[%s90 + $0x40] sm:$0xf]
  %v108 = vld [vmem:[%s90 + $0x44] sm:$0xf]
  %v109 = vld [vmem:[%s90 + $0x48] sm:$0xf]
  %v110 = vld [vmem:[%s90 + $0x4c] sm:$0xf]
  %v111 = vld [vmem:[%s90 + $0x50] sm:$0xf]
  %v112 = vld [vmem:[%s90 + $0x54] sm:$0xf]
  %v113 = vld [vmem:[%s90 + $0x58] sm:$0xf]
  %v114 = vld [vmem:[%s90 + $0x5c] sm:$0xf]
  %v115 = vld [vmem:[%s90 + $0x60] sm:$0xf]
  %v116 = vld [vmem:[%s90 + $0x64] sm:$0xf]
  %v117 = vld [vmem:[%s90 + $0x68] sm:$0xf]
  %v118 = vld [vmem:[%s90 + $0x6c] sm:$0xf]
  %v119 = vld [vmem:[%s90 + $0x70] sm:$0xf]
  %v120 = vld [vmem:[%s90 + $0x74] sm:$0xf]
  %v121 = vld [vmem:[%s90 + $0x78] sm:$0xf]
  %v122 = vld [vmem:[%s90 + $0x7c] sm:$0xf]
  %v123 = vld [vmem:[%s90 + $0x80] sm:$0xf]
  %v124 = vld [vmem:[%s90 + $0x84] sm:$0xf]
  %v125 = vld [vmem:[%s90 + $0x88] sm:$0xf]
  %v126 = vld [vmem:[%s90 + $0x8c] sm:$0xf]
  %v127 = vld [vmem:[%s90 + $0x90] sm:$0xf]
  %v128 = vld [vmem:[%s90 + $0x94] sm:$0xf]
  %v129 = vld [vmem:[%s90 + $0x98] sm:$0xf]
  %v130 = vld [vmem:[%s90 + $0x9c] sm:$0xf]
  %v131 = vld [vmem:[%s90 + $0xa0] sm:$0xf]
  %v132 = vld [vmem:[%s90 + $0xa4] sm:$0xf]
  %v133 = vld [vmem:[%s90 + $0xa8] sm:$0xf]
  %v134 = vld [vmem:[%s90 + $0xac] sm:$0xf]
  %v135 = vld [vmem:[%s90 + $0xb0] sm:$0xf]
  %v136 = vld [vmem:[%s90 + $0xb4] sm:$0xf]
  %v137 = vld [vmem:[%s90 + $0xb8] sm:$0xf]
  %v138 = vld [vmem:[%s90 + $0xbc] sm:$0xf]
  %v139 = vld [vmem:[%s90 + $0xc0] sm:$0xf]
  %v140 = vld [vmem:[%s90 + $0xc4] sm:$0xf]
  %v141 = vld [vmem:[%s90 + $0xc8] sm:$0xf]
  %v142 = vld [vmem:[%s90 + $0xcc] sm:$0xf]
  %v143 = vld [vmem:[%s90 + $0xd0] sm:$0xf]
  %v144 = vld [vmem:[%s90 + $0xd4] sm:$0xf]
  %v145 = vld [vmem:[%s90 + $0xd8] sm:$0xf]
  %v146 = vld [vmem:[%s90 + $0xdc] sm:$0xf]
  %v147 = vld [vmem:[%s90 + $0xe0] sm:$0xf]
  %v148 = vld [vmem:[%s90 + $0xe4] sm:$0xf]
  %v149 = vld [vmem:[%s90 + $0xe8] sm:$0xf]
  %v150 = vld [vmem:[%s90 + $0xec] sm:$0xf]
  %v151 = vld [vmem:[%s90 + $0xf0] sm:$0xf]
  %v152 = vld [vmem:[%s90 + $0xf4] sm:$0xf]
  %v153 = vld [vmem:[%s90 + $0xf8] sm:$0xf]
  %v154 = vld [vmem:[%s90 + $0xfc] sm:$0xf]
  %v155 = vld [vmem:[%s2] sm:$0xf]
  %v156 = vld [vmem:[%s2 + $0x4] sm:$0xf]
  %v157 = vld [vmem:[%s2 + $0x8] sm:$0xf]
  %v158 = vld [vmem:[%s2 + $0xc] sm:$0xf]
  %v159 = vld [vmem:[%s2 + $0x10] sm:$0xf]
  %v160 = vld [vmem:[%s2 + $0x14] sm:$0xf]
  %v161 = vld [vmem:[%s2 + $0x18] sm:$0xf]
  %v162 = vld [vmem:[%s2 + $0x1c] sm:$0xf]
  %v163 = vld [vmem:[%s2 + $0x20] sm:$0xf]
  %v164 = vld [vmem:[%s2 + $0x24] sm:$0xf]
  %v165 = vld [vmem:[%s2 + $0x28] sm:$0xf]
  %v166 = vld [vmem:[%s2 + $0x2c] sm:$0xf]
  %v167 = vld [vmem:[%s2 + $0x30] sm:$0xf]
  %v168 = vld [vmem:[%s2 + $0x34] sm:$0xf]
  %v169 = vld [vmem:[%s2 + $0x38] sm:$0xf]
  %v170 = vld [vmem:[%s2 + $0x3c] sm:$0xf]
  %v235 = vunpack.c.l.b16 %v91
  %v236 = vunpack.c.l.b16 %v92
  %v237 = vunpack.c.l.b16 %v93
  %v238 = vunpack.c.l.b16 %v94
  %v239 = vunpack.c.l.b16 %v95
  %v240 = vunpack.c.l.b16 %v96
  %v241 = vunpack.c.l.b16 %v97
  %v242 = vunpack.c.l.b16 %v98
  %v243 = vunpack.c.l.b16 %v99
  %v244 = vunpack.c.l.b16 %v100
  %v245 = vunpack.c.l.b16 %v101
  %v246 = vunpack.c.l.b16 %v102
  %v247 = vunpack.c.l.b16 %v103
  %v248 = vunpack.c.l.b16 %v104
  %v249 = vunpack.c.l.b16 %v105
  %v250 = vunpack.c.l.b16 %v106
  %v251 = vunpack.c.l.b16 %v107
  %v252 = vunpack.c.l.b16 %v108
  %v253 = vunpack.c.l.b16 %v109
  %v254 = vunpack.c.l.b16 %v110
  %v255 = vunpack.c.l.b16 %v111
  %v256 = vunpack.c.l.b16 %v112
  %v257 = vunpack.c.l.b16 %v113
  %v258 = vunpack.c.l.b16 %v114
  %v259 = vunpack.c.l.b16 %v115
  %v260 = vunpack.c.l.b16 %v116
  %v261 = vunpack.c.l.b16 %v117
  %v262 = vunpack.c.l.b16 %v118
  %v263 = vunpack.c.l.b16 %v119
  %v264 = vunpack.c.l.b16 %v120
  %v265 = vunpack.c.l.b16 %v121
  %v266 = vunpack.c.l.b16 %v122
  %v267 = vunpack.c.l.b16 %v123
  %v268 = vunpack.c.l.b16 %v124
  %v269 = vunpack.c.l.b16 %v125
  %v270 = vunpack.c.l.b16 %v126
  %v271 = vunpack.c.l.b16 %v127
  %v272 = vunpack.c.l.b16 %v128
  %v273 = vunpack.c.l.b16 %v129
  %v274 = vunpack.c.l.b16 %v130
  %v275 = vunpack.c.l.b16 %v131
  %v276 = vunpack.c.l.b16 %v132
  %v277 = vunpack.c.l.b16 %v133
  %v278 = vunpack.c.l.b16 %v134
  %v279 = vunpack.c.l.b16 %v135
  %v280 = vunpack.c.l.b16 %v136
  %v281 = vunpack.c.l.b16 %v137
  %v282 = vunpack.c.l.b16 %v138
  %v283 = vunpack.c.l.b16 %v139
  %v284 = vunpack.c.l.b16 %v140
  %v285 = vunpack.c.l.b16 %v141
  %v286 = vunpack.c.l.b16 %v142
  %v287 = vunpack.c.l.b16 %v143
  %v288 = vunpack.c.l.b16 %v144
  %v289 = vunpack.c.l.b16 %v145
  %v290 = vunpack.c.l.b16 %v146
  %v291 = vunpack.c.l.b16 %v147
  %v292 = vunpack.c.l.b16 %v148
  %v293 = vunpack.c.l.b16 %v149
  %v294 = vunpack.c.l.b16 %v150
  %v295 = vunpack.c.l.b16 %v151
  %v296 = vunpack.c.l.b16 %v152
  %v297 = vunpack.c.l.b16 %v153
  %v298 = vunpack.c.l.b16 %v154
  %v299 = vpack.c.b16 %v236, %v235
  %v300 = vpack.c.b16 %v238, %v237
  %v301 = vpack.c.b16 %v240, %v239
  %v302 = vpack.c.b16 %v242, %v241
  %v303 = vpack.c.b16 %v244, %v243
  %v304 = vpack.c.b16 %v246, %v245
  %v305 = vpack.c.b16 %v248, %v247
  %v306 = vpack.c.b16 %v250, %v249
  %v307 = vpack.c.b16 %v252, %v251
  %v308 = vpack.c.b16 %v254, %v253
  %v309 = vpack.c.b16 %v256, %v255
  %v310 = vpack.c.b16 %v258, %v257
  %v311 = vpack.c.b16 %v260, %v259
  %v312 = vpack.c.b16 %v262, %v261
  %v313 = vpack.c.b16 %v264, %v263
  %v314 = vpack.c.b16 %v266, %v265
  %v315 = vpack.c.b16 %v268, %v267
  %v316 = vpack.c.b16 %v270, %v269
  %v317 = vpack.c.b16 %v272, %v271
  %v318 = vpack.c.b16 %v274, %v273
  %v319 = vpack.c.b16 %v276, %v275
  %v320 = vpack.c.b16 %v278, %v277
  %v321 = vpack.c.b16 %v280, %v279
  %v322 = vpack.c.b16 %v282, %v281
  %v323 = vpack.c.b16 %v284, %v283
  %v324 = vpack.c.b16 %v286, %v285
  %v325 = vpack.c.b16 %v288, %v287
  %v326 = vpack.c.b16 %v290, %v289
  %v327 = vpack.c.b16 %v292, %v291
  %v328 = vpack.c.b16 %v294, %v293
  %v329 = vpack.c.b16 %v296, %v295
  %v330 = vpack.c.b16 %v298, %v297
  %v379 = vunpack.c.l.b16 %v155
  %v380 = vunpack.c.l.b16 %v156
  %v381 = vunpack.c.l.b16 %v157
  %v382 = vunpack.c.l.b16 %v158
  %v383 = vunpack.c.l.b16 %v159
  %v384 = vunpack.c.l.b16 %v160
  %v385 = vunpack.c.l.b16 %v161
  %v386 = vunpack.c.l.b16 %v162
  %v387 = vunpack.c.l.b16 %v163
  %v388 = vunpack.c.l.b16 %v164
  %v389 = vunpack.c.l.b16 %v165
  %v390 = vunpack.c.l.b16 %v166
  %v391 = vunpack.c.l.b16 %v167
  %v392 = vunpack.c.l.b16 %v168
  %v393 = vunpack.c.l.b16 %v169
  %v394 = vunpack.c.l.b16 %v170
  %v395 = vpack.c.b16 %v380, %v379
  %v396 = vpack.c.b16 %v382, %v381
  %v397 = vpack.c.b16 %v384, %v383
  %v398 = vpack.c.b16 %v386, %v385
  %v399 = vpack.c.b16 %v388, %v387
  %v400 = vpack.c.b16 %v390, %v389
  %v401 = vpack.c.b16 %v392, %v391
  %v402 = vpack.c.b16 %v394, %v393
  %411 = vmatprep.subr.bf16.mxu0 0
  %412 = vmatpush1.bf16.msra.mxu0 %v395
  %413 = vmatprep.subr.bf16.mxu0 0
  %414 = vmatpush1.bf16.msra.mxu0 %v396
  %415 = vmatprep.subr.bf16.mxu0 0
  %416 = vmatpush1.bf16.msra.mxu0 %v397
  %417 = vmatprep.subr.bf16.mxu0 0
  %418 = vmatpush1.bf16.msra.mxu0 %v398
  %419 = vmatprep.subr.bf16.mxu0 0
  %420 = vmatpush1.bf16.msra.mxu0 %v399
  %421 = vmatprep.subr.bf16.mxu0 0
  %422 = vmatpush1.bf16.msra.mxu0 %v400
  %423 = vmatprep.subr.bf16.mxu0 0
  %424 = vmatpush1.bf16.msra.mxu0 %v401
  %425 = vmatprep.subr.bf16.mxu0 0
  %426 = vmatpush1.bf16.msra.mxu0 %v402
  %427 = vmatprep.subr.bf16.mxu0 0
  %428 = vmatpush1.bf16.msra.mxu0 0
  %429 = vmatprep.subr.bf16.mxu0 0
  %430 = vmatpush1.bf16.msra.mxu0 0
  %431 = vmatprep.subr.bf16.mxu0 0
  %432 = vmatpush1.bf16.msra.mxu0 0
  %433 = vmatprep.subr.bf16.mxu0 0
  %434 = vmatpush1.bf16.msra.mxu0 0
  %435 = vmatprep.subr.bf16.mxu0 0
  %436 = vmatpush1.bf16.msra.mxu0 0
  %437 = vmatprep.subr.bf16.mxu0 0
  %438 = vmatpush1.bf16.msra.mxu0 0
  %439 = vmatprep.subr.bf16.mxu0 0
  %440 = vmatpush1.bf16.msra.mxu0 0
  %441 = vmatprep.subr.bf16.mxu0 0
  %442 = vmatpush1.bf16.msra.mxu0 0
  %443 = vmatprep.mubr.bf16.mxu0 0
  %444 = vmatmul.mubr.bf16.gmra.mrb[0].mxu0 %v299
  %v445 = vpop.f32.mrb[0].mxu0
  %v446 = vadd.f32 0.0, %v445
  %v447 = vpop.f32.mrb[0].mxu0
  %v448 = vpop.f32.mrb[0].mxu0
  %v449 = vadd.f32 0.0, %v448
  %v450 = vpop.f32.mrb[0].mxu0
  %451 = vmatprep.mubr.bf16.mxu0 0
  %452 = vmatmul.mubr.bf16.gmra.mrb[0].mxu0 %v300
  %v453 = vpop.f32.mrb[0].mxu0
  %v454 = vadd.f32 0.0, %v453
  %v455 = vpop.f32.mrb[0].mxu0
  %v456 = vpop.f32.mrb[0].mxu0
  %v457 = vadd.f32 0.0, %v456
  %v458 = vpop.f32.mrb[0].mxu0
  %459 = vmatprep.mubr.bf16.mxu0 0
  %460 = vmatmul.mubr.bf16.gmra.mrb[0].mxu0 %v301
  %v461 = vpop.f32.mrb[0].mxu0
  %v462 = vadd.f32 0.0, %v461
  %v463 = vpop.f32.mrb[0].mxu0
  %v464 = vpop.f32.mrb[0].mxu0
  %v465 = vadd.f32 0.0, %v464
  %v466 = vpop.f32.mrb[0].mxu0
  %467 = vmatprep.mubr.bf16.mxu0 0
  %468 = vmatmul.mubr.bf16.gmra.mrb[0].mxu0 %v302
  %v469 = vpop.f32.mrb[0].mxu0
  %v470 = vadd.f32 0.0, %v469
  %v471 = vpop.f32.mrb[0].mxu0
  %v472 = vpop.f32.mrb[0].mxu0
  %v473 = vadd.f32 0.0, %v472
  %v474 = vpop.f32.mrb[0].mxu0
  %475 = vmatprep.mubr.bf16.mxu0 0
  %476 = vmatmul.mubr.bf16.gmra.mrb[0].mxu0 %v303
  %v477 = vpop.f32.mrb[0].mxu0
  %v478 = vadd.f32 0.0, %v477
  %v479 = vpop.f32.mrb[0].mxu0
  %v480 = vpop.f32.mrb[0].mxu0
  %v481 = vadd.f32 0.0, %v480
  %v482 = vpop.f32.mrb[0].mxu0
  %483 = vmatprep.mubr.bf16.mxu0 0
  %484 = vmatmul.mubr.bf16.gmra.mrb[0].mxu0 %v304
  %v485 = vpop.f32.mrb[0].mxu0
  %v486 = vadd.f32 0.0, %v485
  %v487 = vpop.f32.mrb[0].mxu0
  %v488 = vpop.f32.mrb[0].mxu0
  %v489 = vadd.f32 0.0, %v488
  %v490 = vpop.f32.mrb[0].mxu0
  %491 = vmatprep.mubr.bf16.mxu0 0
  %492 = vmatmul.mubr.bf16.gmra.mrb[0].mxu0 %v305
  %v493 = vpop.f32.mrb[0].mxu0
  %v494 = vadd.f32 0.0, %v493
  %v495 = vpop.f32.mrb[0].mxu0
  %v496 = vpop.f32.mrb[0].mxu0
  %v497 = vadd.f32 0.0, %v496
  %v498 = vpop.f32.mrb[0].mxu0
  %499 = vmatprep.mubr.bf16.mxu0 0
  %500 = vmatmul.mubr.bf16.gmra.mrb[0].mxu0 %v306
  %v501 = vpop.f32.mrb[0].mxu0
  %v502 = vadd.f32 0.0, %v501
  %v503 = vpop.f32.mrb[0].mxu0
  %v504 = vpop.f32.mrb[0].mxu0
  %v505 = vadd.f32 0.0, %v504
  %v506 = vpop.f32.mrb[0].mxu0
  %507 = vmatprep.mubr.bf16.mxu0 0
  %508 = vmatmul.mubr.bf16.gmra.mrb[0].mxu0 %v307
  %v509 = vpop.f32.mrb[0].mxu0
  %v510 = vadd.f32 0.0, %v509
  %v511 = vpop.f32.mrb[0].mxu0
  %v512 = vpop.f32.mrb[0].mxu0
  %v513 = vadd.f32 0.0, %v512
  %v514 = vpop.f32.mrb[0].mxu0
  %515 = vmatprep.mubr.bf16.mxu0 0
  %516 = vmatmul.mubr.bf16.gmra.mrb[0].mxu0 %v308
  %v517 = vpop.f32.mrb[0].mxu0
  %v518 = vadd.f32 0.0, %v517
  %v519 = vpop.f32.mrb[0].mxu0
  %v520 = vpop.f32.mrb[0].mxu0
  %v521 = vadd.f32 0.0, %v520
  %v522 = vpop.f32.mrb[0].mxu0
  %523 = vmatprep.mubr.bf16.mxu0 0
  %524 = vmatmul.mubr.bf16.gmra.mrb[0].mxu0 %v309
  %v525 = vpop.f32.mrb[0].mxu0
  %v526 = vadd.f32 0.0, %v525
  %v527 = vpop.f32.mrb[0].mxu0
  %v528 = vpop.f32.mrb[0].mxu0
  %v529 = vadd.f32 0.0, %v528
  %v530 = vpop.f32.mrb[0].mxu0
  %531 = vmatprep.mubr.bf16.mxu0 0
  %532 = vmatmul.mubr.bf16.gmra.mrb[0].mxu0 %v310
  %v533 = vpop.f32.mrb[0].mxu0
  %v534 = vadd.f32 0.0, %v533
  %v535 = vpop.f32.mrb[0].mxu0
  %v536 = vpop.f32.mrb[0].mxu0
  %v537 = vadd.f32 0.0, %v536
  %v538 = vpop.f32.mrb[0].mxu0
  %539 = vmatprep.mubr.bf16.mxu0 0
  %540 = vmatmul.mubr.bf16.gmra.mrb[0].mxu0 %v311
  %v541 = vpop.f32.mrb[0].mxu0
  %v542 = vadd.f32 0.0, %v541
  %v543 = vpop.f32.mrb[0].mxu0
  %v544 = vpop.f32.mrb[0].mxu0
  %v545 = vadd.f32 0.0, %v544
  %v546 = vpop.f32.mrb[0].mxu0
  %547 = vmatprep.mubr.bf16.mxu0 0
  %548 = vmatmul.mubr.bf16.gmra.mrb[0].mxu0 %v312
  %v549 = vpop.f32.mrb[0].mxu0
  %v550 = vadd.f32 0.0, %v549
  %v551 = vpop.f32.mrb[0].mxu0
  %v552 = vpop.f32.mrb[0].mxu0
  %v553 = vadd.f32 0.0, %v552
  %v554 = vpop.f32.mrb[0].mxu0
  %555 = vmatprep.mubr.bf16.mxu0 0
  %556 = vmatmul.mubr.bf16.gmra.mrb[0].mxu0 %v313
  %v557 = vpop.f32.mrb[0].mxu0
  %v558 = vadd.f32 0.0, %v557
  %v559 = vpop.f32.mrb[0].mxu0
  %v560 = vpop.f32.mrb[0].mxu0
  %v561 = vadd.f32 0.0, %v560
  %v562 = vpop.f32.mrb[0].mxu0
  %563 = vmatprep.mubr.bf16.mxu0 0
  %564 = vmatmul.mubr.bf16.gmra.mrb[0].mxu0 %v314
  %v565 = vpop.f32.mrb[0].mxu0
  %v566 = vadd.f32 0.0, %v565
  %v567 = vpop.f32.mrb[0].mxu0
  %v568 = vpop.f32.mrb[0].mxu0
  %v569 = vadd.f32 0.0, %v568
  %v570 = vpop.f32.mrb[0].mxu0
  %571 = vmatprep.mubr.bf16.mxu0 0
  %572 = vmatmul.mubr.bf16.gmra.mrb[0].mxu0 %v315
  %v573 = vpop.f32.mrb[0].mxu0
  %v574 = vadd.f32 0.0, %v573
  %v575 = vpop.f32.mrb[0].mxu0
  %v576 = vpop.f32.mrb[0].mxu0
  %v577 = vadd.f32 0.0, %v576
  %v578 = vpop.f32.mrb[0].mxu0
  %579 = vmatprep.mubr.bf16.mxu0 0
  %580 = vmatmul.mubr.bf16.gmra.mrb[0].mxu0 %v316
  %v581 = vpop.f32.mrb[0].mxu0
  %v582 = vadd.f32 0.0, %v581
  %v583 = vpop.f32.mrb[0].mxu0
  %v584 = vpop.f32.mrb[0].mxu0
  %v585 = vadd.f32 0.0, %v584
  %v586 = vpop.f32.mrb[0].mxu0
  %587 = vmatprep.mubr.bf16.mxu0 0
  %588 = vmatmul.mubr.bf16.gmra.mrb[0].mxu0 %v317
  %v589 = vpop.f32.mrb[0].mxu0
  %v590 = vadd.f32 0.0, %v589
  %v591 = vpop.f32.mrb[0].mxu0
  %v592 = vpop.f32.mrb[0].mxu0
  %v593 = vadd.f32 0.0, %v592
  %v594 = vpop.f32.mrb[0].mxu0
  %595 = vmatprep.mubr.bf16.mxu0 0
  %596 = vmatmul.mubr.bf16.gmra.mrb[0].mxu0 %v318
  %v597 = vpop.f32.mrb[0].mxu0
  %v598 = vadd.f32 0.0, %v597
  %v599 = vpop.f32.mrb[0].mxu0
  %v600 = vpop.f32.mrb[0].mxu0
  %v601 = vadd.f32 0.0, %v600
  %v602 = vpop.f32.mrb[0].mxu0
  %603 = vmatprep.mubr.bf16.mxu0 0
  %604 = vmatmul.mubr.bf16.gmra.mrb[0].mxu0 %v319
  %v605 = vpop.f32.mrb[0].mxu0
  %v606 = vadd.f32 0.0, %v605
  %v607 = vpop.f32.mrb[0].mxu0
  %v608 = vpop.f32.mrb[0].mxu0
  %v609 = vadd.f32 0.0, %v608
  %v610 = vpop.f32.mrb[0].mxu0
  %611 = vmatprep.mubr.bf16.mxu0 0
  %612 = vmatmul.mubr.bf16.gmra.mrb[0].mxu0 %v320
  %v613 = vpop.f32.mrb[0].mxu0
  %v614 = vadd.f32 0.0, %v613
  %v615 = vpop.f32.mrb[0].mxu0
  %v616 = vpop.f32.mrb[0].mxu0
  %v617 = vadd.f32 0.0, %v616
  %v618 = vpop.f32.mrb[0].mxu0
  %619 = vmatprep.mubr.bf16.mxu0 0
  %620 = vmatmul.mubr.bf16.gmra.mrb[0].mxu0 %v321
  %v621 = vpop.f32.mrb[0].mxu0
  %v622 = vadd.f32 0.0, %v621
  %v623 = vpop.f32.mrb[0].mxu0
  %v624 = vpop.f32.mrb[0].mxu0
  %v625 = vadd.f32 0.0, %v624
  %v626 = vpop.f32.mrb[0].mxu0
  %627 = vmatprep.mubr.bf16.mxu0 0
  %628 = vmatmul.mubr.bf16.gmra.mrb[0].mxu0 %v322
  %v629 = vpop.f32.mrb[0].mxu0
  %v630 = vadd.f32 0.0, %v629
  %v631 = vpop.f32.mrb[0].mxu0
  %v632 = vpop.f32.mrb[0].mxu0
  %v633 = vadd.f32 0.0, %v632
  %v634 = vpop.f32.mrb[0].mxu0
  %635 = vmatprep.mubr.bf16.mxu0 0
  %636 = vmatmul.mubr.bf16.gmra.mrb[0].mxu0 %v323
  %v637 = vpop.f32.mrb[0].mxu0
  %v638 = vadd.f32 0.0, %v637
  %v639 = vpop.f32.mrb[0].mxu0
  %v640 = vpop.f32.mrb[0].mxu0
  %v641 = vadd.f32 0.0, %v640
  %v642 = vpop.f32.mrb[0].mxu0
  %643 = vmatprep.mubr.bf16.mxu0 0
  %644 = vmatmul.mubr.bf16.gmra.mrb[0].mxu0 %v324
  %v645 = vpop.f32.mrb[0].mxu0
  %v646 = vadd.f32 0.0, %v645
  %v647 = vpop.f32.mrb[0].mxu0
  %v648 = vpop.f32.mrb[0].mxu0
  %v649 = vadd.f32 0.0, %v648
  %v650 = vpop.f32.mrb[0].mxu0
  %651 = vmatprep.mubr.bf16.mxu0 0
  %652 = vmatmul.mubr.bf16.gmra.mrb[0].mxu0 %v325
  %v653 = vpop.f32.mrb[0].mxu0
  %v654 = vadd.f32 0.0, %v653
  %v655 = vpop.f32.mrb[0].mxu0
  %v656 = vpop.f32.mrb[0].mxu0
  %v657 = vadd.f32 0.0, %v656
  %v658 = vpop.f32.mrb[0].mxu0
  %659 = vmatprep.mubr.bf16.mxu0 0
  %660 = vmatmul.mubr.bf16.gmra.mrb[0].mxu0 %v326
  %v661 = vpop.f32.mrb[0].mxu0
  %v662 = vadd.f32 0.0, %v661
  %v663 = vpop.f32.mrb[0].mxu0
  %v664 = vpop.f32.mrb[0].mxu0
  %v665 = vadd.f32 0.0, %v664
  %v666 = vpop.f32.mrb[0].mxu0
  %667 = vmatprep.mubr.bf16.mxu0 0
  %668 = vmatmul.mubr.bf16.gmra.mrb[0].mxu0 %v327
  %v669 = vpop.f32.mrb[0].mxu0
  %v670 = vadd.f32 0.0, %v669
  %v671 = vpop.f32.mrb[0].mxu0
  %v672 = vpop.f32.mrb[0].mxu0
  %v673 = vadd.f32 0.0, %v672
  %v674 = vpop.f32.mrb[0].mxu0
  %675 = vmatprep.mubr.bf16.mxu0 0
  %676 = vmatmul.mubr.bf16.gmra.mrb[0].mxu0 %v328
  %v677 = vpop.f32.mrb[0].mxu0
  %v678 = vadd.f32 0.0, %v677
  %v679 = vpop.f32.mrb[0].mxu0
  %v680 = vpop.f32.mrb[0].mxu0
  %v681 = vadd.f32 0.0, %v680
  %v682 = vpop.f32.mrb[0].mxu0
  %683 = vmatprep.mubr.bf16.mxu0 0
  %684 = vmatmul.mubr.bf16.gmra.mrb[0].mxu0 %v329
  %v685 = vpop.f32.mrb[0].mxu0
  %v686 = vadd.f32 0.0, %v685
  %v687 = vpop.f32.mrb[0].mxu0
  %v688 = vpop.f32.mrb[0].mxu0
  %v689 = vadd.f32 0.0, %v688
  %v690 = vpop.f32.mrb[0].mxu0
  %691 = vmatprep.mubr.bf16.mxu0 0
  %692 = vmatmul.mubr.bf16.gmra.mrb[0].mxu0 %v330
  %v693 = vpop.f32.mrb[0].mxu0
  %v694 = vadd.f32 0.0, %v693
  %v695 = vpop.f32.mrb[0].mxu0
  %v696 = vpop.f32.mrb[0].mxu0
  %v697 = vadd.f32 0.0, %v696
  %v698 = vpop.f32.mrb[0].mxu0
  %699 = vdwg.mxu0
  %v700 = vpack.c.bf16 %v449, %v446
  %v701 = vpack.c.bf16 %v457, %v454
  %v702 = vpack.c.bf16 %v465, %v462
  %v703 = vpack.c.bf16 %v473, %v470
  %v704 = vpack.c.bf16 %v481, %v478
  %v705 = vpack.c.bf16 %v489, %v486
  %v706 = vpack.c.bf16 %v497, %v494
  %v707 = vpack.c.bf16 %v505, %v502
  %v708 = vpack.c.bf16 %v513, %v510
  %v709 = vpack.c.bf16 %v521, %v518
  %v710 = vpack.c.bf16 %v529, %v526
  %v711 = vpack.c.bf16 %v537, %v534
  %v712 = vpack.c.bf16 %v545, %v542
  %v713 = vpack.c.bf16 %v553, %v550
  %v714 = vpack.c.bf16 %v561, %v558
  %v715 = vpack.c.bf16 %v569, %v566
  %v716 = vpack.c.bf16 %v577, %v574
  %v717 = vpack.c.bf16 %v585, %v582
  %v718 = vpack.c.bf16 %v593, %v590
  %v719 = vpack.c.bf16 %v601, %v598
  %v720 = vpack.c.bf16 %v609, %v606
  %v721 = vpack.c.bf16 %v617, %v614
  %v722 = vpack.c.bf16 %v625, %v622
  %v723 = vpack.c.bf16 %v633, %v630
  %v724 = vpack.c.bf16 %v641, %v638
  %v725 = vpack.c.bf16 %v649, %v646
  %v726 = vpack.c.bf16 %v657, %v654
  %v727 = vpack.c.bf16 %v665, %v662
  %v728 = vpack.c.bf16 %v673, %v670
  %v729 = vpack.c.bf16 %v681, %v678
  %v730 = vpack.c.bf16 %v689, %v686
  %v731 = vpack.c.bf16 %v697, %v694
  %v732 = vld [vmem:[#allocation2] sm:$0xff]
  %v733 = vld [vmem:[#allocation2 + $0x8] sm:$0xff]
  %v734 = vld [vmem:[#allocation2 + $0x10] sm:$0xff]
  %v735 = vld [vmem:[#allocation2 + $0x18] sm:$0xff]
  %v736 = vld [vmem:[#allocation2 + $0x20] sm:$0xff]
  %v737 = vld [vmem:[#allocation2 + $0x28] sm:$0xff]
  %v738 = vld [vmem:[#allocation2 + $0x30] sm:$0xff]
  %v739 = vld [vmem:[#allocation2 + $0x38] sm:$0xff]
  %v740 = vld [vmem:[#allocation2 + $0x40] sm:$0xff]
  %v741 = vld [vmem:[#allocation2 + $0x48] sm:$0xff]
  %v742 = vld [vmem:[#allocation2 + $0x50] sm:$0xff]
  %v743 = vld [vmem:[#allocation2 + $0x58] sm:$0xff]
  %v744 = vld [vmem:[#allocation2 + $0x60] sm:$0xff]
  %v745 = vld [vmem:[#allocation2 + $0x68] sm:$0xff]
  %v746 = vld [vmem:[#allocation2 + $0x70] sm:$0xff]
  %v747 = vld [vmem:[#allocation2 + $0x78] sm:$0xff]
  %v748 = vld [vmem:[#allocation2 + $0x80] sm:$0xff]
  %v749 = vld [vmem:[#allocation2 + $0x88] sm:$0xff]
  %v750 = vld [vmem:[#allocation2 + $0x90] sm:$0xff]
  %v751 = vld [vmem:[#allocation2 + $0x98] sm:$0xff]
  %v752 = vld [vmem:[#allocation2 + $0xa0] sm:$0xff]
  %v753 = vld [vmem:[#allocation2 + $0xa8] sm:$0xff]
  %v754 = vld [vmem:[#allocation2 + $0xb0] sm:$0xff]
  %v755 = vld [vmem:[#allocation2 + $0xb8] sm:$0xff]
  %v756 = vld [vmem:[#allocation2 + $0xc0] sm:$0xff]
  %v757 = vld [vmem:[#allocation2 + $0xc8] sm:$0xff]
  %v758 = vld [vmem:[#allocation2 + $0xd0] sm:$0xff]
  %v759 = vld [vmem:[#allocation2 + $0xd8] sm:$0xff]
  %v760 = vld [vmem:[#allocation2 + $0xe0] sm:$0xff]
  %v761 = vld [vmem:[#allocation2 + $0xe8] sm:$0xff]
  %v762 = vld [vmem:[#allocation2 + $0xf0] sm:$0xff]
  %v763 = vld [vmem:[#allocation2 + $0xf8] sm:$0xff]
  %v764 = vld [vmem:[#allocation2 + $0x100] sm:$0xff]
  %v765 = vld [vmem:[#allocation2 + $0x108] sm:$0xff]
  %v766 = vld [vmem:[#allocation2 + $0x110] sm:$0xff]
  %v767 = vld [vmem:[#allocation2 + $0x118] sm:$0xff]
  %v768 = vld [vmem:[#allocation2 + $0x120] sm:$0xff]
  %v769 = vld [vmem:[#allocation2 + $0x128] sm:$0xff]
  %v770 = vld [vmem:[#allocation2 + $0x130] sm:$0xff]
  %v771 = vld [vmem:[#allocation2 + $0x138] sm:$0xff]
  %v772 = vld [vmem:[#allocation2 + $0x140] sm:$0xff]
  %v773 = vld [vmem:[#allocation2 + $0x148] sm:$0xff]
  %v774 = vld [vmem:[#allocation2 + $0x150] sm:$0xff]
  %v775 = vld [vmem:[#allocation2 + $0x158] sm:$0xff]
  %v776 = vld [vmem:[#allocation2 + $0x160] sm:$0xff]
  %v777 = vld [vmem:[#allocation2 + $0x168] sm:$0xff]
  %v778 = vld [vmem:[#allocation2 + $0x170] sm:$0xff]
  %v779 = vld [vmem:[#allocation2 + $0x178] sm:$0xff]
  %v780 = vld [vmem:[#allocation2 + $0x180] sm:$0xff]
  %v781 = vld [vmem:[#allocation2 + $0x188] sm:$0xff]
  %v782 = vld [vmem:[#allocation2 + $0x190] sm:$0xff]
  %v783 = vld [vmem:[#allocation2 + $0x198] sm:$0xff]
  %v784 = vld [vmem:[#allocation2 + $0x1a0] sm:$0xff]
  %v785 = vld [vmem:[#allocation2 + $0x1a8] sm:$0xff]
  %v786 = vld [vmem:[#allocation2 + $0x1b0] sm:$0xff]
  %v787 = vld [vmem:[#allocation2 + $0x1b8] sm:$0xff]
  %v788 = vld [vmem:[#allocation2 + $0x1c0] sm:$0xff]
  %v789 = vld [vmem:[#allocation2 + $0x1c8] sm:$0xff]
  %v790 = vld [vmem:[#allocation2 + $0x1d0] sm:$0xff]
  %v791 = vld [vmem:[#allocation2 + $0x1d8] sm:$0xff]
  %v792 = vld [vmem:[#allocation2 + $0x1e0] sm:$0xff]
  %v793 = vld [vmem:[#allocation2 + $0x1e8] sm:$0xff]
  %v794 = vld [vmem:[#allocation2 + $0x1f0] sm:$0xff]
  %v795 = vld [vmem:[#allocation2 + $0x1f8] sm:$0xff]
  %v796 = vld [vmem:[%s0] sm:$0xff]
  %v797 = vld [vmem:[%s0 + $0x8] sm:$0xff]
  %v798 = vld [vmem:[%s0 + $0x10] sm:$0xff]
  %v799 = vld [vmem:[%s0 + $0x18] sm:$0xff]
  %v800 = vld [vmem:[%s0 + $0x20] sm:$0xff]
  %v801 = vld [vmem:[%s0 + $0x28] sm:$0xff]
  %v802 = vld [vmem:[%s0 + $0x30] sm:$0xff]
  %v803 = vld [vmem:[%s0 + $0x38] sm:$0xff]
  %v804 = vld [vmem:[%s0 + $0x40] sm:$0xff]
  %v805 = vld [vmem:[%s0 + $0x48] sm:$0xff]
  %v806 = vld [vmem:[%s0 + $0x50] sm:$0xff]
  %v807 = vld [vmem:[%s0 + $0x58] sm:$0xff]
  %v808 = vld [vmem:[%s0 + $0x60] sm:$0xff]
  %v809 = vld [vmem:[%s0 + $0x68] sm:$0xff]
  %v810 = vld [vmem:[%s0 + $0x70] sm:$0xff]
  %v811 = vld [vmem:[%s0 + $0x78] sm:$0xff]
  %v812 = vld [vmem:[%s0 + $0x80] sm:$0xff]
  %v813 = vld [vmem:[%s0 + $0x88] sm:$0xff]
  %v814 = vld [vmem:[%s0 + $0x90] sm:$0xff]
  %v815 = vld [vmem:[%s0 + $0x98] sm:$0xff]
  %v816 = vld [vmem:[%s0 + $0xa0] sm:$0xff]
  %v817 = vld [vmem:[%s0 + $0xa8] sm:$0xff]
  %v818 = vld [vmem:[%s0 + $0xb0] sm:$0xff]
  %v819 = vld [vmem:[%s0 + $0xb8] sm:$0xff]
  %v820 = vld [vmem:[%s0 + $0xc0] sm:$0xff]
  %v821 = vld [vmem:[%s0 + $0xc8] sm:$0xff]
  %v822 = vld [vmem:[%s0 + $0xd0] sm:$0xff]
  %v823 = vld [vmem:[%s0 + $0xd8] sm:$0xff]
  %v824 = vld [vmem:[%s0 + $0xe0] sm:$0xff]
  %v825 = vld [vmem:[%s0 + $0xe8] sm:$0xff]
  %v826 = vld [vmem:[%s0 + $0xf0] sm:$0xff]
  %v827 = vld [vmem:[%s0 + $0xf8] sm:$0xff]
  %v828 = vld [vmem:[%s0 + $0x100] sm:$0xff]
  %v829 = vld [vmem:[%s0 + $0x108] sm:$0xff]
  %v830 = vld [vmem:[%s0 + $0x110] sm:$0xff]
  %v831 = vld [vmem:[%s0 + $0x118] sm:$0xff]
  %v832 = vld [vmem:[%s0 + $0x120] sm:$0xff]
  %v833 = vld [vmem:[%s0 + $0x128] sm:$0xff]
  %v834 = vld [vmem:[%s0 + $0x130] sm:$0xff]
  %v835 = vld [vmem:[%s0 + $0x138] sm:$0xff]
  %v836 = vld [vmem:[%s0 + $0x140] sm:$0xff]
  %v837 = vld [vmem:[%s0 + $0x148] sm:$0xff]
  %v838 = vld [vmem:[%s0 + $0x150] sm:$0xff]
  %v839 = vld [vmem:[%s0 + $0x158] sm:$0xff]
  %v840 = vld [vmem:[%s0 + $0x160] sm:$0xff]
  %v841 = vld [vmem:[%s0 + $0x168] sm:$0xff]
  %v842 = vld [vmem:[%s0 + $0x170] sm:$0xff]
  %v843 = vld [vmem:[%s0 + $0x178] sm:$0xff]
  %v844 = vld [vmem:[%s0 + $0x180] sm:$0xff]
  %v845 = vld [vmem:[%s0 + $0x188] sm:$0xff]
  %v846 = vld [vmem:[%s0 + $0x190] sm:$0xff]
  %v847 = vld [vmem:[%s0 + $0x198] sm:$0xff]
  %v848 = vld [vmem:[%s0 + $0x1a0] sm:$0xff]
  %v849 = vld [vmem:[%s0 + $0x1a8] sm:$0xff]
  %v850 = vld [vmem:[%s0 + $0x1b0] sm:$0xff]
  %v851 = vld [vmem:[%s0 + $0x1b8] sm:$0xff]
  %v852 = vld [vmem:[%s0 + $0x1c0] sm:$0xff]
  %v853 = vld [vmem:[%s0 + $0x1c8] sm:$0xff]
  %v854 = vld [vmem:[%s0 + $0x1d0] sm:$0xff]
  %v855 = vld [vmem:[%s0 + $0x1d8] sm:$0xff]
  %v856 = vld [vmem:[%s0 + $0x1e0] sm:$0xff]
  %v857 = vld [vmem:[%s0 + $0x1e8] sm:$0xff]
  %v858 = vld [vmem:[%s0 + $0x1f0] sm:$0xff]
  %v859 = vld [vmem:[%s0 + $0x1f8] sm:$0xff]
  %v860 = vld [vmem:[%s0 + $0x200] sm:$0xff]
  %v861 = vld [vmem:[%s0 + $0x208] sm:$0xff]
  %v862 = vld [vmem:[%s0 + $0x210] sm:$0xff]
  %v863 = vld [vmem:[%s0 + $0x218] sm:$0xff]
  %v864 = vld [vmem:[%s0 + $0x220] sm:$0xff]
  %v865 = vld [vmem:[%s0 + $0x228] sm:$0xff]
  %v866 = vld [vmem:[%s0 + $0x230] sm:$0xff]
  %v867 = vld [vmem:[%s0 + $0x238] sm:$0xff]
  %v868 = vld [vmem:[%s0 + $0x240] sm:$0xff]
  %v869 = vld [vmem:[%s0 + $0x248] sm:$0xff]
  %v870 = vld [vmem:[%s0 + $0x250] sm:$0xff]
  %v871 = vld [vmem:[%s0 + $0x258] sm:$0xff]
  %v872 = vld [vmem:[%s0 + $0x260] sm:$0xff]
  %v873 = vld [vmem:[%s0 + $0x268] sm:$0xff]
  %v874 = vld [vmem:[%s0 + $0x270] sm:$0xff]
  %v875 = vld [vmem:[%s0 + $0x278] sm:$0xff]
  %v876 = vld [vmem:[%s0 + $0x280] sm:$0xff]
  %v877 = vld [vmem:[%s0 + $0x288] sm:$0xff]
  %v878 = vld [vmem:[%s0 + $0x290] sm:$0xff]
  %v879 = vld [vmem:[%s0 + $0x298] sm:$0xff]
  %v880 = vld [vmem:[%s0 + $0x2a0] sm:$0xff]
  %v881 = vld [vmem:[%s0 + $0x2a8] sm:$0xff]
  %v882 = vld [vmem:[%s0 + $0x2b0] sm:$0xff]
  %v883 = vld [vmem:[%s0 + $0x2b8] sm:$0xff]
  %v884 = vld [vmem:[%s0 + $0x2c0] sm:$0xff]
  %v885 = vld [vmem:[%s0 + $0x2c8] sm:$0xff]
  %v886 = vld [vmem:[%s0 + $0x2d0] sm:$0xff]
  %v887 = vld [vmem:[%s0 + $0x2d8] sm:$0xff]
  %v888 = vld [vmem:[%s0 + $0x2e0] sm:$0xff]
  %v889 = vld [vmem:[%s0 + $0x2e8] sm:$0xff]
  %v890 = vld [vmem:[%s0 + $0x2f0] sm:$0xff]
  %v891 = vld [vmem:[%s0 + $0x2f8] sm:$0xff]
  %v892 = vld [vmem:[%s0 + $0x300] sm:$0xff]
  %v893 = vld [vmem:[%s0 + $0x308] sm:$0xff]
  %v894 = vld [vmem:[%s0 + $0x310] sm:$0xff]
  %v895 = vld [vmem:[%s0 + $0x318] sm:$0xff]
  %v896 = vld [vmem:[%s0 + $0x320] sm:$0xff]
  %v897 = vld [vmem:[%s0 + $0x328] sm:$0xff]
  %v898 = vld [vmem:[%s0 + $0x330] sm:$0xff]
  %v899 = vld [vmem:[%s0 + $0x338] sm:$0xff]
  %v900 = vld [vmem:[%s0 + $0x340] sm:$0xff]
  %v901 = vld [vmem:[%s0 + $0x348] sm:$0xff]
  %v902 = vld [vmem:[%s0 + $0x350] sm:$0xff]
  %v903 = vld [vmem:[%s0 + $0x358] sm:$0xff]
  %v904 = vld [vmem:[%s0 + $0x360] sm:$0xff]
  %v905 = vld [vmem:[%s0 + $0x368] sm:$0xff]
  %v906 = vld [vmem:[%s0 + $0x370] sm:$0xff]
  %v907 = vld [vmem:[%s0 + $0x378] sm:$0xff]
  %v908 = vld [vmem:[%s0 + $0x380] sm:$0xff]
  %v909 = vld [vmem:[%s0 + $0x388] sm:$0xff]
  %v910 = vld [vmem:[%s0 + $0x390] sm:$0xff]
  %v911 = vld [vmem:[%s0 + $0x398] sm:$0xff]
  %v912 = vld [vmem:[%s0 + $0x3a0] sm:$0xff]
  %v913 = vld [vmem:[%s0 + $0x3a8] sm:$0xff]
  %v914 = vld [vmem:[%s0 + $0x3b0] sm:$0xff]
  %v915 = vld [vmem:[%s0 + $0x3b8] sm:$0xff]
  %v916 = vld [vmem:[%s0 + $0x3c0] sm:$0xff]
  %v917 = vld [vmem:[%s0 + $0x3c8] sm:$0xff]
  %v918 = vld [vmem:[%s0 + $0x3d0] sm:$0xff]
  %v919 = vld [vmem:[%s0 + $0x3d8] sm:$0xff]
  %v920 = vld [vmem:[%s0 + $0x3e0] sm:$0xff]
  %v921 = vld [vmem:[%s0 + $0x3e8] sm:$0xff]
  %v922 = vld [vmem:[%s0 + $0x3f0] sm:$0xff]
  %v923 = vld [vmem:[%s0 + $0x3f8] sm:$0xff]
  %v1052 = vunpack.c.l.b16 %v796
  %v1053 = vunpack.c.h.b16 %v796
  %v1054 = vunpack.c.l.b16 %v797
  %v1055 = vunpack.c.h.b16 %v797
  %v1056 = vunpack.c.l.b16 %v798
  %v1057 = vunpack.c.h.b16 %v798
  %v1058 = vunpack.c.l.b16 %v799
  %v1059 = vunpack.c.h.b16 %v799
  %v1060 = vunpack.c.l.b16 %v800
  %v1061 = vunpack.c.h.b16 %v800
  %v1062 = vunpack.c.l.b16 %v801
  %v1063 = vunpack.c.h.b16 %v801
  %v1064 = vunpack.c.l.b16 %v802
  %v1065 = vunpack.c.h.b16 %v802
  %v1066 = vunpack.c.l.b16 %v803
  %v1067 = vunpack.c.h.b16 %v803
  %v1068 = vunpack.c.l.b16 %v804
  %v1069 = vunpack.c.h.b16 %v804
  %v1070 = vunpack.c.l.b16 %v805
  %v1071 = vunpack.c.h.b16 %v805
  %v1072 = vunpack.c.l.b16 %v806
  %v1073 = vunpack.c.h.b16 %v806
  %v1074 = vunpack.c.l.b16 %v807
  %v1075 = vunpack.c.h.b16 %v807
  %v1076 = vunpack.c.l.b16 %v808
  %v1077 = vunpack.c.h.b16 %v808
  %v1078 = vunpack.c.l.b16 %v809
  %v1079 = vunpack.c.h.b16 %v809
  %v1080 = vunpack.c.l.b16 %v810
  %v1081 = vunpack.c.h.b16 %v810
  %v1082 = vunpack.c.l.b16 %v811
  %v1083 = vunpack.c.h.b16 %v811
  %v1084 = vunpack.c.l.b16 %v812
  %v1085 = vunpack.c.h.b16 %v812
  %v1086 = vunpack.c.l.b16 %v813
  %v1087 = vunpack.c.h.b16 %v813
  %v1088 = vunpack.c.l.b16 %v814
  %v1089 = vunpack.c.h.b16 %v814
  %v1090 = vunpack.c.l.b16 %v815
  %v1091 = vunpack.c.h.b16 %v815
  %v1092 = vunpack.c.l.b16 %v816
  %v1093 = vunpack.c.h.b16 %v816
  %v1094 = vunpack.c.l.b16 %v817
  %v1095 = vunpack.c.h.b16 %v817
  %v1096 = vunpack.c.l.b16 %v818
  %v1097 = vunpack.c.h.b16 %v818
  %v1098 = vunpack.c.l.b16 %v819
  %v1099 = vunpack.c.h.b16 %v819
  %v1100 = vunpack.c.l.b16 %v820
  %v1101 = vunpack.c.h.b16 %v820
  %v1102 = vunpack.c.l.b16 %v821
  %v1103 = vunpack.c.h.b16 %v821
  %v1104 = vunpack.c.l.b16 %v822
  %v1105 = vunpack.c.h.b16 %v822
  %v1106 = vunpack.c.l.b16 %v823
  %v1107 = vunpack.c.h.b16 %v823
  %v1108 = vunpack.c.l.b16 %v824
  %v1109 = vunpack.c.h.b16 %v824
  %v1110 = vunpack.c.l.b16 %v825
  %v1111 = vunpack.c.h.b16 %v825
  %v1112 = vunpack.c.l.b16 %v826
  %v1113 = vunpack.c.h.b16 %v826
  %v1114 = vunpack.c.l.b16 %v827
  %v1115 = vunpack.c.h.b16 %v827
  %v1116 = vunpack.c.l.b16 %v828
  %v1117 = vunpack.c.h.b16 %v828
  %v1118 = vunpack.c.l.b16 %v829
  %v1119 = vunpack.c.h.b16 %v829
  %v1120 = vunpack.c.l.b16 %v830
  %v1121 = vunpack.c.h.b16 %v830
  %v1122 = vunpack.c.l.b16 %v831
  %v1123 = vunpack.c.h.b16 %v831
  %v1124 = vunpack.c.l.b16 %v832
  %v1125 = vunpack.c.h.b16 %v832
  %v1126 = vunpack.c.l.b16 %v833
  %v1127 = vunpack.c.h.b16 %v833
  %v1128 = vunpack.c.l.b16 %v834
  %v1129 = vunpack.c.h.b16 %v834
  %v1130 = vunpack.c.l.b16 %v835
  %v1131 = vunpack.c.h.b16 %v835
  %v1132 = vunpack.c.l.b16 %v836
  %v1133 = vunpack.c.h.b16 %v836
  %v1134 = vunpack.c.l.b16 %v837
  %v1135 = vunpack.c.h.b16 %v837
  %v1136 = vunpack.c.l.b16 %v838
  %v1137 = vunpack.c.h.b16 %v838
  %v1138 = vunpack.c.l.b16 %v839
  %v1139 = vunpack.c.h.b16 %v839
  %v1140 = vunpack.c.l.b16 %v840
  %v1141 = vunpack.c.h.b16 %v840
  %v1142 = vunpack.c.l.b16 %v841
  %v1143 = vunpack.c.h.b16 %v841
  %v1144 = vunpack.c.l.b16 %v842
  %v1145 = vunpack.c.h.b16 %v842
  %v1146 = vunpack.c.l.b16 %v843
  %v1147 = vunpack.c.h.b16 %v843
  %v1148 = vunpack.c.l.b16 %v844
  %v1149 = vunpack.c.h.b16 %v844
  %v1150 = vunpack.c.l.b16 %v845
  %v1151 = vunpack.c.h.b16 %v845
  %v1152 = vunpack.c.l.b16 %v846
  %v1153 = vunpack.c.h.b16 %v846
  %v1154 = vunpack.c.l.b16 %v847
  %v1155 = vunpack.c.h.b16 %v847
  %v1156 = vunpack.c.l.b16 %v848
  %v1157 = vunpack.c.h.b16 %v848
  %v1158 = vunpack.c.l.b16 %v849
  %v1159 = vunpack.c.h.b16 %v849
  %v1160 = vunpack.c.l.b16 %v850
  %v1161 = vunpack.c.h.b16 %v850
  %v1162 = vunpack.c.l.b16 %v851
  %v1163 = vunpack.c.h.b16 %v851
  %v1164 = vunpack.c.l.b16 %v852
  %v1165 = vunpack.c.h.b16 %v852
  %v1166 = vunpack.c.l.b16 %v853
  %v1167 = vunpack.c.h.b16 %v853
  %v1168 = vunpack.c.l.b16 %v854
  %v1169 = vunpack.c.h.b16 %v854
  %v1170 = vunpack.c.l.b16 %v855
  %v1171 = vunpack.c.h.b16 %v855
  %v1172 = vunpack.c.l.b16 %v856
  %v1173 = vunpack.c.h.b16 %v856
  %v1174 = vunpack.c.l.b16 %v857
  %v1175 = vunpack.c.h.b16 %v857
  %v1176 = vunpack.c.l.b16 %v858
  %v1177 = vunpack.c.h.b16 %v858
  %v1178 = vunpack.c.l.b16 %v859
  %v1179 = vunpack.c.h.b16 %v859
  %v1180 = vunpack.c.l.b16 %v860
  %v1181 = vunpack.c.h.b16 %v860
  %v1182 = vunpack.c.l.b16 %v861
  %v1183 = vunpack.c.h.b16 %v861
  %v1184 = vunpack.c.l.b16 %v862
  %v1185 = vunpack.c.h.b16 %v862
  %v1186 = vunpack.c.l.b16 %v863
  %v1187 = vunpack.c.h.b16 %v863
  %v1188 = vunpack.c.l.b16 %v864
  %v1189 = vunpack.c.h.b16 %v864
  %v1190 = vunpack.c.l.b16 %v865
  %v1191 = vunpack.c.h.b16 %v865
  %v1192 = vunpack.c.l.b16 %v866
  %v1193 = vunpack.c.h.b16 %v866
  %v1194 = vunpack.c.l.b16 %v867
  %v1195 = vunpack.c.h.b16 %v867
  %v1196 = vunpack.c.l.b16 %v868
  %v1197 = vunpack.c.h.b16 %v868
  %v1198 = vunpack.c.l.b16 %v869
  %v1199 = vunpack.c.h.b16 %v869
  %v1200 = vunpack.c.l.b16 %v870
  %v1201 = vunpack.c.h.b16 %v870
  %v1202 = vunpack.c.l.b16 %v871
  %v1203 = vunpack.c.h.b16 %v871
  %v1204 = vunpack.c.l.b16 %v872
  %v1205 = vunpack.c.h.b16 %v872
  %v1206 = vunpack.c.l.b16 %v873
  %v1207 = vunpack.c.h.b16 %v873
  %v1208 = vunpack.c.l.b16 %v874
  %v1209 = vunpack.c.h.b16 %v874
  %v1210 = vunpack.c.l.b16 %v875
  %v1211 = vunpack.c.h.b16 %v875
  %v1212 = vunpack.c.l.b16 %v876
  %v1213 = vunpack.c.h.b16 %v876
  %v1214 = vunpack.c.l.b16 %v877
  %v1215 = vunpack.c.h.b16 %v877
  %v1216 = vunpack.c.l.b16 %v878
  %v1217 = vunpack.c.h.b16 %v878
  %v1218 = vunpack.c.l.b16 %v879
  %v1219 = vunpack.c.h.b16 %v879
  %v1220 = vunpack.c.l.b16 %v880
  %v1221 = vunpack.c.h.b16 %v880
  %v1222 = vunpack.c.l.b16 %v881
  %v1223 = vunpack.c.h.b16 %v881
  %v1224 = vunpack.c.l.b16 %v882
  %v1225 = vunpack.c.h.b16 %v882
  %v1226 = vunpack.c.l.b16 %v883
  %v1227 = vunpack.c.h.b16 %v883
  %v1228 = vunpack.c.l.b16 %v884
  %v1229 = vunpack.c.h.b16 %v884
  %v1230 = vunpack.c.l.b16 %v885
  %v1231 = vunpack.c.h.b16 %v885
  %v1232 = vunpack.c.l.b16 %v886
  %v1233 = vunpack.c.h.b16 %v886
  %v1234 = vunpack.c.l.b16 %v887
  %v1235 = vunpack.c.h.b16 %v887
  %v1236 = vunpack.c.l.b16 %v888
  %v1237 = vunpack.c.h.b16 %v888
  %v1238 = vunpack.c.l.b16 %v889
  %v1239 = vunpack.c.h.b16 %v889
  %v1240 = vunpack.c.l.b16 %v890
  %v1241 = vunpack.c.h.b16 %v890
  %v1242 = vunpack.c.l.b16 %v891
  %v1243 = vunpack.c.h.b16 %v891
  %v1244 = vunpack.c.l.b16 %v892
  %v1245 = vunpack.c.h.b16 %v892
  %v1246 = vunpack.c.l.b16 %v893
  %v1247 = vunpack.c.h.b16 %v893
  %v1248 = vunpack.c.l.b16 %v894
  %v1249 = vunpack.c.h.b16 %v894
  %v1250 = vunpack.c.l.b16 %v895
  %v1251 = vunpack.c.h.b16 %v895
  %v1252 = vunpack.c.l.b16 %v896
  %v1253 = vunpack.c.h.b16 %v896
  %v1254 = vunpack.c.l.b16 %v897
  %v1255 = vunpack.c.h.b16 %v897
  %v1256 = vunpack.c.l.b16 %v898
  %v1257 = vunpack.c.h.b16 %v898
  %v1258 = vunpack.c.l.b16 %v899
  %v1259 = vunpack.c.h.b16 %v899
  %v1260 = vunpack.c.l.b16 %v900
  %v1261 = vunpack.c.h.b16 %v900
  %v1262 = vunpack.c.l.b16 %v901
  %v1263 = vunpack.c.h.b16 %v901
  %v1264 = vunpack.c.l.b16 %v902
  %v1265 = vunpack.c.h.b16 %v902
  %v1266 = vunpack.c.l.b16 %v903
  %v1267 = vunpack.c.h.b16 %v903
  %v1268 = vunpack.c.l.b16 %v904
  %v1269 = vunpack.c.h.b16 %v904
  %v1270 = vunpack.c.l.b16 %v905
  %v1271 = vunpack.c.h.b16 %v905
  %v1272 = vunpack.c.l.b16 %v906
  %v1273 = vunpack.c.h.b16 %v906
  %v1274 = vunpack.c.l.b16 %v907
  %v1275 = vunpack.c.h.b16 %v907
  %v1276 = vunpack.c.l.b16 %v908
  %v1277 = vunpack.c.h.b16 %v908
  %v1278 = vunpack.c.l.b16 %v909
  %v1279 = vunpack.c.h.b16 %v909
  %v1280 = vunpack.c.l.b16 %v910
  %v1281 = vunpack.c.h.b16 %v910
  %v1282 = vunpack.c.l.b16 %v911
  %v1283 = vunpack.c.h.b16 %v911
  %v1284 = vunpack.c.l.b16 %v912
  %v1285 = vunpack.c.h.b16 %v912
  %v1286 = vunpack.c.l.b16 %v913
  %v1287 = vunpack.c.h.b16 %v913
  %v1288 = vunpack.c.l.b16 %v914
  %v1289 = vunpack.c.h.b16 %v914
  %v1290 = vunpack.c.l.b16 %v915
  %v1291 = vunpack.c.h.b16 %v915
  %v1292 = vunpack.c.l.b16 %v916
  %v1293 = vunpack.c.h.b16 %v916
  %v1294 = vunpack.c.l.b16 %v917
  %v1295 = vunpack.c.h.b16 %v917
  %v1296 = vunpack.c.l.b16 %v918
  %v1297 = vunpack.c.h.b16 %v918
  %v1298 = vunpack.c.l.b16 %v919
  %v1299 = vunpack.c.h.b16 %v919
  %v1300 = vunpack.c.l.b16 %v920
  %v1301 = vunpack.c.h.b16 %v920
  %v1302 = vunpack.c.l.b16 %v921
  %v1303 = vunpack.c.h.b16 %v921
  %v1304 = vunpack.c.l.b16 %v922
  %v1305 = vunpack.c.h.b16 %v922
  %v1306 = vunpack.c.l.b16 %v923
  %v1307 = vunpack.c.h.b16 %v923
  %v1308 = vpack.c.b16 %v1056, %v1052
  %v1309 = vpack.c.b16 %v1057, %v1053
  %v1310 = vpack.c.b16 %v1058, %v1054
  %v1311 = vpack.c.b16 %v1059, %v1055
  %v1312 = vpack.c.b16 %v1064, %v1060
  %v1313 = vpack.c.b16 %v1065, %v1061
  %v1314 = vpack.c.b16 %v1066, %v1062
  %v1315 = vpack.c.b16 %v1067, %v1063
  %v1316 = vpack.c.b16 %v1072, %v1068
  %v1317 = vpack.c.b16 %v1073, %v1069
  %v1318 = vpack.c.b16 %v1074, %v1070
  %v1319 = vpack.c.b16 %v1075, %v1071
  %v1320 = vpack.c.b16 %v1080, %v1076
  %v1321 = vpack.c.b16 %v1081, %v1077
  %v1322 = vpack.c.b16 %v1082, %v1078
  %v1323 = vpack.c.b16 %v1083, %v1079
  %v1324 = vpack.c.b16 %v1088, %v1084
  %v1325 = vpack.c.b16 %v1089, %v1085
  %v1326 = vpack.c.b16 %v1090, %v1086
  %v1327 = vpack.c.b16 %v1091, %v1087
  %v1328 = vpack.c.b16 %v1096, %v1092
  %v1329 = vpack.c.b16 %v1097, %v1093
  %v1330 = vpack.c.b16 %v1098, %v1094
  %v1331 = vpack.c.b16 %v1099, %v1095
  %v1332 = vpack.c.b16 %v1104, %v1100
  %v1333 = vpack.c.b16 %v1105, %v1101
  %v1334 = vpack.c.b16 %v1106, %v1102
  %v1335 = vpack.c.b16 %v1107, %v1103
  %v1336 = vpack.c.b16 %v1112, %v1108
  %v1337 = vpack.c.b16 %v1113, %v1109
  %v1338 = vpack.c.b16 %v1114, %v1110
  %v1339 = vpack.c.b16 %v1115, %v1111
  %v1340 = vpack.c.b16 %v1120, %v1116
  %v1341 = vpack.c.b16 %v1121, %v1117
  %v1342 = vpack.c.b16 %v1122, %v1118
  %v1343 = vpack.c.b16 %v1123, %v1119
  %v1344 = vpack.c.b16 %v1128, %v1124
  %v1345 = vpack.c.b16 %v1129, %v1125
  %v1346 = vpack.c.b16 %v1130, %v1126
  %v1347 = vpack.c.b16 %v1131, %v1127
  %v1348 = vpack.c.b16 %v1136, %v1132
  %v1349 = vpack.c.b16 %v1137, %v1133
  %v1350 = vpack.c.b16 %v1138, %v1134
  %v1351 = vpack.c.b16 %v1139, %v1135
  %v1352 = vpack.c.b16 %v1144, %v1140
  %v1353 = vpack.c.b16 %v1145, %v1141
  %v1354 = vpack.c.b16 %v1146, %v1142
  %v1355 = vpack.c.b16 %v1147, %v1143
  %v1356 = vpack.c.b16 %v1152, %v1148
  %v1357 = vpack.c.b16 %v1153, %v1149
  %v1358 = vpack.c.b16 %v1154, %v1150
  %v1359 = vpack.c.b16 %v1155, %v1151
  %v1360 = vpack.c.b16 %v1160, %v1156
  %v1361 = vpack.c.b16 %v1161, %v1157
  %v1362 = vpack.c.b16 %v1162, %v1158
  %v1363 = vpack.c.b16 %v1163, %v1159
  %v1364 = vpack.c.b16 %v1168, %v1164
  %v1365 = vpack.c.b16 %v1169, %v1165
  %v1366 = vpack.c.b16 %v1170, %v1166
  %v1367 = vpack.c.b16 %v1171, %v1167
  %v1368 = vpack.c.b16 %v1176, %v1172
  %v1369 = vpack.c.b16 %v1177, %v1173
  %v1370 = vpack.c.b16 %v1178, %v1174
  %v1371 = vpack.c.b16 %v1179, %v1175
  %v1372 = vpack.c.b16 %v1184, %v1180
  %v1373 = vpack.c.b16 %v1185, %v1181
  %v1374 = vpack.c.b16 %v1186, %v1182
  %v1375 = vpack.c.b16 %v1187, %v1183
  %v1376 = vpack.c.b16 %v1192, %v1188
  %v1377 = vpack.c.b16 %v1193, %v1189
  %v1378 = vpack.c.b16 %v1194, %v1190
  %v1379 = vpack.c.b16 %v1195, %v1191
  %v1380 = vpack.c.b16 %v1200, %v1196
  %v1381 = vpack.c.b16 %v1201, %v1197
  %v1382 = vpack.c.b16 %v1202, %v1198
  %v1383 = vpack.c.b16 %v1203, %v1199
  %v1384 = vpack.c.b16 %v1208, %v1204
  %v1385 = vpack.c.b16 %v1209, %v1205
  %v1386 = vpack.c.b16 %v1210, %v1206
  %v1387 = vpack.c.b16 %v1211, %v1207
  %v1388 = vpack.c.b16 %v1216, %v1212
  %v1389 = vpack.c.b16 %v1217, %v1213
  %v1390 = vpack.c.b16 %v1218, %v1214
  %v1391 = vpack.c.b16 %v1219, %v1215
  %v1392 = vpack.c.b16 %v1224, %v1220
  %v1393 = vpack.c.b16 %v1225, %v1221
  %v1394 = vpack.c.b16 %v1226, %v1222
  %v1395 = vpack.c.b16 %v1227, %v1223
  %v1396 = vpack.c.b16 %v1232, %v1228
  %v1397 = vpack.c.b16 %v1233, %v1229
  %v1398 = vpack.c.b16 %v1234, %v1230
  %v1399 = vpack.c.b16 %v1235, %v1231
  %v1400 = vpack.c.b16 %v1240, %v1236
  %v1401 = vpack.c.b16 %v1241, %v1237
  %v1402 = vpack.c.b16 %v1242, %v1238
  %v1403 = vpack.c.b16 %v1243, %v1239
  %v1404 = vpack.c.b16 %v1248, %v1244
  %v1405 = vpack.c.b16 %v1249, %v1245
  %v1406 = vpack.c.b16 %v1250, %v1246
  %v1407 = vpack.c.b16 %v1251, %v1247
  %v1408 = vpack.c.b16 %v1256, %v1252
  %v1409 = vpack.c.b16 %v1257, %v1253
  %v1410 = vpack.c.b16 %v1258, %v1254
  %v1411 = vpack.c.b16 %v1259, %v1255
  %v1412 = vpack.c.b16 %v1264, %v1260
  %v1413 = vpack.c.b16 %v1265, %v1261
  %v1414 = vpack.c.b16 %v1266, %v1262
  %v1415 = vpack.c.b16 %v1267, %v1263
  %v1416 = vpack.c.b16 %v1272, %v1268
  %v1417 = vpack.c.b16 %v1273, %v1269
  %v1418 = vpack.c.b16 %v1274, %v1270
  %v1419 = vpack.c.b16 %v1275, %v1271
  %v1420 = vpack.c.b16 %v1280, %v1276
  %v1421 = vpack.c.b16 %v1281, %v1277
  %v1422 = vpack.c.b16 %v1282, %v1278
  %v1423 = vpack.c.b16 %v1283, %v1279
  %v1424 = vpack.c.b16 %v1288, %v1284
  %v1425 = vpack.c.b16 %v1289, %v1285
  %v1426 = vpack.c.b16 %v1290, %v1286
  %v1427 = vpack.c.b16 %v1291, %v1287
  %v1428 = vpack.c.b16 %v1296, %v1292
  %v1429 = vpack.c.b16 %v1297, %v1293
  %v1430 = vpack.c.b16 %v1298, %v1294
  %v1431 = vpack.c.b16 %v1299, %v1295
  %v1432 = vpack.c.b16 %v1304, %v1300
  %v1433 = vpack.c.b16 %v1305, %v1301
  %v1434 = vpack.c.b16 %v1306, %v1302
  %v1435 = vpack.c.b16 %v1307, %v1303
  %1564 = vmatprep.subr.bf16.mxu0 0
  %1565 = vmatpush1.bf16.msra.mxu0 %v700
  %1566 = vmatprep.subr.bf16.mxu0 0
  %1567 = vmatpush1.bf16.msra.mxu0 %v701
  %1568 = vmatprep.subr.bf16.mxu0 0
  %1569 = vmatpush1.bf16.msra.mxu0 %v702
  %1570 = vmatprep.subr.bf16.mxu0 0
  %1571 = vmatpush1.bf16.msra.mxu0 %v703
  %1572 = vmatprep.subr.bf16.mxu0 0
  %1573 = vmatpush1.bf16.msra.mxu0 %v704
  %1574 = vmatprep.subr.bf16.mxu0 0
  %1575 = vmatpush1.bf16.msra.mxu0 %v705
  %1576 = vmatprep.subr.bf16.mxu0 0
  %1577 = vmatpush1.bf16.msra.mxu0 %v706
  %1578 = vmatprep.subr.bf16.mxu0 0
  %1579 = vmatpush1.bf16.msra.mxu0 %v707
  %1580 = vmatprep.subr.bf16.mxu0 0
  %1581 = vmatpush1.bf16.msra.mxu0 %v708
  %1582 = vmatprep.subr.bf16.mxu0 0
  %1583 = vmatpush1.bf16.msra.mxu0 %v709
  %1584 = vmatprep.subr.bf16.mxu0 0
  %1585 = vmatpush1.bf16.msra.mxu0 %v710
  %1586 = vmatprep.subr.bf16.mxu0 0
  %1587 = vmatpush1.bf16.msra.mxu0 %v711
  %1588 = vmatprep.subr.bf16.mxu0 0
  %1589 = vmatpush1.bf16.msra.mxu0 %v712
  %1590 = vmatprep.subr.bf16.mxu0 0
  %1591 = vmatpush1.bf16.msra.mxu0 %v713
  %1592 = vmatprep.subr.bf16.mxu0 0
  %1593 = vmatpush1.bf16.msra.mxu0 %v714
  %1594 = vmatprep.subr.bf16.mxu0 0
  %1595 = vmatpush1.bf16.msra.mxu0 %v715
  %1596 = vmatprep.mubr.bf16.mxu0 %v1309
  %1597 = vmatmul.mubr.bf16.gmra.mrb[0].mxu0 %v1308
  %v1598 = vpop.f32.mrb[0].mxu0
  %v1599 = vadd.f32 0.0, %v1598
  %v1600 = vpop.f32.mrb[0].mxu0
  %v1601 = vpop.f32.mrb[0].mxu0
  %v1602 = vadd.f32 0.0, %v1601
  %v1603 = vpop.f32.mrb[0].mxu0
  %1604 = vmatprep.mubr.bf16.mxu0 %v1313
  %1605 = vmatmul.mubr.bf16.gmra.mrb[0].mxu0 %v1312
  %v1606 = vpop.f32.mrb[0].mxu0
  %v1607 = vadd.f32 0.0, %v1606
  %v1608 = vpop.f32.mrb[0].mxu0
  %v1609 = vpop.f32.mrb[0].mxu0
  %v1610 = vadd.f32 0.0, %v1609
  %v1611 = vpop.f32.mrb[0].mxu0
  %1612 = vmatprep.mubr.bf16.mxu0 %v1317
  %1613 = vmatmul.mubr.bf16.gmra.mrb[0].mxu0 %v1316
  %v1614 = vpop.f32.mrb[0].mxu0
  %v1615 = vadd.f32 0.0, %v1614
  %v1616 = vpop.f32.mrb[0].mxu0
  %v1617 = vpop.f32.mrb[0].mxu0
  %v1618 = vadd.f32 0.0, %v1617
  %v1619 = vpop.f32.mrb[0].mxu0
  %1620 = vmatprep.mubr.bf16.mxu0 %v1321
  %1621 = vmatmul.mubr.bf16.gmra.mrb[0].mxu0 %v1320
  %v1622 = vpop.f32.mrb[0].mxu0
  %v1623 = vadd.f32 0.0, %v1622
  %v1624 = vpop.f32.mrb[0].mxu0
  %v1625 = vpop.f32.mrb[0].mxu0
  %v1626 = vadd.f32 0.0, %v1625
  %v1627 = vpop.f32.mrb[0].mxu0
  %1628 = vmatprep.mubr.bf16.mxu0 %v1325
  %1629 = vmatmul.mubr.bf16.gmra.mrb[0].mxu0 %v1324
  %v1630 = vpop.f32.mrb[0].mxu0
  %v1631 = vadd.f32 0.0, %v1630
  %v1632 = vpop.f32.mrb[0].mxu0
  %v1633 = vpop.f32.mrb[0].mxu0
  %v1634 = vadd.f32 0.0, %v1633
  %v1635 = vpop.f32.mrb[0].mxu0
  %1636 = vmatprep.mubr.bf16.mxu0 %v1329
  %1637 = vmatmul.mubr.bf16.gmra.mrb[0].mxu0 %v1328
  %v1638 = vpop.f32.mrb[0].mxu0
  %v1639 = vadd.f32 0.0, %v1638
  %v1640 = vpop.f32.mrb[0].mxu0
  %v1641 = vpop.f32.mrb[0].mxu0
  %v1642 = vadd.f32 0.0, %v1641
  %v1643 = vpop.f32.mrb[0].mxu0
  %1644 = vmatprep.mubr.bf16.mxu0 %v1333
  %1645 = vmatmul.mubr.bf16.gmra.mrb[0].mxu0 %v1332
  %v1646 = vpop.f32.mrb[0].mxu0
  %v1647 = vadd.f32 0.0, %v1646
  %v1648 = vpop.f32.mrb[0].mxu0
  %v1649 = vpop.f32.mrb[0].mxu0
  %v1650 = vadd.f32 0.0, %v1649
  %v1651 = vpop.f32.mrb[0].mxu0
  %1652 = vmatprep.mubr.bf16.mxu0 %v1337
  %1653 = vmatmul.mubr.bf16.gmra.mrb[0].mxu0 %v1336
  %v1654 = vpop.f32.mrb[0].mxu0
  %v1655 = vadd.f32 0.0, %v1654
  %v1656 = vpop.f32.mrb[0].mxu0
  %v1657 = vpop.f32.mrb[0].mxu0
  %v1658 = vadd.f32 0.0, %v1657
  %v1659 = vpop.f32.mrb[0].mxu0
  %1660 = vmatprep.mubr.bf16.mxu0 %v1341
  %1661 = vmatmul.mubr.bf16.gmra.mrb[0].mxu0 %v1340
  %v1662 = vpop.f32.mrb[0].mxu0
  %v1663 = vadd.f32 0.0, %v1662
  %v1664 = vpop.f32.mrb[0].mxu0
  %v1665 = vpop.f32.mrb[0].mxu0
  %v1666 = vadd.f32 0.0, %v1665
  %v1667 = vpop.f32.mrb[0].mxu0
  %1668 = vmatprep.mubr.bf16.mxu0 %v1345
  %1669 = vmatmul.mubr.bf16.gmra.mrb[0].mxu0 %v1344
  %v1670 = vpop.f32.mrb[0].mxu0
  %v1671 = vadd.f32 0.0, %v1670
  %v1672 = vpop.f32.mrb[0].mxu0
  %v1673 = vpop.f32.mrb[0].mxu0
  %v1674 = vadd.f32 0.0, %v1673
  %v1675 = vpop.f32.mrb[0].mxu0
  %1676 = vmatprep.mubr.bf16.mxu0 %v1349
  %1677 = vmatmul.mubr.bf16.gmra.mrb[0].mxu0 %v1348
  %v1678 = vpop.f32.mrb[0].mxu0
  %v1679 = vadd.f32 0.0, %v1678
  %v1680 = vpop.f32.mrb[0].mxu0
  %v1681 = vpop.f32.mrb[0].mxu0
  %v1682 = vadd.f32 0.0, %v1681
  %v1683 = vpop.f32.mrb[0].mxu0
  %1684 = vmatprep.mubr.bf16.mxu0 %v1353
  %1685 = vmatmul.mubr.bf16.gmra.mrb[0].mxu0 %v1352
  %v1686 = vpop.f32.mrb[0].mxu0
  %v1687 = vadd.f32 0.0, %v1686
  %v1688 = vpop.f32.mrb[0].mxu0
  %v1689 = vpop.f32.mrb[0].mxu0
  %v1690 = vadd.f32 0.0, %v1689
  %v1691 = vpop.f32.mrb[0].mxu0
  %1692 = vmatprep.mubr.bf16.mxu0 %v1357
  %1693 = vmatmul.mubr.bf16.gmra.mrb[0].mxu0 %v1356
  %v1694 = vpop.f32.mrb[0].mxu0
  %v1695 = vadd.f32 0.0, %v1694
  %v1696 = vpop.f32.mrb[0].mxu0
  %v1697 = vpop.f32.mrb[0].mxu0
  %v1698 = vadd.f32 0.0, %v1697
  %v1699 = vpop.f32.mrb[0].mxu0
  %1700 = vmatprep.mubr.bf16.mxu0 %v1361
  %1701 = vmatmul.mubr.bf16.gmra.mrb[0].mxu0 %v1360
  %v1702 = vpop.f32.mrb[0].mxu0
  %v1703 = vadd.f32 0.0, %v1702
  %v1704 = vpop.f32.mrb[0].mxu0
  %v1705 = vpop.f32.mrb[0].mxu0
  %v1706 = vadd.f32 0.0, %v1705
  %v1707 = vpop.f32.mrb[0].mxu0
  %1708 = vmatprep.mubr.bf16.mxu0 %v1365
  %1709 = vmatmul.mubr.bf16.gmra.mrb[0].mxu0 %v1364
  %v1710 = vpop.f32.mrb[0].mxu0
  %v1711 = vadd.f32 0.0, %v1710
  %v1712 = vpop.f32.mrb[0].mxu0
  %v1713 = vpop.f32.mrb[0].mxu0
  %v1714 = vadd.f32 0.0, %v1713
  %v1715 = vpop.f32.mrb[0].mxu0
  %1716 = vmatprep.mubr.bf16.mxu0 %v1369
  %1717 = vmatmul.mubr.bf16.gmra.mrb[0].mxu0 %v1368
  %v1718 = vpop.f32.mrb[0].mxu0
  %v1719 = vadd.f32 0.0, %v1718
  %v1720 = vpop.f32.mrb[0].mxu0
  %v1721 = vpop.f32.mrb[0].mxu0
  %v1722 = vadd.f32 0.0, %v1721
  %v1723 = vpop.f32.mrb[0].mxu0
  %1724 = vmatprep.mubr.bf16.mxu0 %v1373
  %1725 = vmatmul.mubr.bf16.gmra.mrb[0].mxu0 %v1372
  %v1726 = vpop.f32.mrb[0].mxu0
  %v1727 = vadd.f32 0.0, %v1726
  %v1728 = vpop.f32.mrb[0].mxu0
  %v1729 = vpop.f32.mrb[0].mxu0
  %v1730 = vadd.f32 0.0, %v1729
  %v1731 = vpop.f32.mrb[0].mxu0
  %1732 = vmatprep.mubr.bf16.mxu0 %v1377
  %1733 = vmatmul.mubr.bf16.gmra.mrb[0].mxu0 %v1376
  %v1734 = vpop.f32.mrb[0].mxu0
  %v1735 = vadd.f32 0.0, %v1734
  %v1736 = vpop.f32.mrb[0].mxu0
  %v1737 = vpop.f32.mrb[0].mxu0
  %v1738 = vadd.f32 0.0, %v1737
  %v1739 = vpop.f32.mrb[0].mxu0
  %1740 = vmatprep.mubr.bf16.mxu0 %v1381
  %1741 = vmatmul.mubr.bf16.gmra.mrb[0].mxu0 %v1380
  %v1742 = vpop.f32.mrb[0].mxu0
  %v1743 = vadd.f32 0.0, %v1742
  %v1744 = vpop.f32.mrb[0].mxu0
  %v1745 = vpop.f32.mrb[0].mxu0
  %v1746 = vadd.f32 0.0, %v1745
  %v1747 = vpop.f32.mrb[0].mxu0
  %1748 = vmatprep.mubr.bf16.mxu0 %v1385
  %1749 = vmatmul.mubr.bf16.gmra.mrb[0].mxu0 %v1384
  %v1750 = vpop.f32.mrb[0].mxu0
  %v1751 = vadd.f32 0.0, %v1750
  %v1752 = vpop.f32.mrb[0].mxu0
  %v1753 = vpop.f32.mrb[0].mxu0
  %v1754 = vadd.f32 0.0, %v1753
  %v1755 = vpop.f32.mrb[0].mxu0
  %1756 = vmatprep.mubr.bf16.mxu0 %v1389
  %1757 = vmatmul.mubr.bf16.gmra.mrb[0].mxu0 %v1388
  %v1758 = vpop.f32.mrb[0].mxu0
  %v1759 = vadd.f32 0.0, %v1758
  %v1760 = vpop.f32.mrb[0].mxu0
  %v1761 = vpop.f32.mrb[0].mxu0
  %v1762 = vadd.f32 0.0, %v1761
  %v1763 = vpop.f32.mrb[0].mxu0
  %1764 = vmatprep.mubr.bf16.mxu0 %v1393
  %1765 = vmatmul.mubr.bf16.gmra.mrb[0].mxu0 %v1392
  %v1766 = vpop.f32.mrb[0].mxu0
  %v1767 = vadd.f32 0.0, %v1766
  %v1768 = vpop.f32.mrb[0].mxu0
  %v1769 = vpop.f32.mrb[0].mxu0
  %v1770 = vadd.f32 0.0, %v1769
  %v1771 = vpop.f32.mrb[0].mxu0
  %1772 = vmatprep.mubr.bf16.mxu0 %v1397
  %1773 = vmatmul.mubr.bf16.gmra.mrb[0].mxu0 %v1396
  %v1774 = vpop.f32.mrb[0].mxu0
  %v1775 = vadd.f32 0.0, %v1774
  %v1776 = vpop.f32.mrb[0].mxu0
  %v1777 = vpop.f32.mrb[0].mxu0
  %v1778 = vadd.f32 0.0, %v1777
  %v1779 = vpop.f32.mrb[0].mxu0
  %1780 = vmatprep.mubr.bf16.mxu0 %v1401
  %1781 = vmatmul.mubr.bf16.gmra.mrb[0].mxu0 %v1400
  %v1782 = vpop.f32.mrb[0].mxu0
  %v1783 = vadd.f32 0.0, %v1782
  %v1784 = vpop.f32.mrb[0].mxu0
  %v1785 = vpop.f32.mrb[0].mxu0
  %v1786 = vadd.f32 0.0, %v1785
  %v1787 = vpop.f32.mrb[0].mxu0
  %1788 = vmatprep.mubr.bf16.mxu0 %v1405
  %1789 = vmatmul.mubr.bf16.gmra.mrb[0].mxu0 %v1404
  %v1790 = vpop.f32.mrb[0].mxu0
  %v1791 = vadd.f32 0.0, %v1790
  %v1792 = vpop.f32.mrb[0].mxu0
  %v1793 = vpop.f32.mrb[0].mxu0
  %v1794 = vadd.f32 0.0, %v1793
  %v1795 = vpop.f32.mrb[0].mxu0
  %1796 = vmatprep.mubr.bf16.mxu0 %v1409
  %1797 = vmatmul.mubr.bf16.gmra.mrb[0].mxu0 %v1408
  %v1798 = vpop.f32.mrb[0].mxu0
  %v1799 = vadd.f32 0.0, %v1798
  %v1800 = vpop.f32.mrb[0].mxu0
  %v1801 = vpop.f32.mrb[0].mxu0
  %v1802 = vadd.f32 0.0, %v1801
  %v1803 = vpop.f32.mrb[0].mxu0
  %1804 = vmatprep.mubr.bf16.mxu0 %v1413
  %1805 = vmatmul.mubr.bf16.gmra.mrb[0].mxu0 %v1412
  %v1806 = vpop.f32.mrb[0].mxu0
  %v1807 = vadd.f32 0.0, %v1806
  %v1808 = vpop.f32.mrb[0].mxu0
  %v1809 = vpop.f32.mrb[0].mxu0
  %v1810 = vadd.f32 0.0, %v1809
  %v1811 = vpop.f32.mrb[0].mxu0
  %1812 = vmatprep.mubr.bf16.mxu0 %v1417
  %1813 = vmatmul.mubr.bf16.gmra.mrb[0].mxu0 %v1416
  %v1814 = vpop.f32.mrb[0].mxu0
  %v1815 = vadd.f32 0.0, %v1814
  %v1816 = vpop.f32.mrb[0].mxu0
  %v1817 = vpop.f32.mrb[0].mxu0
  %v1818 = vadd.f32 0.0, %v1817
  %v1819 = vpop.f32.mrb[0].mxu0
  %1820 = vmatprep.mubr.bf16.mxu0 %v1421
  %1821 = vmatmul.mubr.bf16.gmra.mrb[0].mxu0 %v1420
  %v1822 = vpop.f32.mrb[0].mxu0
  %v1823 = vadd.f32 0.0, %v1822
  %v1824 = vpop.f32.mrb[0].mxu0
  %v1825 = vpop.f32.mrb[0].mxu0
  %v1826 = vadd.f32 0.0, %v1825
  %v1827 = vpop.f32.mrb[0].mxu0
  %1828 = vmatprep.mubr.bf16.mxu0 %v1425
  %1829 = vmatmul.mubr.bf16.gmra.mrb[0].mxu0 %v1424
  %v1830 = vpop.f32.mrb[0].mxu0
  %v1831 = vadd.f32 0.0, %v1830
  %v1832 = vpop.f32.mrb[0].mxu0
  %v1833 = vpop.f32.mrb[0].mxu0
  %v1834 = vadd.f32 0.0, %v1833
  %v1835 = vpop.f32.mrb[0].mxu0
  %1836 = vmatprep.mubr.bf16.mxu0 %v1429
  %1837 = vmatmul.mubr.bf16.gmra.mrb[0].mxu0 %v1428
  %v1838 = vpop.f32.mrb[0].mxu0
  %v1839 = vadd.f32 0.0, %v1838
  %v1840 = vpop.f32.mrb[0].mxu0
  %v1841 = vpop.f32.mrb[0].mxu0
  %v1842 = vadd.f32 0.0, %v1841
  %v1843 = vpop.f32.mrb[0].mxu0
  %1844 = vmatprep.mubr.bf16.mxu0 %v1433
  %1845 = vmatmul.mubr.bf16.gmra.mrb[0].mxu0 %v1432
  %v1846 = vpop.f32.mrb[0].mxu0
  %v1847 = vadd.f32 0.0, %v1846
  %v1848 = vpop.f32.mrb[0].mxu0
  %v1849 = vpop.f32.mrb[0].mxu0
  %v1850 = vadd.f32 0.0, %v1849
  %v1851 = vpop.f32.mrb[0].mxu0
  %1852 = vdwg.mxu0
  %1853 = vmatprep.subr.bf16.mxu0 0
  %1854 = vmatpush1.bf16.msra.mxu0 %v716
  %1855 = vmatprep.subr.bf16.mxu0 0
  %1856 = vmatpush1.bf16.msra.mxu0 %v717
  %1857 = vmatprep.subr.bf16.mxu0 0
  %1858 = vmatpush1.bf16.msra.mxu0 %v718
  %1859 = vmatprep.subr.bf16.mxu0 0
  %1860 = vmatpush1.bf16.msra.mxu0 %v719
  %1861 = vmatprep.subr.bf16.mxu0 0
  %1862 = vmatpush1.bf16.msra.mxu0 %v720
  %1863 = vmatprep.subr.bf16.mxu0 0
  %1864 = vmatpush1.bf16.msra.mxu0 %v721
  %1865 = vmatprep.subr.bf16.mxu0 0
  %1866 = vmatpush1.bf16.msra.mxu0 %v722
  %1867 = vmatprep.subr.bf16.mxu0 0
  %1868 = vmatpush1.bf16.msra.mxu0 %v723
  %1869 = vmatprep.subr.bf16.mxu0 0
  %1870 = vmatpush1.bf16.msra.mxu0 %v724
  %1871 = vmatprep.subr.bf16.mxu0 0
  %1872 = vmatpush1.bf16.msra.mxu0 %v725
  %1873 = vmatprep.subr.bf16.mxu0 0
  %1874 = vmatpush1.bf16.msra.mxu0 %v726
  %1875 = vmatprep.subr.bf16.mxu0 0
  %1876 = vmatpush1.bf16.msra.mxu0 %v727
  %1877 = vmatprep.subr.bf16.mxu0 0
  %1878 = vmatpush1.bf16.msra.mxu0 %v728
  %1879 = vmatprep.subr.bf16.mxu0 0
  %1880 = vmatpush1.bf16.msra.mxu0 %v729
  %1881 = vmatprep.subr.bf16.mxu0 0
  %1882 = vmatpush1.bf16.msra.mxu0 %v730
  %1883 = vmatprep.subr.bf16.mxu0 0
  %1884 = vmatpush1.bf16.msra.mxu0 %v731
  %1885 = vmatprep.mubr.bf16.mxu0 %v1311
  %1886 = vmatmul.mubr.bf16.gmra.mrb[0].mxu0 %v1310
  %v1887 = vpop.f32.mrb[0].mxu0
  %v1888 = vadd.f32 %v1599, %v1887
  %v1889 = vpop.f32.mrb[0].mxu0
  %v1890 = vpop.f32.mrb[0].mxu0
  %v1891 = vadd.f32 %v1602, %v1890
  %v1892 = vpop.f32.mrb[0].mxu0
  %1893 = vmatprep.mubr.bf16.mxu0 %v1315
  %1894 = vmatmul.mubr.bf16.gmra.mrb[0].mxu0 %v1314
  %v1895 = vpop.f32.mrb[0].mxu0
  %v1896 = vadd.f32 %v1607, %v1895
  %v1897 = vpop.f32.mrb[0].mxu0
  %v1898 = vpop.f32.mrb[0].mxu0
  %v1899 = vadd.f32 %v1610, %v1898
  %v1900 = vpop.f32.mrb[0].mxu0
  %1901 = vmatprep.mubr.bf16.mxu0 %v1319
  %1902 = vmatmul.mubr.bf16.gmra.mrb[0].mxu0 %v1318
  %v1903 = vpop.f32.mrb[0].mxu0
  %v1904 = vadd.f32 %v1615, %v1903
  %v1905 = vpop.f32.mrb[0].mxu0
  %v1906 = vpop.f32.mrb[0].mxu0
  %v1907 = vadd.f32 %v1618, %v1906
  %v1908 = vpop.f32.mrb[0].mxu0
  %1909 = vmatprep.mubr.bf16.mxu0 %v1323
  %1910 = vmatmul.mubr.bf16.gmra.mrb[0].mxu0 %v1322
  %v1911 = vpop.f32.mrb[0].mxu0
  %v1912 = vadd.f32 %v1623, %v1911
  %v1913 = vpop.f32.mrb[0].mxu0
  %v1914 = vpop.f32.mrb[0].mxu0
  %v1915 = vadd.f32 %v1626, %v1914
  %v1916 = vpop.f32.mrb[0].mxu0
  %1917 = vmatprep.mubr.bf16.mxu0 %v1327
  %1918 = vmatmul.mubr.bf16.gmra.mrb[0].mxu0 %v1326
  %v1919 = vpop.f32.mrb[0].mxu0
  %v1920 = vadd.f32 %v1631, %v1919
  %v1921 = vpop.f32.mrb[0].mxu0
  %v1922 = vpop.f32.mrb[0].mxu0
  %v1923 = vadd.f32 %v1634, %v1922
  %v1924 = vpop.f32.mrb[0].mxu0
  %1925 = vmatprep.mubr.bf16.mxu0 %v1331
  %1926 = vmatmul.mubr.bf16.gmra.mrb[0].mxu0 %v1330
  %v1927 = vpop.f32.mrb[0].mxu0
  %v1928 = vadd.f32 %v1639, %v1927
  %v1929 = vpop.f32.mrb[0].mxu0
  %v1930 = vpop.f32.mrb[0].mxu0
  %v1931 = vadd.f32 %v1642, %v1930
  %v1932 = vpop.f32.mrb[0].mxu0
  %1933 = vmatprep.mubr.bf16.mxu0 %v1335
  %1934 = vmatmul.mubr.bf16.gmra.mrb[0].mxu0 %v1334
  %v1935 = vpop.f32.mrb[0].mxu0
  %v1936 = vadd.f32 %v1647, %v1935
  %v1937 = vpop.f32.mrb[0].mxu0
  %v1938 = vpop.f32.mrb[0].mxu0
  %v1939 = vadd.f32 %v1650, %v1938
  %v1940 = vpop.f32.mrb[0].mxu0
  %1941 = vmatprep.mubr.bf16.mxu0 %v1339
  %1942 = vmatmul.mubr.bf16.gmra.mrb[0].mxu0 %v1338
  %v1943 = vpop.f32.mrb[0].mxu0
  %v1944 = vadd.f32 %v1655, %v1943
  %v1945 = vpop.f32.mrb[0].mxu0
  %v1946 = vpop.f32.mrb[0].mxu0
  %v1947 = vadd.f32 %v1658, %v1946
  %v1948 = vpop.f32.mrb[0].mxu0
  %1949 = vmatprep.mubr.bf16.mxu0 %v1343
  %1950 = vmatmul.mubr.bf16.gmra.mrb[0].mxu0 %v1342
  %v1951 = vpop.f32.mrb[0].mxu0
  %v1952 = vadd.f32 %v1663, %v1951
  %v1953 = vpop.f32.mrb[0].mxu0
  %v1954 = vpop.f32.mrb[0].mxu0
  %v1955 = vadd.f32 %v1666, %v1954
  %v1956 = vpop.f32.mrb[0].mxu0
  %1957 = vmatprep.mubr.bf16.mxu0 %v1347
  %1958 = vmatmul.mubr.bf16.gmra.mrb[0].mxu0 %v1346
  %v1959 = vpop.f32.mrb[0].mxu0
  %v1960 = vadd.f32 %v1671, %v1959
  %v1961 = vpop.f32.mrb[0].mxu0
  %v1962 = vpop.f32.mrb[0].mxu0
  %v1963 = vadd.f32 %v1674, %v1962
  %v1964 = vpop.f32.mrb[0].mxu0
  %1965 = vmatprep.mubr.bf16.mxu0 %v1351
  %1966 = vmatmul.mubr.bf16.gmra.mrb[0].mxu0 %v1350
  %v1967 = vpop.f32.mrb[0].mxu0
  %v1968 = vadd.f32 %v1679, %v1967
  %v1969 = vpop.f32.mrb[0].mxu0
  %v1970 = vpop.f32.mrb[0].mxu0
  %v1971 = vadd.f32 %v1682, %v1970
  %v1972 = vpop.f32.mrb[0].mxu0
  %1973 = vmatprep.mubr.bf16.mxu0 %v1355
  %1974 = vmatmul.mubr.bf16.gmra.mrb[0].mxu0 %v1354
  %v1975 = vpop.f32.mrb[0].mxu0
  %v1976 = vadd.f32 %v1687, %v1975
  %v1977 = vpop.f32.mrb[0].mxu0
  %v1978 = vpop.f32.mrb[0].mxu0
  %v1979 = vadd.f32 %v1690, %v1978
  %v1980 = vpop.f32.mrb[0].mxu0
  %1981 = vmatprep.mubr.bf16.mxu0 %v1359
  %1982 = vmatmul.mubr.bf16.gmra.mrb[0].mxu0 %v1358
  %v1983 = vpop.f32.mrb[0].mxu0
  %v1984 = vadd.f32 %v1695, %v1983
  %v1985 = vpop.f32.mrb[0].mxu0
  %v1986 = vpop.f32.mrb[0].mxu0
  %v1987 = vadd.f32 %v1698, %v1986
  %v1988 = vpop.f32.mrb[0].mxu0
  %1989 = vmatprep.mubr.bf16.mxu0 %v1363
  %1990 = vmatmul.mubr.bf16.gmra.mrb[0].mxu0 %v1362
  %v1991 = vpop.f32.mrb[0].mxu0
  %v1992 = vadd.f32 %v1703, %v1991
  %v1993 = vpop.f32.mrb[0].mxu0
  %v1994 = vpop.f32.mrb[0].mxu0
  %v1995 = vadd.f32 %v1706, %v1994
  %v1996 = vpop.f32.mrb[0].mxu0
  %1997 = vmatprep.mubr.bf16.mxu0 %v1367
  %1998 = vmatmul.mubr.bf16.gmra.mrb[0].mxu0 %v1366
  %v1999 = vpop.f32.mrb[0].mxu0
  %v2000 = vadd.f32 %v1711, %v1999
  %v2001 = vpop.f32.mrb[0].mxu0
  %v2002 = vpop.f32.mrb[0].mxu0
  %v2003 = vadd.f32 %v1714, %v2002
  %v2004 = vpop.f32.mrb[0].mxu0
  %2005 = vmatprep.mubr.bf16.mxu0 %v1371
  %2006 = vmatmul.mubr.bf16.gmra.mrb[0].mxu0 %v1370
  %v2007 = vpop.f32.mrb[0].mxu0
  %v2008 = vadd.f32 %v1719, %v2007
  %v2009 = vpop.f32.mrb[0].mxu0
  %v2010 = vpop.f32.mrb[0].mxu0
  %v2011 = vadd.f32 %v1722, %v2010
  %v2012 = vpop.f32.mrb[0].mxu0
  %2013 = vmatprep.mubr.bf16.mxu0 %v1375
  %2014 = vmatmul.mubr.bf16.gmra.mrb[0].mxu0 %v1374
  %v2015 = vpop.f32.mrb[0].mxu0
  %v2016 = vadd.f32 %v1727, %v2015
  %v2017 = vpop.f32.mrb[0].mxu0
  %v2018 = vpop.f32.mrb[0].mxu0
  %v2019 = vadd.f32 %v1730, %v2018
  %v2020 = vpop.f32.mrb[0].mxu0
  %2021 = vmatprep.mubr.bf16.mxu0 %v1379
  %2022 = vmatmul.mubr.bf16.gmra.mrb[0].mxu0 %v1378
  %v2023 = vpop.f32.mrb[0].mxu0
  %v2024 = vadd.f32 %v1735, %v2023
  %v2025 = vpop.f32.mrb[0].mxu0
  %v2026 = vpop.f32.mrb[0].mxu0
  %v2027 = vadd.f32 %v1738, %v2026
  %v2028 = vpop.f32.mrb[0].mxu0
  %2029 = vmatprep.mubr.bf16.mxu0 %v1383
  %2030 = vmatmul.mubr.bf16.gmra.mrb[0].mxu0 %v1382
  %v2031 = vpop.f32.mrb[0].mxu0
  %v2032 = vadd.f32 %v1743, %v2031
  %v2033 = vpop.f32.mrb[0].mxu0
  %v2034 = vpop.f32.mrb[0].mxu0
  %v2035 = vadd.f32 %v1746, %v2034
  %v2036 = vpop.f32.mrb[0].mxu0
  %2037 = vmatprep.mubr.bf16.mxu0 %v1387
  %2038 = vmatmul.mubr.bf16.gmra.mrb[0].mxu0 %v1386
  %v2039 = vpop.f32.mrb[0].mxu0
  %v2040 = vadd.f32 %v1751, %v2039
  %v2041 = vpop.f32.mrb[0].mxu0
  %v2042 = vpop.f32.mrb[0].mxu0
  %v2043 = vadd.f32 %v1754, %v2042
  %v2044 = vpop.f32.mrb[0].mxu0
  %2045 = vmatprep.mubr.bf16.mxu0 %v1391
  %2046 = vmatmul.mubr.bf16.gmra.mrb[0].mxu0 %v1390
  %v2047 = vpop.f32.mrb[0].mxu0
  %v2048 = vadd.f32 %v1759, %v2047
  %v2049 = vpop.f32.mrb[0].mxu0
  %v2050 = vpop.f32.mrb[0].mxu0
  %v2051 = vadd.f32 %v1762, %v2050
  %v2052 = vpop.f32.mrb[0].mxu0
  %2053 = vmatprep.mubr.bf16.mxu0 %v1395
  %2054 = vmatmul.mubr.bf16.gmra.mrb[0].mxu0 %v1394
  %v2055 = vpop.f32.mrb[0].mxu0
  %v2056 = vadd.f32 %v1767, %v2055
  %v2057 = vpop.f32.mrb[0].mxu0
  %v2058 = vpop.f32.mrb[0].mxu0
  %v2059 = vadd.f32 %v1770, %v2058
  %v2060 = vpop.f32.mrb[0].mxu0
  %2061 = vmatprep.mubr.bf16.mxu0 %v1399
  %2062 = vmatmul.mubr.bf16.gmra.mrb[0].mxu0 %v1398
  %v2063 = vpop.f32.mrb[0].mxu0
  %v2064 = vadd.f32 %v1775, %v2063
  %v2065 = vpop.f32.mrb[0].mxu0
  %v2066 = vpop.f32.mrb[0].mxu0
  %v2067 = vadd.f32 %v1778, %v2066
  %v2068 = vpop.f32.mrb[0].mxu0
  %2069 = vmatprep.mubr.bf16.mxu0 %v1403
  %2070 = vmatmul.mubr.bf16.gmra.mrb[0].mxu0 %v1402
  %v2071 = vpop.f32.mrb[0].mxu0
  %v2072 = vadd.f32 %v1783, %v2071
  %v2073 = vpop.f32.mrb[0].mxu0
  %v2074 = vpop.f32.mrb[0].mxu0
  %v2075 = vadd.f32 %v1786, %v2074
  %v2076 = vpop.f32.mrb[0].mxu0
  %2077 = vmatprep.mubr.bf16.mxu0 %v1407
  %2078 = vmatmul.mubr.bf16.gmra.mrb[0].mxu0 %v1406
  %v2079 = vpop.f32.mrb[0].mxu0
  %v2080 = vadd.f32 %v1791, %v2079
  %v2081 = vpop.f32.mrb[0].mxu0
  %v2082 = vpop.f32.mrb[0].mxu0
  %v2083 = vadd.f32 %v1794, %v2082
  %v2084 = vpop.f32.mrb[0].mxu0
  %2085 = vmatprep.mubr.bf16.mxu0 %v1411
  %2086 = vmatmul.mubr.bf16.gmra.mrb[0].mxu0 %v1410
  %v2087 = vpop.f32.mrb[0].mxu0
  %v2088 = vadd.f32 %v1799, %v2087
  %v2089 = vpop.f32.mrb[0].mxu0
  %v2090 = vpop.f32.mrb[0].mxu0
  %v2091 = vadd.f32 %v1802, %v2090
  %v2092 = vpop.f32.mrb[0].mxu0
  %2093 = vmatprep.mubr.bf16.mxu0 %v1415
  %2094 = vmatmul.mubr.bf16.gmra.mrb[0].mxu0 %v1414
  %v2095 = vpop.f32.mrb[0].mxu0
  %v2096 = vadd.f32 %v1807, %v2095
  %v2097 = vpop.f32.mrb[0].mxu0
  %v2098 = vpop.f32.mrb[0].mxu0
  %v2099 = vadd.f32 %v1810, %v2098
  %v2100 = vpop.f32.mrb[0].mxu0
  %2101 = vmatprep.mubr.bf16.mxu0 %v1419
  %2102 = vmatmul.mubr.bf16.gmra.mrb[0].mxu0 %v1418
  %v2103 = vpop.f32.mrb[0].mxu0
  %v2104 = vadd.f32 %v1815, %v2103
  %v2105 = vpop.f32.mrb[0].mxu0
  %v2106 = vpop.f32.mrb[0].mxu0
  %v2107 = vadd.f32 %v1818, %v2106
  %v2108 = vpop.f32.mrb[0].mxu0
  %2109 = vmatprep.mubr.bf16.mxu0 %v1423
  %2110 = vmatmul.mubr.bf16.gmra.mrb[0].mxu0 %v1422
  %v2111 = vpop.f32.mrb[0].mxu0
  %v2112 = vadd.f32 %v1823, %v2111
  %v2113 = vpop.f32.mrb[0].mxu0
  %v2114 = vpop.f32.mrb[0].mxu0
  %v2115 = vadd.f32 %v1826, %v2114
  %v2116 = vpop.f32.mrb[0].mxu0
  %2117 = vmatprep.mubr.bf16.mxu0 %v1427
  %2118 = vmatmul.mubr.bf16.gmra.mrb[0].mxu0 %v1426
  %v2119 = vpop.f32.mrb[0].mxu0
  %v2120 = vadd.f32 %v1831, %v2119
  %v2121 = vpop.f32.mrb[0].mxu0
  %v2122 = vpop.f32.mrb[0].mxu0
  %v2123 = vadd.f32 %v1834, %v2122
  %v2124 = vpop.f32.mrb[0].mxu0
  %2125 = vmatprep.mubr.bf16.mxu0 %v1431
  %2126 = vmatmul.mubr.bf16.gmra.mrb[0].mxu0 %v1430
  %v2127 = vpop.f32.mrb[0].mxu0
  %v2128 = vadd.f32 %v1839, %v2127
  %v2129 = vpop.f32.mrb[0].mxu0
  %v2130 = vpop.f32.mrb[0].mxu0
  %v2131 = vadd.f32 %v1842, %v2130
  %v2132 = vpop.f32.mrb[0].mxu0
  %2133 = vmatprep.mubr.bf16.mxu0 %v1435
  %2134 = vmatmul.mubr.bf16.gmra.mrb[0].mxu0 %v1434
  %v2135 = vpop.f32.mrb[0].mxu0
  %v2136 = vadd.f32 %v1847, %v2135
  %v2137 = vpop.f32.mrb[0].mxu0
  %v2138 = vpop.f32.mrb[0].mxu0
  %v2139 = vadd.f32 %v1850, %v2138
  %v2140 = vpop.f32.mrb[0].mxu0
  %2141 = vdwg.mxu0
  %v2142 = vadd.f32 %v732, %v1888
  %v2143 = vadd.f32 %v733, %v1891
  %v2144 = vadd.f32 %v734, %v1896
  %v2145 = vadd.f32 %v735, %v1899
  %v2146 = vadd.f32 %v736, %v1904
  %v2147 = vadd.f32 %v737, %v1907
  %v2148 = vadd.f32 %v738, %v1912
  %v2149 = vadd.f32 %v739, %v1915
  %v2150 = vadd.f32 %v740, %v1920
  %v2151 = vadd.f32 %v741, %v1923
  %v2152 = vadd.f32 %v742, %v1928
  %v2153 = vadd.f32 %v743, %v1931
  %v2154 = vadd.f32 %v744, %v1936
  %v2155 = vadd.f32 %v745, %v1939
  %v2156 = vadd.f32 %v746, %v1944
  %v2157 = vadd.f32 %v747, %v1947
  %v2158 = vadd.f32 %v748, %v1952
  %v2159 = vadd.f32 %v749, %v1955
  %v2160 = vadd.f32 %v750, %v1960
  %v2161 = vadd.f32 %v751, %v1963
  %v2162 = vadd.f32 %v752, %v1968
  %v2163 = vadd.f32 %v753, %v1971
  %v2164 = vadd.f32 %v754, %v1976
  %v2165 = vadd.f32 %v755, %v1979
  %v2166 = vadd.f32 %v756, %v1984
  %v2167 = vadd.f32 %v757, %v1987
  %v2168 = vadd.f32 %v758, %v1992
  %v2169 = vadd.f32 %v759, %v1995
  %v2170 = vadd.f32 %v760, %v2000
  %v2171 = vadd.f32 %v761, %v2003
  %v2172 = vadd.f32 %v762, %v2008
  %v2173 = vadd.f32 %v763, %v2011
  %v2174 = vadd.f32 %v764, %v2016
  %v2175 = vadd.f32 %v765, %v2019
  %v2176 = vadd.f32 %v766, %v2024
  %v2177 = vadd.f32 %v767, %v2027
  %v2178 = vadd.f32 %v768, %v2032
  %v2179 = vadd.f32 %v769, %v2035
  %v2180 = vadd.f32 %v770, %v2040
  %v2181 = vadd.f32 %v771, %v2043
  %v2182 = vadd.f32 %v772, %v2048
  %v2183 = vadd.f32 %v773, %v2051
  %v2184 = vadd.f32 %v774, %v2056
  %v2185 = vadd.f32 %v775, %v2059
  %v2186 = vadd.f32 %v776, %v2064
  %v2187 = vadd.f32 %v777, %v2067
  %v2188 = vadd.f32 %v778, %v2072
  %v2189 = vadd.f32 %v779, %v2075
  %v2190 = vadd.f32 %v780, %v2080
  %v2191 = vadd.f32 %v781, %v2083
  %v2192 = vadd.f32 %v782, %v2088
  %v2193 = vadd.f32 %v783, %v2091
  %v2194 = vadd.f32 %v784, %v2096
  %v2195 = vadd.f32 %v785, %v2099
  %v2196 = vadd.f32 %v786, %v2104
  %v2197 = vadd.f32 %v787, %v2107
  %v2198 = vadd.f32 %v788, %v2112
  %v2199 = vadd.f32 %v789, %v2115
  %v2200 = vadd.f32 %v790, %v2120
  %v2201 = vadd.f32 %v791, %v2123
  %v2202 = vadd.f32 %v792, %v2128
  %v2203 = vadd.f32 %v793, %v2131
  %v2204 = vadd.f32 %v794, %v2136
  %v2205 = vadd.f32 %v795, %v2139
  %2206 = vst [vmem:[#allocation2] sm:$0xff] %v2142
  %2207 = vst [vmem:[#allocation2 + $0x8] sm:$0xff] %v2143
  %2208 = vst [vmem:[#allocation2 + $0x10] sm:$0xff] %v2144
  %2209 = vst [vmem:[#allocation2 + $0x18] sm:$0xff] %v2145
  %2210 = vst [vmem:[#allocation2 + $0x20] sm:$0xff] %v2146
  %2211 = vst [vmem:[#allocation2 + $0x28] sm:$0xff] %v2147
  %2212 = vst [vmem:[#allocation2 + $0x30] sm:$0xff] %v2148
  %2213 = vst [vmem:[#allocation2 + $0x38] sm:$0xff] %v2149
  %2214 = vst [vmem:[#allocation2 + $0x40] sm:$0xff] %v2150
  %2215 = vst [vmem:[#allocation2 + $0x48] sm:$0xff] %v2151
  %2216 = vst [vmem:[#allocation2 + $0x50] sm:$0xff] %v2152
  %2217 = vst [vmem:[#allocation2 + $0x58] sm:$0xff] %v2153
  %2218 = vst [vmem:[#allocation2 + $0x60] sm:$0xff] %v2154
  %2219 = vst [vmem:[#allocation2 + $0x68] sm:$0xff] %v2155
  %2220 = vst [vmem:[#allocation2 + $0x70] sm:$0xff] %v2156
  %2221 = vst [vmem:[#allocation2 + $0x78] sm:$0xff] %v2157
  %2222 = vst [vmem:[#allocation2 + $0x80] sm:$0xff] %v2158
  %2223 = vst [vmem:[#allocation2 + $0x88] sm:$0xff] %v2159
  %2224 = vst [vmem:[#allocation2 + $0x90] sm:$0xff] %v2160
  %2225 = vst [vmem:[#allocation2 + $0x98] sm:$0xff] %v2161
  %2226 = vst [vmem:[#allocation2 + $0xa0] sm:$0xff] %v2162
  %2227 = vst [vmem:[#allocation2 + $0xa8] sm:$0xff] %v2163
  %2228 = vst [vmem:[#allocation2 + $0xb0] sm:$0xff] %v2164
  %2229 = vst [vmem:[#allocation2 + $0xb8] sm:$0xff] %v2165
  %2230 = vst [vmem:[#allocation2 + $0xc0] sm:$0xff] %v2166
  %2231 = vst [vmem:[#allocation2 + $0xc8] sm:$0xff] %v2167
  %2232 = vst [vmem:[#allocation2 + $0xd0] sm:$0xff] %v2168
  %2233 = vst [vmem:[#allocation2 + $0xd8] sm:$0xff] %v2169
  %2234 = vst [vmem:[#allocation2 + $0xe0] sm:$0xff] %v2170
  %2235 = vst [vmem:[#allocation2 + $0xe8] sm:$0xff] %v2171
  %2236 = vst [vmem:[#allocation2 + $0xf0] sm:$0xff] %v2172
  %2237 = vst [vmem:[#allocation2 + $0xf8] sm:$0xff] %v2173
  %2238 = vst [vmem:[#allocation2 + $0x100] sm:$0xff] %v2174
  %2239 = vst [vmem:[#allocation2 + $0x108] sm:$0xff] %v2175
  %2240 = vst [vmem:[#allocation2 + $0x110] sm:$0xff] %v2176
  %2241 = vst [vmem:[#allocation2 + $0x118] sm:$0xff] %v2177
  %2242 = vst [vmem:[#allocation2 + $0x120] sm:$0xff] %v2178
  %2243 = vst [vmem:[#allocation2 + $0x128] sm:$0xff] %v2179
  %2244 = vst [vmem:[#allocation2 + $0x130] sm:$0xff] %v2180
  %2245 = vst [vmem:[#allocation2 + $0x138] sm:$0xff] %v2181
  %2246 = vst [vmem:[#allocation2 + $0x140] sm:$0xff] %v2182
  %2247 = vst [vmem:[#allocation2 + $0x148] sm:$0xff] %v2183
  %2248 = vst [vmem:[#allocation2 + $0x150] sm:$0xff] %v2184
  %2249 = vst [vmem:[#allocation2 + $0x158] sm:$0xff] %v2185
  %2250 = vst [vmem:[#allocation2 + $0x160] sm:$0xff] %v2186
  %2251 = vst [vmem:[#allocation2 + $0x168] sm:$0xff] %v2187
  %2252 = vst [vmem:[#allocation2 + $0x170] sm:$0xff] %v2188
  %2253 = vst [vmem:[#allocation2 + $0x178] sm:$0xff] %v2189
  %2254 = vst [vmem:[#allocation2 + $0x180] sm:$0xff] %v2190
  %2255 = vst [vmem:[#allocation2 + $0x188] sm:$0xff] %v2191
  %2256 = vst [vmem:[#allocation2 + $0x190] sm:$0xff] %v2192
  %2257 = vst [vmem:[#allocation2 + $0x198] sm:$0xff] %v2193
  %2258 = vst [vmem:[#allocation2 + $0x1a0] sm:$0xff] %v2194
  %2259 = vst [vmem:[#allocation2 + $0x1a8] sm:$0xff] %v2195
  %2260 = vst [vmem:[#allocation2 + $0x1b0] sm:$0xff] %v2196
  %2261 = vst [vmem:[#allocation2 + $0x1b8] sm:$0xff] %v2197
  %2262 = vst [vmem:[#allocation2 + $0x1c0] sm:$0xff] %v2198
  %2263 = vst [vmem:[#allocation2 + $0x1c8] sm:$0xff] %v2199
  %2264 = vst [vmem:[#allocation2 + $0x1d0] sm:$0xff] %v2200
  %2265 = vst [vmem:[#allocation2 + $0x1d8] sm:$0xff] %v2201
  %2266 = vst [vmem:[#allocation2 + $0x1e0] sm:$0xff] %v2202
  %2267 = vst [vmem:[#allocation2 + $0x1e8] sm:$0xff] %v2203
  %2268 = vst [vmem:[#allocation2 + $0x1f0] sm:$0xff] %v2204
  %2269 = vst [vmem:[#allocation2 + $0x1f8] sm:$0xff] %v2205
  // Predicated region
  $region22: #{gcn_forward.3} parent=0 // pred_check
    %p2270 = pneg %p18
  $region23: #{gcn_forward.3} parent=0 // pred_check_branch
    %2272 = sbr.rel (%p2270) target = $region25
  $region24: #{gcn_forward.3} parent=0 // pred_region
    %v2273 = vld [vmem:[#allocation2] sm:$0xff]
    %v2274 = vld [vmem:[#allocation2 + $0x8] sm:$0xff]
    %v2275 = vld [vmem:[#allocation2 + $0x10] sm:$0xff]
    %v2276 = vld [vmem:[#allocation2 + $0x18] sm:$0xff]
    %v2277 = vld [vmem:[#allocation2 + $0x20] sm:$0xff]
    %v2278 = vld [vmem:[#allocation2 + $0x28] sm:$0xff]
    %v2279 = vld [vmem:[#allocation2 + $0x30] sm:$0xff]
    %v2280 = vld [vmem:[#allocation2 + $0x38] sm:$0xff]
    %v2281 = vld [vmem:[#allocation2 + $0x40] sm:$0xff]
    %v2282 = vld [vmem:[#allocation2 + $0x48] sm:$0xff]
    %v2283 = vld [vmem:[#allocation2 + $0x50] sm:$0xff]
    %v2284 = vld [vmem:[#allocation2 + $0x58] sm:$0xff]
    %v2285 = vld [vmem:[#allocation2 + $0x60] sm:$0xff]
    %v2286 = vld [vmem:[#allocation2 + $0x68] sm:$0xff]
    %v2287 = vld [vmem:[#allocation2 + $0x70] sm:$0xff]
    %v2288 = vld [vmem:[#allocation2 + $0x78] sm:$0xff]
    %v2289 = vld [vmem:[#allocation2 + $0x80] sm:$0xff]
    %v2290 = vld [vmem:[#allocation2 + $0x88] sm:$0xff]
    %v2291 = vld [vmem:[#allocation2 + $0x90] sm:$0xff]
    %v2292 = vld [vmem:[#allocation2 + $0x98] sm:$0xff]
    %v2293 = vld [vmem:[#allocation2 + $0xa0] sm:$0xff]
    %v2294 = vld [vmem:[#allocation2 + $0xa8] sm:$0xff]
    %v2295 = vld [vmem:[#allocation2 + $0xb0] sm:$0xff]
    %v2296 = vld [vmem:[#allocation2 + $0xb8] sm:$0xff]
    %v2297 = vld [vmem:[#allocation2 + $0xc0] sm:$0xff]
    %v2298 = vld [vmem:[#allocation2 + $0xc8] sm:$0xff]
    %v2299 = vld [vmem:[#allocation2 + $0xd0] sm:$0xff]
    %v2300 = vld [vmem:[#allocation2 + $0xd8] sm:$0xff]
    %v2301 = vld [vmem:[#allocation2 + $0xe0] sm:$0xff]
    %v2302 = vld [vmem:[#allocation2 + $0xe8] sm:$0xff]
    %v2303 = vld [vmem:[#allocation2 + $0xf0] sm:$0xff]
    %v2304 = vld [vmem:[#allocation2 + $0xf8] sm:$0xff]
    %v2305 = vld [vmem:[#allocation2 + $0x100] sm:$0xff]
    %v2306 = vld [vmem:[#allocation2 + $0x108] sm:$0xff]
    %v2307 = vld [vmem:[#allocation2 + $0x110] sm:$0xff]
    %v2308 = vld [vmem:[#allocation2 + $0x118] sm:$0xff]
    %v2309 = vld [vmem:[#allocation2 + $0x120] sm:$0xff]
    %v2310 = vld [vmem:[#allocation2 + $0x128] sm:$0xff]
    %v2311 = vld [vmem:[#allocation2 + $0x130] sm:$0xff]
    %v2312 = vld [vmem:[#allocation2 + $0x138] sm:$0xff]
    %v2313 = vld [vmem:[#allocation2 + $0x140] sm:$0xff]
    %v2314 = vld [vmem:[#allocation2 + $0x148] sm:$0xff]
    %v2315 = vld [vmem:[#allocation2 + $0x150] sm:$0xff]
    %v2316 = vld [vmem:[#allocation2 + $0x158] sm:$0xff]
    %v2317 = vld [vmem:[#allocation2 + $0x160] sm:$0xff]
    %v2318 = vld [vmem:[#allocation2 + $0x168] sm:$0xff]
    %v2319 = vld [vmem:[#allocation2 + $0x170] sm:$0xff]
    %v2320 = vld [vmem:[#allocation2 + $0x178] sm:$0xff]
    %v2321 = vld [vmem:[#allocation2 + $0x180] sm:$0xff]
    %v2322 = vld [vmem:[#allocation2 + $0x188] sm:$0xff]
    %v2323 = vld [vmem:[#allocation2 + $0x190] sm:$0xff]
    %v2324 = vld [vmem:[#allocation2 + $0x198] sm:$0xff]
    %v2325 = vld [vmem:[#allocation2 + $0x1a0] sm:$0xff]
    %v2326 = vld [vmem:[#allocation2 + $0x1a8] sm:$0xff]
    %v2327 = vld [vmem:[#allocation2 + $0x1b0] sm:$0xff]
    %v2328 = vld [vmem:[#allocation2 + $0x1b8] sm:$0xff]
    %v2329 = vld [vmem:[#allocation2 + $0x1c0] sm:$0xff]
    %v2330 = vld [vmem:[#allocation2 + $0x1c8] sm:$0xff]
    %v2331 = vld [vmem:[#allocation2 + $0x1d0] sm:$0xff]
    %v2332 = vld [vmem:[#allocation2 + $0x1d8] sm:$0xff]
    %v2333 = vld [vmem:[#allocation2 + $0x1e0] sm:$0xff]
    %v2334 = vld [vmem:[#allocation2 + $0x1e8] sm:$0xff]
    %v2335 = vld [vmem:[#allocation2 + $0x1f0] sm:$0xff]
    %v2336 = vld [vmem:[#allocation2 + $0x1f8] sm:$0xff]
    %v2337 = vld [vmem:[%s3] sm:$0x1]
    %v2339 = vlaneseq
    %v2340 = vshrl.u32 %v2339, 7
    %v2341 = vsub.s32 0, %v2340
    %v2342 = vrot.slane %v2337, %v2341
    %v2344 = vadd.f32 %v2273, %v2342
    %v2345 = vadd.f32 %v2274, %v2342
    %v2346 = vadd.f32 %v2275, %v2342
    %v2347 = vadd.f32 %v2276, %v2342
    %v2348 = vadd.f32 %v2277, %v2342
    %v2349 = vadd.f32 %v2278, %v2342
    %v2350 = vadd.f32 %v2279, %v2342
    %v2351 = vadd.f32 %v2280, %v2342
    %v2352 = vadd.f32 %v2281, %v2342
    %v2353 = vadd.f32 %v2282, %v2342
    %v2354 = vadd.f32 %v2283, %v2342
    %v2355 = vadd.f32 %v2284, %v2342
    %v2356 = vadd.f32 %v2285, %v2342
    %v2357 = vadd.f32 %v2286, %v2342
    %v2358 = vadd.f32 %v2287, %v2342
    %v2359 = vadd.f32 %v2288, %v2342
    %v2360 = vadd.f32 %v2289, %v2342
    %v2361 = vadd.f32 %v2290, %v2342
    %v2362 = vadd.f32 %v2291, %v2342
    %v2363 = vadd.f32 %v2292, %v2342
    %v2364 = vadd.f32 %v2293, %v2342
    %v2365 = vadd.f32 %v2294, %v2342
    %v2366 = vadd.f32 %v2295, %v2342
    %v2367 = vadd.f32 %v2296, %v2342
    %v2368 = vadd.f32 %v2297, %v2342
    %v2369 = vadd.f32 %v2298, %v2342
    %v2370 = vadd.f32 %v2299, %v2342
    %v2371 = vadd.f32 %v2300, %v2342
    %v2372 = vadd.f32 %v2301, %v2342
    %v2373 = vadd.f32 %v2302, %v2342
    %v2374 = vadd.f32 %v2303, %v2342
    %v2375 = vadd.f32 %v2304, %v2342
    %v2376 = vadd.f32 %v2305, %v2342
    %v2377 = vadd.f32 %v2306, %v2342
    %v2378 = vadd.f32 %v2307, %v2342
    %v2379 = vadd.f32 %v2308, %v2342
    %v2380 = vadd.f32 %v2309, %v2342
    %v2381 = vadd.f32 %v2310, %v2342
    %v2382 = vadd.f32 %v2311, %v2342
    %v2383 = vadd.f32 %v2312, %v2342
    %v2384 = vadd.f32 %v2313, %v2342
    %v2385 = vadd.f32 %v2314, %v2342
    %v2386 = vadd.f32 %v2315, %v2342
    %v2387 = vadd.f32 %v2316, %v2342
    %v2388 = vadd.f32 %v2317, %v2342
    %v2389 = vadd.f32 %v2318, %v2342
    %v2390 = vadd.f32 %v2319, %v2342
    %v2391 = vadd.f32 %v2320, %v2342
    %v2392 = vadd.f32 %v2321, %v2342
    %v2393 = vadd.f32 %v2322, %v2342
    %v2394 = vadd.f32 %v2323, %v2342
    %v2395 = vadd.f32 %v2324, %v2342
    %v2396 = vadd.f32 %v2325, %v2342
    %v2397 = vadd.f32 %v2326, %v2342
    %v2398 = vadd.f32 %v2327, %v2342
    %v2399 = vadd.f32 %v2328, %v2342
    %v2400 = vadd.f32 %v2329, %v2342
    %v2401 = vadd.f32 %v2330, %v2342
    %v2402 = vadd.f32 %v2331, %v2342
    %v2403 = vadd.f32 %v2332, %v2342
    %v2404 = vadd.f32 %v2333, %v2342
    %v2405 = vadd.f32 %v2334, %v2342
    %v2406 = vadd.f32 %v2335, %v2342
    %v2407 = vadd.f32 %v2336, %v2342
    %v2408 = vlaneseq
    %v2409 = vand.u32 %v2408, 127
    %vm2410 = vcmp.lt.s32.totalorder %v2409, 7
    %v2411 = vsel %vm2410, %v2344, -1e+30
    %v2412 = vsel %vm2410, %v2345, -1e+30
    %v2413 = vsel %vm2410, %v2346, -1e+30
    %v2414 = vsel %vm2410, %v2347, -1e+30
    %v2415 = vsel %vm2410, %v2348, -1e+30
    %v2416 = vsel %vm2410, %v2349, -1e+30
    %v2417 = vsel %vm2410, %v2350, -1e+30
    %v2418 = vsel %vm2410, %v2351, -1e+30
    %v2419 = vsel %vm2410, %v2352, -1e+30
    %v2420 = vsel %vm2410, %v2353, -1e+30
    %v2421 = vsel %vm2410, %v2354, -1e+30
    %v2422 = vsel %vm2410, %v2355, -1e+30
    %v2423 = vsel %vm2410, %v2356, -1e+30
    %v2424 = vsel %vm2410, %v2357, -1e+30
    %v2425 = vsel %vm2410, %v2358, -1e+30
    %v2426 = vsel %vm2410, %v2359, -1e+30
    %v2427 = vsel %vm2410, %v2360, -1e+30
    %v2428 = vsel %vm2410, %v2361, -1e+30
    %v2429 = vsel %vm2410, %v2362, -1e+30
    %v2430 = vsel %vm2410, %v2363, -1e+30
    %v2431 = vsel %vm2410, %v2364, -1e+30
    %v2432 = vsel %vm2410, %v2365, -1e+30
    %v2433 = vsel %vm2410, %v2366, -1e+30
    %v2434 = vsel %vm2410, %v2367, -1e+30
    %v2435 = vsel %vm2410, %v2368, -1e+30
    %v2436 = vsel %vm2410, %v2369, -1e+30
    %v2437 = vsel %vm2410, %v2370, -1e+30
    %v2438 = vsel %vm2410, %v2371, -1e+30
    %v2439 = vsel %vm2410, %v2372, -1e+30
    %v2440 = vsel %vm2410, %v2373, -1e+30
    %v2441 = vsel %vm2410, %v2374, -1e+30
    %v2442 = vsel %vm2410, %v2375, -1e+30
    %v2443 = vsel %vm2410, %v2376, -1e+30
    %v2444 = vsel %vm2410, %v2377, -1e+30
    %v2445 = vsel %vm2410, %v2378, -1e+30
    %v2446 = vsel %vm2410, %v2379, -1e+30
    %v2447 = vsel %vm2410, %v2380, -1e+30
    %v2448 = vsel %vm2410, %v2381, -1e+30
    %v2449 = vsel %vm2410, %v2382, -1e+30
    %v2450 = vsel %vm2410, %v2383, -1e+30
    %v2451 = vsel %vm2410, %v2384, -1e+30
    %v2452 = vsel %vm2410, %v2385, -1e+30
    %v2453 = vsel %vm2410, %v2386, -1e+30
    %v2454 = vsel %vm2410, %v2387, -1e+30
    %v2455 = vsel %vm2410, %v2388, -1e+30
    %v2456 = vsel %vm2410, %v2389, -1e+30
    %v2457 = vsel %vm2410, %v2390, -1e+30
    %v2458 = vsel %vm2410, %v2391, -1e+30
    %v2459 = vsel %vm2410, %v2392, -1e+30
    %v2460 = vsel %vm2410, %v2393, -1e+30
    %v2461 = vsel %vm2410, %v2394, -1e+30
    %v2462 = vsel %vm2410, %v2395, -1e+30
    %v2463 = vsel %vm2410, %v2396, -1e+30
    %v2464 = vsel %vm2410, %v2397, -1e+30
    %v2465 = vsel %vm2410, %v2398, -1e+30
    %v2466 = vsel %vm2410, %v2399, -1e+30
    %v2467 = vsel %vm2410, %v2400, -1e+30
    %v2468 = vsel %vm2410, %v2401, -1e+30
    %v2469 = vsel %vm2410, %v2402, -1e+30
    %v2470 = vsel %vm2410, %v2403, -1e+30
    %v2471 = vsel %vm2410, %v2404, -1e+30
    %v2472 = vsel %vm2410, %v2405, -1e+30
    %v2473 = vsel %vm2410, %v2406, -1e+30
    %v2474 = vsel %vm2410, %v2407, -1e+30
    %2475 = vmax.xlane.f32.xlu0 %v2411
    %v2476 = vpop.xlane.xlu0 %2475
    %2477 = vmax.xlane.f32.xlu0 %v2412
    %v2478 = vpop.xlane.xlu0 %2477
    %2479 = vmax.xlane.f32.xlu0 %v2413
    %v2480 = vpop.xlane.xlu0 %2479
    %2481 = vmax.xlane.f32.xlu0 %v2414
    %v2482 = vpop.xlane.xlu0 %2481
    %2483 = vmax.xlane.f32.xlu0 %v2415
    %v2484 = vpop.xlane.xlu0 %2483
    %2485 = vmax.xlane.f32.xlu0 %v2416
    %v2486 = vpop.xlane.xlu0 %2485
    %2487 = vmax.xlane.f32.xlu0 %v2417
    %v2488 = vpop.xlane.xlu0 %2487
    %2489 = vmax.xlane.f32.xlu0 %v2418
    %v2490 = vpop.xlane.xlu0 %2489
    %2491 = vmax.xlane.f32.xlu0 %v2419
    %v2492 = vpop.xlane.xlu0 %2491
    %2493 = vmax.xlane.f32.xlu0 %v2420
    %v2494 = vpop.xlane.xlu0 %2493
    %2495 = vmax.xlane.f32.xlu0 %v2421
    %v2496 = vpop.xlane.xlu0 %2495
    %2497 = vmax.xlane.f32.xlu0 %v2422
    %v2498 = vpop.xlane.xlu0 %2497
    %2499 = vmax.xlane.f32.xlu0 %v2423
    %v2500 = vpop.xlane.xlu0 %2499
    %2501 = vmax.xlane.f32.xlu0 %v2424
    %v2502 = vpop.xlane.xlu0 %2501
    %2503 = vmax.xlane.f32.xlu0 %v2425
    %v2504 = vpop.xlane.xlu0 %2503
    %2505 = vmax.xlane.f32.xlu0 %v2426
    %v2506 = vpop.xlane.xlu0 %2505
    %2507 = vmax.xlane.f32.xlu0 %v2427
    %v2508 = vpop.xlane.xlu0 %2507
    %2509 = vmax.xlane.f32.xlu0 %v2428
    %v2510 = vpop.xlane.xlu0 %2509
    %2511 = vmax.xlane.f32.xlu0 %v2429
    %v2512 = vpop.xlane.xlu0 %2511
    %2513 = vmax.xlane.f32.xlu0 %v2430
    %v2514 = vpop.xlane.xlu0 %2513
    %2515 = vmax.xlane.f32.xlu0 %v2431
    %v2516 = vpop.xlane.xlu0 %2515
    %2517 = vmax.xlane.f32.xlu0 %v2432
    %v2518 = vpop.xlane.xlu0 %2517
    %2519 = vmax.xlane.f32.xlu0 %v2433
    %v2520 = vpop.xlane.xlu0 %2519
    %2521 = vmax.xlane.f32.xlu0 %v2434
    %v2522 = vpop.xlane.xlu0 %2521
    %2523 = vmax.xlane.f32.xlu0 %v2435
    %v2524 = vpop.xlane.xlu0 %2523
    %2525 = vmax.xlane.f32.xlu0 %v2436
    %v2526 = vpop.xlane.xlu0 %2525
    %2527 = vmax.xlane.f32.xlu0 %v2437
    %v2528 = vpop.xlane.xlu0 %2527
    %2529 = vmax.xlane.f32.xlu0 %v2438
    %v2530 = vpop.xlane.xlu0 %2529
    %2531 = vmax.xlane.f32.xlu0 %v2439
    %v2532 = vpop.xlane.xlu0 %2531
    %2533 = vmax.xlane.f32.xlu0 %v2440
    %v2534 = vpop.xlane.xlu0 %2533
    %2535 = vmax.xlane.f32.xlu0 %v2441
    %v2536 = vpop.xlane.xlu0 %2535
    %2537 = vmax.xlane.f32.xlu0 %v2442
    %v2538 = vpop.xlane.xlu0 %2537
    %2539 = vmax.xlane.f32.xlu0 %v2443
    %v2540 = vpop.xlane.xlu0 %2539
    %2541 = vmax.xlane.f32.xlu0 %v2444
    %v2542 = vpop.xlane.xlu0 %2541
    %2543 = vmax.xlane.f32.xlu0 %v2445
    %v2544 = vpop.xlane.xlu0 %2543
    %2545 = vmax.xlane.f32.xlu0 %v2446
    %v2546 = vpop.xlane.xlu0 %2545
    %2547 = vmax.xlane.f32.xlu0 %v2447
    %v2548 = vpop.xlane.xlu0 %2547
    %2549 = vmax.xlane.f32.xlu0 %v2448
    %v2550 = vpop.xlane.xlu0 %2549
    %2551 = vmax.xlane.f32.xlu0 %v2449
    %v2552 = vpop.xlane.xlu0 %2551
    %2553 = vmax.xlane.f32.xlu0 %v2450
    %v2554 = vpop.xlane.xlu0 %2553
    %2555 = vmax.xlane.f32.xlu0 %v2451
    %v2556 = vpop.xlane.xlu0 %2555
    %2557 = vmax.xlane.f32.xlu0 %v2452
    %v2558 = vpop.xlane.xlu0 %2557
    %2559 = vmax.xlane.f32.xlu0 %v2453
    %v2560 = vpop.xlane.xlu0 %2559
    %2561 = vmax.xlane.f32.xlu0 %v2454
    %v2562 = vpop.xlane.xlu0 %2561
    %2563 = vmax.xlane.f32.xlu0 %v2455
    %v2564 = vpop.xlane.xlu0 %2563
    %2565 = vmax.xlane.f32.xlu0 %v2456
    %v2566 = vpop.xlane.xlu0 %2565
    %2567 = vmax.xlane.f32.xlu0 %v2457
    %v2568 = vpop.xlane.xlu0 %2567
    %2569 = vmax.xlane.f32.xlu0 %v2458
    %v2570 = vpop.xlane.xlu0 %2569
    %2571 = vmax.xlane.f32.xlu0 %v2459
    %v2572 = vpop.xlane.xlu0 %2571
    %2573 = vmax.xlane.f32.xlu0 %v2460
    %v2574 = vpop.xlane.xlu0 %2573
    %2575 = vmax.xlane.f32.xlu0 %v2461
    %v2576 = vpop.xlane.xlu0 %2575
    %2577 = vmax.xlane.f32.xlu0 %v2462
    %v2578 = vpop.xlane.xlu0 %2577
    %2579 = vmax.xlane.f32.xlu0 %v2463
    %v2580 = vpop.xlane.xlu0 %2579
    %2581 = vmax.xlane.f32.xlu0 %v2464
    %v2582 = vpop.xlane.xlu0 %2581
    %2583 = vmax.xlane.f32.xlu0 %v2465
    %v2584 = vpop.xlane.xlu0 %2583
    %2585 = vmax.xlane.f32.xlu0 %v2466
    %v2586 = vpop.xlane.xlu0 %2585
    %2587 = vmax.xlane.f32.xlu0 %v2467
    %v2588 = vpop.xlane.xlu0 %2587
    %2589 = vmax.xlane.f32.xlu0 %v2468
    %v2590 = vpop.xlane.xlu0 %2589
    %2591 = vmax.xlane.f32.xlu0 %v2469
    %v2592 = vpop.xlane.xlu0 %2591
    %2593 = vmax.xlane.f32.xlu0 %v2470
    %v2594 = vpop.xlane.xlu0 %2593
    %2595 = vmax.xlane.f32.xlu0 %v2471
    %v2596 = vpop.xlane.xlu0 %2595
    %2597 = vmax.xlane.f32.xlu0 %v2472
    %v2598 = vpop.xlane.xlu0 %2597
    %2599 = vmax.xlane.f32.xlu0 %v2473
    %v2600 = vpop.xlane.xlu0 %2599
    %2601 = vmax.xlane.f32.xlu0 %v2474
    %v2602 = vpop.xlane.xlu0 %2601
    %v2603 = vsub.f32 %v2411, %v2476
    %v2604 = vsub.f32 %v2412, %v2478
    %v2605 = vsub.f32 %v2413, %v2480
    %v2606 = vsub.f32 %v2414, %v2482
    %v2607 = vsub.f32 %v2415, %v2484
    %v2608 = vsub.f32 %v2416, %v2486
    %v2609 = vsub.f32 %v2417, %v2488
    %v2610 = vsub.f32 %v2418, %v2490
    %v2611 = vsub.f32 %v2419, %v2492
    %v2612 = vsub.f32 %v2420, %v2494
    %v2613 = vsub.f32 %v2421, %v2496
    %v2614 = vsub.f32 %v2422, %v2498
    %v2615 = vsub.f32 %v2423, %v2500
    %v2616 = vsub.f32 %v2424, %v2502
    %v2617 = vsub.f32 %v2425, %v2504
    %v2618 = vsub.f32 %v2426, %v2506
    %v2619 = vsub.f32 %v2427, %v2508
    %v2620 = vsub.f32 %v2428, %v2510
    %v2621 = vsub.f32 %v2429, %v2512
    %v2622 = vsub.f32 %v2430, %v2514
    %v2623 = vsub.f32 %v2431, %v2516
    %v2624 = vsub.f32 %v2432, %v2518
    %v2625 = vsub.f32 %v2433, %v2520
    %v2626 = vsub.f32 %v2434, %v2522
    %v2627 = vsub.f32 %v2435, %v2524
    %v2628 = vsub.f32 %v2436, %v2526
    %v2629 = vsub.f32 %v2437, %v2528
    %v2630 = vsub.f32 %v2438, %v2530
    %v2631 = vsub.f32 %v2439, %v2532
    %v2632 = vsub.f32 %v2440, %v2534
    %v2633 = vsub.f32 %v2441, %v2536
    %v2634 = vsub.f32 %v2442, %v2538
    %v2635 = vsub.f32 %v2443, %v2540
    %v2636 = vsub.f32 %v2444, %v2542
    %v2637 = vsub.f32 %v2445, %v2544
    %v2638 = vsub.f32 %v2446, %v2546
    %v2639 = vsub.f32 %v2447, %v2548
    %v2640 = vsub.f32 %v2448, %v2550
    %v2641 = vsub.f32 %v2449, %v2552
    %v2642 = vsub.f32 %v2450, %v2554
    %v2643 = vsub.f32 %v2451, %v2556
    %v2644 = vsub.f32 %v2452, %v2558
    %v2645 = vsub.f32 %v2453, %v2560
    %v2646 = vsub.f32 %v2454, %v2562
    %v2647 = vsub.f32 %v2455, %v2564
    %v2648 = vsub.f32 %v2456, %v2566
    %v2649 = vsub.f32 %v2457, %v2568
    %v2650 = vsub.f32 %v2458, %v2570
    %v2651 = vsub.f32 %v2459, %v2572
    %v2652 = vsub.f32 %v2460, %v2574
    %v2653 = vsub.f32 %v2461, %v2576
    %v2654 = vsub.f32 %v2462, %v2578
    %v2655 = vsub.f32 %v2463, %v2580
    %v2656 = vsub.f32 %v2464, %v2582
    %v2657 = vsub.f32 %v2465, %v2584
    %v2658 = vsub.f32 %v2466, %v2586
    %v2659 = vsub.f32 %v2467, %v2588
    %v2660 = vsub.f32 %v2468, %v2590
    %v2661 = vsub.f32 %v2469, %v2592
    %v2662 = vsub.f32 %v2470, %v2594
    %v2663 = vsub.f32 %v2471, %v2596
    %v2664 = vsub.f32 %v2472, %v2598
    %v2665 = vsub.f32 %v2473, %v2600
    %v2666 = vsub.f32 %v2474, %v2602
    %v2667 = vmul.f32 %v2603, 1.442695
    %v2668 = vpow.pop %v2667
    %v2669 = vmul.f32 %v2604, 1.442695
    %v2670 = vpow.pop %v2669
    %v2671 = vmul.f32 %v2605, 1.442695
    %v2672 = vpow.pop %v2671
    %v2673 = vmul.f32 %v2606, 1.442695
    %v2674 = vpow.pop %v2673
    %v2675 = vmul.f32 %v2607, 1.442695
    %v2676 = vpow.pop %v2675
    %v2677 = vmul.f32 %v2608, 1.442695
    %v2678 = vpow.pop %v2677
    %v2679 = vmul.f32 %v2609, 1.442695
    %v2680 = vpow.pop %v2679
    %v2681 = vmul.f32 %v2610, 1.442695
    %v2682 = vpow.pop %v2681
    %v2683 = vmul.f32 %v2611, 1.442695
    %v2684 = vpow.pop %v2683
    %v2685 = vmul.f32 %v2612, 1.442695
    %v2686 = vpow.pop %v2685
    %v2687 = vmul.f32 %v2613, 1.442695
    %v2688 = vpow.pop %v2687
    %v2689 = vmul.f32 %v2614, 1.442695
    %v2690 = vpow.pop %v2689
    %v2691 = vmul.f32 %v2615, 1.442695
    %v2692 = vpow.pop %v2691
    %v2693 = vmul.f32 %v2616, 1.442695
    %v2694 = vpow.pop %v2693
    %v2695 = vmul.f32 %v2617, 1.442695
    %v2696 = vpow.pop %v2695
    %v2697 = vmul.f32 %v2618, 1.442695
    %v2698 = vpow.pop %v2697
    %v2699 = vmul.f32 %v2619, 1.442695
    %v2700 = vpow.pop %v2699
    %v2701 = vmul.f32 %v2620, 1.442695
    %v2702 = vpow.pop %v2701
    %v2703 = vmul.f32 %v2621, 1.442695
    %v2704 = vpow.pop %v2703
    %v2705 = vmul.f32 %v2622, 1.442695
    %v2706 = vpow.pop %v2705
    %v2707 = vmul.f32 %v2623, 1.442695
    %v2708 = vpow.pop %v2707
    %v2709 = vmul.f32 %v2624, 1.442695
    %v2710 = vpow.pop %v2709
    %v2711 = vmul.f32 %v2625, 1.442695
    %v2712 = vpow.pop %v2711
    %v2713 = vmul.f32 %v2626, 1.442695
    %v2714 = vpow.pop %v2713
    %v2715 = vmul.f32 %v2627, 1.442695
    %v2716 = vpow.pop %v2715
    %v2717 = vmul.f32 %v2628, 1.442695
    %v2718 = vpow.pop %v2717
    %v2719 = vmul.f32 %v2629, 1.442695
    %v2720 = vpow.pop %v2719
    %v2721 = vmul.f32 %v2630, 1.442695
    %v2722 = vpow.pop %v2721
    %v2723 = vmul.f32 %v2631, 1.442695
    %v2724 = vpow.pop %v2723
    %v2725 = vmul.f32 %v2632, 1.442695
    %v2726 = vpow.pop %v2725
    %v2727 = vmul.f32 %v2633, 1.442695
    %v2728 = vpow.pop %v2727
    %v2729 = vmul.f32 %v2634, 1.442695
    %v2730 = vpow.pop %v2729
    %v2731 = vmul.f32 %v2635, 1.442695
    %v2732 = vpow.pop %v2731
    %v2733 = vmul.f32 %v2636, 1.442695
    %v2734 = vpow.pop %v2733
    %v2735 = vmul.f32 %v2637, 1.442695
    %v2736 = vpow.pop %v2735
    %v2737 = vmul.f32 %v2638, 1.442695
    %v2738 = vpow.pop %v2737
    %v2739 = vmul.f32 %v2639, 1.442695
    %v2740 = vpow.pop %v2739
    %v2741 = vmul.f32 %v2640, 1.442695
    %v2742 = vpow.pop %v2741
    %v2743 = vmul.f32 %v2641, 1.442695
    %v2744 = vpow.pop %v2743
    %v2745 = vmul.f32 %v2642, 1.442695
    %v2746 = vpow.pop %v2745
    %v2747 = vmul.f32 %v2643, 1.442695
    %v2748 = vpow.pop %v2747
    %v2749 = vmul.f32 %v2644, 1.442695
    %v2750 = vpow.pop %v2749
    %v2751 = vmul.f32 %v2645, 1.442695
    %v2752 = vpow.pop %v2751
    %v2753 = vmul.f32 %v2646, 1.442695
    %v2754 = vpow.pop %v2753
    %v2755 = vmul.f32 %v2647, 1.442695
    %v2756 = vpow.pop %v2755
    %v2757 = vmul.f32 %v2648, 1.442695
    %v2758 = vpow.pop %v2757
    %v2759 = vmul.f32 %v2649, 1.442695
    %v2760 = vpow.pop %v2759
    %v2761 = vmul.f32 %v2650, 1.442695
    %v2762 = vpow.pop %v2761
    %v2763 = vmul.f32 %v2651, 1.442695
    %v2764 = vpow.pop %v2763
    %v2765 = vmul.f32 %v2652, 1.442695
    %v2766 = vpow.pop %v2765
    %v2767 = vmul.f32 %v2653, 1.442695
    %v2768 = vpow.pop %v2767
    %v2769 = vmul.f32 %v2654, 1.442695
    %v2770 = vpow.pop %v2769
    %v2771 = vmul.f32 %v2655, 1.442695
    %v2772 = vpow.pop %v2771
    %v2773 = vmul.f32 %v2656, 1.442695
    %v2774 = vpow.pop %v2773
    %v2775 = vmul.f32 %v2657, 1.442695
    %v2776 = vpow.pop %v2775
    %v2777 = vmul.f32 %v2658, 1.442695
    %v2778 = vpow.pop %v2777
    %v2779 = vmul.f32 %v2659, 1.442695
    %v2780 = vpow.pop %v2779
    %v2781 = vmul.f32 %v2660, 1.442695
    %v2782 = vpow.pop %v2781
    %v2783 = vmul.f32 %v2661, 1.442695
    %v2784 = vpow.pop %v2783
    %v2785 = vmul.f32 %v2662, 1.442695
    %v2786 = vpow.pop %v2785
    %v2787 = vmul.f32 %v2663, 1.442695
    %v2788 = vpow.pop %v2787
    %v2789 = vmul.f32 %v2664, 1.442695
    %v2790 = vpow.pop %v2789
    %v2791 = vmul.f32 %v2665, 1.442695
    %v2792 = vpow.pop %v2791
    %v2793 = vmul.f32 %v2666, 1.442695
    %v2794 = vpow.pop %v2793
    %2795 = vadd.xlane.f32.xlu0 %v2668
    %v2796 = vpop.xlane.xlu0 %2795
    %2797 = vadd.xlane.f32.xlu0 %v2670
    %v2798 = vpop.xlane.xlu0 %2797
    %2799 = vadd.xlane.f32.xlu0 %v2672
    %v2800 = vpop.xlane.xlu0 %2799
    %2801 = vadd.xlane.f32.xlu0 %v2674
    %v2802 = vpop.xlane.xlu0 %2801
    %2803 = vadd.xlane.f32.xlu0 %v2676
    %v2804 = vpop.xlane.xlu0 %2803
    %2805 = vadd.xlane.f32.xlu0 %v2678
    %v2806 = vpop.xlane.xlu0 %2805
    %2807 = vadd.xlane.f32.xlu0 %v2680
    %v2808 = vpop.xlane.xlu0 %2807
    %2809 = vadd.xlane.f32.xlu0 %v2682
    %v2810 = vpop.xlane.xlu0 %2809
    %2811 = vadd.xlane.f32.xlu0 %v2684
    %v2812 = vpop.xlane.xlu0 %2811
    %2813 = vadd.xlane.f32.xlu0 %v2686
    %v2814 = vpop.xlane.xlu0 %2813
    %2815 = vadd.xlane.f32.xlu0 %v2688
    %v2816 = vpop.xlane.xlu0 %2815
    %2817 = vadd.xlane.f32.xlu0 %v2690
    %v2818 = vpop.xlane.xlu0 %2817
    %2819 = vadd.xlane.f32.xlu0 %v2692
    %v2820 = vpop.xlane.xlu0 %2819
    %2821 = vadd.xlane.f32.xlu0 %v2694
    %v2822 = vpop.xlane.xlu0 %2821
    %2823 = vadd.xlane.f32.xlu0 %v2696
    %v2824 = vpop.xlane.xlu0 %2823
    %2825 = vadd.xlane.f32.xlu0 %v2698
    %v2826 = vpop.xlane.xlu0 %2825
    %2827 = vadd.xlane.f32.xlu0 %v2700
    %v2828 = vpop.xlane.xlu0 %2827
    %2829 = vadd.xlane.f32.xlu0 %v2702
    %v2830 = vpop.xlane.xlu0 %2829
    %2831 = vadd.xlane.f32.xlu0 %v2704
    %v2832 = vpop.xlane.xlu0 %2831
    %2833 = vadd.xlane.f32.xlu0 %v2706
    %v2834 = vpop.xlane.xlu0 %2833
    %2835 = vadd.xlane.f32.xlu0 %v2708
    %v2836 = vpop.xlane.xlu0 %2835
    %2837 = vadd.xlane.f32.xlu0 %v2710
    %v2838 = vpop.xlane.xlu0 %2837
    %2839 = vadd.xlane.f32.xlu0 %v2712
    %v2840 = vpop.xlane.xlu0 %2839
    %2841 = vadd.xlane.f32.xlu0 %v2714
    %v2842 = vpop.xlane.xlu0 %2841
    %2843 = vadd.xlane.f32.xlu0 %v2716
    %v2844 = vpop.xlane.xlu0 %2843
    %2845 = vadd.xlane.f32.xlu0 %v2718
    %v2846 = vpop.xlane.xlu0 %2845
    %2847 = vadd.xlane.f32.xlu0 %v2720
    %v2848 = vpop.xlane.xlu0 %2847
    %2849 = vadd.xlane.f32.xlu0 %v2722
    %v2850 = vpop.xlane.xlu0 %2849
    %2851 = vadd.xlane.f32.xlu0 %v2724
    %v2852 = vpop.xlane.xlu0 %2851
    %2853 = vadd.xlane.f32.xlu0 %v2726
    %v2854 = vpop.xlane.xlu0 %2853
    %2855 = vadd.xlane.f32.xlu0 %v2728
    %v2856 = vpop.xlane.xlu0 %2855
    %2857 = vadd.xlane.f32.xlu0 %v2730
    %v2858 = vpop.xlane.xlu0 %2857
    %2859 = vadd.xlane.f32.xlu0 %v2732
    %v2860 = vpop.xlane.xlu0 %2859
    %2861 = vadd.xlane.f32.xlu0 %v2734
    %v2862 = vpop.xlane.xlu0 %2861
    %2863 = vadd.xlane.f32.xlu0 %v2736
    %v2864 = vpop.xlane.xlu0 %2863
    %2865 = vadd.xlane.f32.xlu0 %v2738
    %v2866 = vpop.xlane.xlu0 %2865
    %2867 = vadd.xlane.f32.xlu0 %v2740
    %v2868 = vpop.xlane.xlu0 %2867
    %2869 = vadd.xlane.f32.xlu0 %v2742
    %v2870 = vpop.xlane.xlu0 %2869
    %2871 = vadd.xlane.f32.xlu0 %v2744
    %v2872 = vpop.xlane.xlu0 %2871
    %2873 = vadd.xlane.f32.xlu0 %v2746
    %v2874 = vpop.xlane.xlu0 %2873
    %2875 = vadd.xlane.f32.xlu0 %v2748
    %v2876 = vpop.xlane.xlu0 %2875
    %2877 = vadd.xlane.f32.xlu0 %v2750
    %v2878 = vpop.xlane.xlu0 %2877
    %2879 = vadd.xlane.f32.xlu0 %v2752
    %v2880 = vpop.xlane.xlu0 %2879
    %2881 = vadd.xlane.f32.xlu0 %v2754
    %v2882 = vpop.xlane.xlu0 %2881
    %2883 = vadd.xlane.f32.xlu0 %v2756
    %v2884 = vpop.xlane.xlu0 %2883
    %2885 = vadd.xlane.f32.xlu0 %v2758
    %v2886 = vpop.xlane.xlu0 %2885
    %2887 = vadd.xlane.f32.xlu0 %v2760
    %v2888 = vpop.xlane.xlu0 %2887
    %2889 = vadd.xlane.f32.xlu0 %v2762
    %v2890 = vpop.xlane.xlu0 %2889
    %2891 = vadd.xlane.f32.xlu0 %v2764
    %v2892 = vpop.xlane.xlu0 %2891
    %2893 = vadd.xlane.f32.xlu0 %v2766
    %v2894 = vpop.xlane.xlu0 %2893
    %2895 = vadd.xlane.f32.xlu0 %v2768
    %v2896 = vpop.xlane.xlu0 %2895
    %2897 = vadd.xlane.f32.xlu0 %v2770
    %v2898 = vpop.xlane.xlu0 %2897
    %2899 = vadd.xlane.f32.xlu0 %v2772
    %v2900 = vpop.xlane.xlu0 %2899
    %2901 = vadd.xlane.f32.xlu0 %v2774
    %v2902 = vpop.xlane.xlu0 %2901
    %2903 = vadd.xlane.f32.xlu0 %v2776
    %v2904 = vpop.xlane.xlu0 %2903
    %2905 = vadd.xlane.f32.xlu0 %v2778
    %v2906 = vpop.xlane.xlu0 %2905
    %2907 = vadd.xlane.f32.xlu0 %v2780
    %v2908 = vpop.xlane.xlu0 %2907
    %2909 = vadd.xlane.f32.xlu0 %v2782
    %v2910 = vpop.xlane.xlu0 %2909
    %2911 = vadd.xlane.f32.xlu0 %v2784
    %v2912 = vpop.xlane.xlu0 %2911
    %2913 = vadd.xlane.f32.xlu0 %v2786
    %v2914 = vpop.xlane.xlu0 %2913
    %2915 = vadd.xlane.f32.xlu0 %v2788
    %v2916 = vpop.xlane.xlu0 %2915
    %2917 = vadd.xlane.f32.xlu0 %v2790
    %v2918 = vpop.xlane.xlu0 %2917
    %2919 = vadd.xlane.f32.xlu0 %v2792
    %v2920 = vpop.xlane.xlu0 %2919
    %2921 = vadd.xlane.f32.xlu0 %v2794
    %v2922 = vpop.xlane.xlu0 %2921
    %v2923 = vlog2.pop %v2796
    %v2924 = vmul.f32 %v2923, 0.6931472
    %v2925 = vlog2.pop %v2798
    %v2926 = vmul.f32 %v2925, 0.6931472
    %v2927 = vlog2.pop %v2800
    %v2928 = vmul.f32 %v2927, 0.6931472
    %v2929 = vlog2.pop %v2802
    %v2930 = vmul.f32 %v2929, 0.6931472
    %v2931 = vlog2.pop %v2804
    %v2932 = vmul.f32 %v2931, 0.6931472
    %v2933 = vlog2.pop %v2806
    %v2934 = vmul.f32 %v2933, 0.6931472
    %v2935 = vlog2.pop %v2808
    %v2936 = vmul.f32 %v2935, 0.6931472
    %v2937 = vlog2.pop %v2810
    %v2938 = vmul.f32 %v2937, 0.6931472
    %v2939 = vlog2.pop %v2812
    %v2940 = vmul.f32 %v2939, 0.6931472
    %v2941 = vlog2.pop %v2814
    %v2942 = vmul.f32 %v2941, 0.6931472
    %v2943 = vlog2.pop %v2816
    %v2944 = vmul.f32 %v2943, 0.6931472
    %v2945 = vlog2.pop %v2818
    %v2946 = vmul.f32 %v2945, 0.6931472
    %v2947 = vlog2.pop %v2820
    %v2948 = vmul.f32 %v2947, 0.6931472
    %v2949 = vlog2.pop %v2822
    %v2950 = vmul.f32 %v2949, 0.6931472
    %v2951 = vlog2.pop %v2824
    %v2952 = vmul.f32 %v2951, 0.6931472
    %v2953 = vlog2.pop %v2826
    %v2954 = vmul.f32 %v2953, 0.6931472
    %v2955 = vlog2.pop %v2828
    %v2956 = vmul.f32 %v2955, 0.6931472
    %v2957 = vlog2.pop %v2830
    %v2958 = vmul.f32 %v2957, 0.6931472
    %v2959 = vlog2.pop %v2832
    %v2960 = vmul.f32 %v2959, 0.6931472
    %v2961 = vlog2.pop %v2834
    %v2962 = vmul.f32 %v2961, 0.6931472
    %v2963 = vlog2.pop %v2836
    %v2964 = vmul.f32 %v2963, 0.6931472
    %v2965 = vlog2.pop %v2838
    %v2966 = vmul.f32 %v2965, 0.6931472
    %v2967 = vlog2.pop %v2840
    %v2968 = vmul.f32 %v2967, 0.6931472
    %v2969 = vlog2.pop %v2842
    %v2970 = vmul.f32 %v2969, 0.6931472
    %v2971 = vlog2.pop %v2844
    %v2972 = vmul.f32 %v2971, 0.6931472
    %v2973 = vlog2.pop %v2846
    %v2974 = vmul.f32 %v2973, 0.6931472
    %v2975 = vlog2.pop %v2848
    %v2976 = vmul.f32 %v2975, 0.6931472
    %v2977 = vlog2.pop %v2850
    %v2978 = vmul.f32 %v2977, 0.6931472
    %v2979 = vlog2.pop %v2852
    %v2980 = vmul.f32 %v2979, 0.6931472
    %v2981 = vlog2.pop %v2854
    %v2982 = vmul.f32 %v2981, 0.6931472
    %v2983 = vlog2.pop %v2856
    %v2984 = vmul.f32 %v2983, 0.6931472
    %v2985 = vlog2.pop %v2858
    %v2986 = vmul.f32 %v2985, 0.6931472
    %v2987 = vlog2.pop %v2860
    %v2988 = vmul.f32 %v2987, 0.6931472
    %v2989 = vlog2.pop %v2862
    %v2990 = vmul.f32 %v2989, 0.6931472
    %v2991 = vlog2.pop %v2864
    %v2992 = vmul.f32 %v2991, 0.6931472
    %v2993 = vlog2.pop %v2866
    %v2994 = vmul.f32 %v2993, 0.6931472
    %v2995 = vlog2.pop %v2868
    %v2996 = vmul.f32 %v2995, 0.6931472
    %v2997 = vlog2.pop %v2870
    %v2998 = vmul.f32 %v2997, 0.6931472
    %v2999 = vlog2.pop %v2872
    %v3000 = vmul.f32 %v2999, 0.6931472
    %v3001 = vlog2.pop %v2874
    %v3002 = vmul.f32 %v3001, 0.6931472
    %v3003 = vlog2.pop %v2876
    %v3004 = vmul.f32 %v3003, 0.6931472
    %v3005 = vlog2.pop %v2878
    %v3006 = vmul.f32 %v3005, 0.6931472
    %v3007 = vlog2.pop %v2880
    %v3008 = vmul.f32 %v3007, 0.6931472
    %v3009 = vlog2.pop %v2882
    %v3010 = vmul.f32 %v3009, 0.6931472
    %v3011 = vlog2.pop %v2884
    %v3012 = vmul.f32 %v3011, 0.6931472
    %v3013 = vlog2.pop %v2886
    %v3014 = vmul.f32 %v3013, 0.6931472
    %v3015 = vlog2.pop %v2888
    %v3016 = vmul.f32 %v3015, 0.6931472
    %v3017 = vlog2.pop %v2890
    %v3018 = vmul.f32 %v3017, 0.6931472
    %v3019 = vlog2.pop %v2892
    %v3020 = vmul.f32 %v3019, 0.6931472
    %v3021 = vlog2.pop %v2894
    %v3022 = vmul.f32 %v3021, 0.6931472
    %v3023 = vlog2.pop %v2896
    %v3024 = vmul.f32 %v3023, 0.6931472
    %v3025 = vlog2.pop %v2898
    %v3026 = vmul.f32 %v3025, 0.6931472
    %v3027 = vlog2.pop %v2900
    %v3028 = vmul.f32 %v3027, 0.6931472
    %v3029 = vlog2.pop %v2902
    %v3030 = vmul.f32 %v3029, 0.6931472
    %v3031 = vlog2.pop %v2904
    %v3032 = vmul.f32 %v3031, 0.6931472
    %v3033 = vlog2.pop %v2906
    %v3034 = vmul.f32 %v3033, 0.6931472
    %v3035 = vlog2.pop %v2908
    %v3036 = vmul.f32 %v3035, 0.6931472
    %v3037 = vlog2.pop %v2910
    %v3038 = vmul.f32 %v3037, 0.6931472
    %v3039 = vlog2.pop %v2912
    %v3040 = vmul.f32 %v3039, 0.6931472
    %v3041 = vlog2.pop %v2914
    %v3042 = vmul.f32 %v3041, 0.6931472
    %v3043 = vlog2.pop %v2916
    %v3044 = vmul.f32 %v3043, 0.6931472
    %v3045 = vlog2.pop %v2918
    %v3046 = vmul.f32 %v3045, 0.6931472
    %v3047 = vlog2.pop %v2920
    %v3048 = vmul.f32 %v3047, 0.6931472
    %v3049 = vlog2.pop %v2922
    %v3050 = vmul.f32 %v3049, 0.6931472
    %v3051 = vsub.f32 %v2603, %v2924
    %v3052 = vsub.f32 %v2604, %v2926
    %v3053 = vsub.f32 %v2605, %v2928
    %v3054 = vsub.f32 %v2606, %v2930
    %v3055 = vsub.f32 %v2607, %v2932
    %v3056 = vsub.f32 %v2608, %v2934
    %v3057 = vsub.f32 %v2609, %v2936
    %v3058 = vsub.f32 %v2610, %v2938
    %v3059 = vsub.f32 %v2611, %v2940
    %v3060 = vsub.f32 %v2612, %v2942
    %v3061 = vsub.f32 %v2613, %v2944
    %v3062 = vsub.f32 %v2614, %v2946
    %v3063 = vsub.f32 %v2615, %v2948
    %v3064 = vsub.f32 %v2616, %v2950
    %v3065 = vsub.f32 %v2617, %v2952
    %v3066 = vsub.f32 %v2618, %v2954
    %v3067 = vsub.f32 %v2619, %v2956
    %v3068 = vsub.f32 %v2620, %v2958
    %v3069 = vsub.f32 %v2621, %v2960
    %v3070 = vsub.f32 %v2622, %v2962
    %v3071 = vsub.f32 %v2623, %v2964
    %v3072 = vsub.f32 %v2624, %v2966
    %v3073 = vsub.f32 %v2625, %v2968
    %v3074 = vsub.f32 %v2626, %v2970
    %v3075 = vsub.f32 %v2627, %v2972
    %v3076 = vsub.f32 %v2628, %v2974
    %v3077 = vsub.f32 %v2629, %v2976
    %v3078 = vsub.f32 %v2630, %v2978
    %v3079 = vsub.f32 %v2631, %v2980
    %v3080 = vsub.f32 %v2632, %v2982
    %v3081 = vsub.f32 %v2633, %v2984
    %v3082 = vsub.f32 %v2634, %v2986
    %v3083 = vsub.f32 %v2635, %v2988
    %v3084 = vsub.f32 %v2636, %v2990
    %v3085 = vsub.f32 %v2637, %v2992
    %v3086 = vsub.f32 %v2638, %v2994
    %v3087 = vsub.f32 %v2639, %v2996
    %v3088 = vsub.f32 %v2640, %v2998
    %v3089 = vsub.f32 %v2641, %v3000
    %v3090 = vsub.f32 %v2642, %v3002
    %v3091 = vsub.f32 %v2643, %v3004
    %v3092 = vsub.f32 %v2644, %v3006
    %v3093 = vsub.f32 %v2645, %v3008
    %v3094 = vsub.f32 %v2646, %v3010
    %v3095 = vsub.f32 %v2647, %v3012
    %v3096 = vsub.f32 %v2648, %v3014
    %v3097 = vsub.f32 %v2649, %v3016
    %v3098 = vsub.f32 %v2650, %v3018
    %v3099 = vsub.f32 %v2651, %v3020
    %v3100 = vsub.f32 %v2652, %v3022
    %v3101 = vsub.f32 %v2653, %v3024
    %v3102 = vsub.f32 %v2654, %v3026
    %v3103 = vsub.f32 %v2655, %v3028
    %v3104 = vsub.f32 %v2656, %v3030
    %v3105 = vsub.f32 %v2657, %v3032
    %v3106 = vsub.f32 %v2658, %v3034
    %v3107 = vsub.f32 %v2659, %v3036
    %v3108 = vsub.f32 %v2660, %v3038
    %v3109 = vsub.f32 %v2661, %v3040
    %v3110 = vsub.f32 %v2662, %v3042
    %v3111 = vsub.f32 %v2663, %v3044
    %v3112 = vsub.f32 %v2664, %v3046
    %v3113 = vsub.f32 %v2665, %v3048
    %v3114 = vsub.f32 %v2666, %v3050
    %3115 = vst [vmem:[%s4] sm:$0xff] %v3051
    %3116 = vst [vmem:[%s4 + $0x8] sm:$0xff] %v3052
    %3117 = vst [vmem:[%s4 + $0x10] sm:$0xff] %v3053
    %3118 = vst [vmem:[%s4 + $0x18] sm:$0xff] %v3054
    %3119 = vst [vmem:[%s4 + $0x20] sm:$0xff] %v3055
    %3120 = vst [vmem:[%s4 + $0x28] sm:$0xff] %v3056
    %3121 = vst [vmem:[%s4 + $0x30] sm:$0xff] %v3057
    %3122 = vst [vmem:[%s4 + $0x38] sm:$0xff] %v3058
    %3123 = vst [vmem:[%s4 + $0x40] sm:$0xff] %v3059
    %3124 = vst [vmem:[%s4 + $0x48] sm:$0xff] %v3060
    %3125 = vst [vmem:[%s4 + $0x50] sm:$0xff] %v3061
    %3126 = vst [vmem:[%s4 + $0x58] sm:$0xff] %v3062
    %3127 = vst [vmem:[%s4 + $0x60] sm:$0xff] %v3063
    %3128 = vst [vmem:[%s4 + $0x68] sm:$0xff] %v3064
    %3129 = vst [vmem:[%s4 + $0x70] sm:$0xff] %v3065
    %3130 = vst [vmem:[%s4 + $0x78] sm:$0xff] %v3066
    %3131 = vst [vmem:[%s4 + $0x80] sm:$0xff] %v3067
    %3132 = vst [vmem:[%s4 + $0x88] sm:$0xff] %v3068
    %3133 = vst [vmem:[%s4 + $0x90] sm:$0xff] %v3069
    %3134 = vst [vmem:[%s4 + $0x98] sm:$0xff] %v3070
    %3135 = vst [vmem:[%s4 + $0xa0] sm:$0xff] %v3071
    %3136 = vst [vmem:[%s4 + $0xa8] sm:$0xff] %v3072
    %3137 = vst [vmem:[%s4 + $0xb0] sm:$0xff] %v3073
    %3138 = vst [vmem:[%s4 + $0xb8] sm:$0xff] %v3074
    %3139 = vst [vmem:[%s4 + $0xc0] sm:$0xff] %v3075
    %3140 = vst [vmem:[%s4 + $0xc8] sm:$0xff] %v3076
    %3141 = vst [vmem:[%s4 + $0xd0] sm:$0xff] %v3077
    %3142 = vst [vmem:[%s4 + $0xd8] sm:$0xff] %v3078
    %3143 = vst [vmem:[%s4 + $0xe0] sm:$0xff] %v3079
    %3144 = vst [vmem:[%s4 + $0xe8] sm:$0xff] %v3080
    %3145 = vst [vmem:[%s4 + $0xf0] sm:$0xff] %v3081
    %3146 = vst [vmem:[%s4 + $0xf8] sm:$0xff] %v3082
    %3147 = vst [vmem:[%s4 + $0x100] sm:$0xff] %v3083
    %3148 = vst [vmem:[%s4 + $0x108] sm:$0xff] %v3084
    %3149 = vst [vmem:[%s4 + $0x110] sm:$0xff] %v3085
    %3150 = vst [vmem:[%s4 + $0x118] sm:$0xff] %v3086
    %3151 = vst [vmem:[%s4 + $0x120] sm:$0xff] %v3087
    %3152 = vst [vmem:[%s4 + $0x128] sm:$0xff] %v3088
    %3153 = vst [vmem:[%s4 + $0x130] sm:$0xff] %v3089
    %3154 = vst [vmem:[%s4 + $0x138] sm:$0xff] %v3090
    %3155 = vst [vmem:[%s4 + $0x140] sm:$0xff] %v3091
    %3156 = vst [vmem:[%s4 + $0x148] sm:$0xff] %v3092
    %3157 = vst [vmem:[%s4 + $0x150] sm:$0xff] %v3093
    %3158 = vst [vmem:[%s4 + $0x158] sm:$0xff] %v3094
    %3159 = vst [vmem:[%s4 + $0x160] sm:$0xff] %v3095
    %3160 = vst [vmem:[%s4 + $0x168] sm:$0xff] %v3096
    %3161 = vst [vmem:[%s4 + $0x170] sm:$0xff] %v3097
    %3162 = vst [vmem:[%s4 + $0x178] sm:$0xff] %v3098
    %3163 = vst [vmem:[%s4 + $0x180] sm:$0xff] %v3099
    %3164 = vst [vmem:[%s4 + $0x188] sm:$0xff] %v3100
    %3165 = vst [vmem:[%s4 + $0x190] sm:$0xff] %v3101
    %3166 = vst [vmem:[%s4 + $0x198] sm:$0xff] %v3102
    %3167 = vst [vmem:[%s4 + $0x1a0] sm:$0xff] %v3103
    %3168 = vst [vmem:[%s4 + $0x1a8] sm:$0xff] %v3104
    %3169 = vst [vmem:[%s4 + $0x1b0] sm:$0xff] %v3105
    %3170 = vst [vmem:[%s4 + $0x1b8] sm:$0xff] %v3106
    %3171 = vst [vmem:[%s4 + $0x1c0] sm:$0xff] %v3107
    %3172 = vst [vmem:[%s4 + $0x1c8] sm:$0xff] %v3108
    %3173 = vst [vmem:[%s4 + $0x1d0] sm:$0xff] %v3109
    %3174 = vst [vmem:[%s4 + $0x1d8] sm:$0xff] %v3110
    %3175 = vst [vmem:[%s4 + $0x1e0] sm:$0xff] %v3111
    %3176 = vst [vmem:[%s4 + $0x1e8] sm:$0xff] %v3112
    %3177 = vst [vmem:[%s4 + $0x1f0] sm:$0xff] %v3113
    %3178 = vst [vmem:[%s4 + $0x1f8] sm:$0xff] %v3114
  $region25: #{gcn_forward.3} parent=0 // pred_fallthru
    _
  // Predicated region
  $region26: #{gcn_forward.3} parent=0 // pred_check
    _
  $region27: #{gcn_forward.3} parent=0 // pred_check_branch
    %3180 = sbr.rel (0) target = $region29
  $region28: #{gcn_forward.3} parent=0 // pred_region
    _
  $region29: #{gcn_forward.3} parent=0 // pred_fallthru
    _
  // Predicated region
  $region30: #{gcn_forward.3} parent=0 // pred_check
    _
  $region31: #{gcn_forward.3} parent=0 // pred_check_branch
    %3182 = sbr.rel (0) target = $region33
  $region32: #{gcn_forward.3} parent=0 // pred_region
    _
  $region33: #{gcn_forward.3} parent=0 // pred_fallthru
    _

// kernel: gcn_forward.2
$region0: #{gcn_forward.2}
  #allocation0 [shape = 'u32[]', space=smem, size = 0x4, offset = 0x4, fixed_abs, tag = 'smem constant byte address 0x4 - core index']
  #allocation1 [shape = 'u32[144,128]{1,0:T(1,128)}', space=vmem, size = 0x12000, scoped, tag = 'internal scratch']
  #allocation2 [shape = 'f32[512,128]{1,0:T(8,128)}', space=vmem, size = 0x40000, scoped, tag = 'scratch operand']
  %s0 = inlined_call_operand.hbm [shape: bf16[512,512], index: 0, kind: input, shape index: {}]
  %s1 = inlined_call_operand.vmem [shape: bf16[512,128], index: 1, kind: input, shape index: {}]
  %s2 = inlined_call_operand.vmem [shape: bf16[128,128], index: 2, kind: input, shape index: {}]
  %s3 = inlined_call_operand.vmem [shape: f32[1,128], index: 3, kind: input, shape index: {}]
  %s4 = inlined_call_operand.vmem [shape: bf16[512,128], index: 4, kind: output, shape index: {}]
  %s5 = sld [smem:[#allocation0]]
  $region38: #{gcn_forward.2} parent=0
    _
  %s7 = ssub.s32 1, %s5
  %s8 = scalar_select 0, %s7, %s5
  $region1: #{gcn_forward.2} parent=0
    #allocation3 [shape = 'u8[524288]{0}', space=vmem, size = 0x80000, scoped, tag = 'input window, operand 0, single buffered']
    #allocation4 [shape = 's32[1]{0}', space=sflag, size = 0x4, scoped, tag = 'scoped memory for gcn_forward.2']
    %9 = vsyncpa [#allocation4], 0
    // Predicated region
    $region2: #{gcn_forward.2} parent=1 // pred_check
      _
    $region3: #{gcn_forward.2} parent=1 // pred_check_branch
      %11 = sbr.rel (0) target = $region5
    $region4: #{gcn_forward.2} parent=1 // pred_region
      %s13 = ssub.s32 16384, 16384
      %14 = vsyncadd [#allocation4], %s13
      %s15 = sshll.u32 [#allocation3], 4
      %s16 = int_to_ptr.vmem [resolvable:$true] %s15
      %21 = dma.hbm_to_vmem [thread:$0]  %s0, 16384, %s16, [#allocation4], 256, 256, 16
    $region5: #{gcn_forward.2} parent=1 // pred_fallthru
      _
    // Predicated region
    $region6: #{gcn_forward.2} parent=1 // pred_check
      _
    $region7: #{gcn_forward.2} parent=1 // pred_check_branch
      %23 = sbr.rel (0) target = $region9
    $region8: #{gcn_forward.2} parent=1 // pred_region
      _
    $region9: #{gcn_forward.2} parent=1 // pred_fallthru
      _
    // Predicated region
    $region10: #{gcn_forward.2} parent=1 // pred_check
      _
    $region11: #{gcn_forward.2} parent=1 // pred_check_branch
      %25 = sbr.rel (0) target = $region13
    $region12: #{gcn_forward.2} parent=1 // pred_region
      _
    $region13: #{gcn_forward.2} parent=1 // pred_fallthru
      _
    // Predicated region
    $region14: #{gcn_forward.2} parent=1 // pred_check
      _
    $region15: #{gcn_forward.2} parent=1 // pred_check_branch
      %27 = sbr.rel (0) target = $region17
    $region16: #{gcn_forward.2} parent=1 // pred_region
      _
    $region17: #{gcn_forward.2} parent=1 // pred_fallthru
      _
    // Predicated region
    $region18: #{gcn_forward.2} parent=1 // pred_check
      _
    $region19: #{gcn_forward.2} parent=1 // pred_check_branch
      %29 = sbr.rel (0) target = $region21
    $region20: #{gcn_forward.2} parent=1 // pred_region
      %30 = dma.done [#allocation4], 16384
    $region21: #{gcn_forward.2} parent=1 // pred_fallthru
      _
    %p32 = scmp.eq.s32.totalorder 0, 0
    // Predicated region
    $region22: #{gcn_forward.2} parent=1 // pred_check
      %p33 = pneg %p32
    $region23: #{gcn_forward.2} parent=1 // pred_check_branch
      %35 = sbr.rel (%p33) target = $region25
    $region24: #{gcn_forward.2} parent=1 // pred_region
      %36 = vst [vmem:[#allocation2] sm:$0xff] 0.0
      %37 = vst [vmem:[#allocation2 + $0x8] sm:$0xff] 0.0
      %38 = vst [vmem:[#allocation2 + $0x10] sm:$0xff] 0.0
      %39 = vst [vmem:[#allocation2 + $0x18] sm:$0xff] 0.0
      %40 = vst [vmem:[#allocation2 + $0x20] sm:$0xff] 0.0
      %41 = vst [vmem:[#allocation2 + $0x28] sm:$0xff] 0.0
      %42 = vst [vmem:[#allocation2 + $0x30] sm:$0xff] 0.0
      %43 = vst [vmem:[#allocation2 + $0x38] sm:$0xff] 0.0
      %44 = vst [vmem:[#allocation2 + $0x40] sm:$0xff] 0.0
      %45 = vst [vmem:[#allocation2 + $0x48] sm:$0xff] 0.0
      %46 = vst [vmem:[#allocation2 + $0x50] sm:$0xff] 0.0
      %47 = vst [vmem:[#allocation2 + $0x58] sm:$0xff] 0.0
      %48 = vst [vmem:[#allocation2 + $0x60] sm:$0xff] 0.0
      %49 = vst [vmem:[#allocation2 + $0x68] sm:$0xff] 0.0
      %50 = vst [vmem:[#allocation2 + $0x70] sm:$0xff] 0.0
      %51 = vst [vmem:[#allocation2 + $0x78] sm:$0xff] 0.0
      %52 = vst [vmem:[#allocation2 + $0x80] sm:$0xff] 0.0
      %53 = vst [vmem:[#allocation2 + $0x88] sm:$0xff] 0.0
      %54 = vst [vmem:[#allocation2 + $0x90] sm:$0xff] 0.0
      %55 = vst [vmem:[#allocation2 + $0x98] sm:$0xff] 0.0
      %56 = vst [vmem:[#allocation2 + $0xa0] sm:$0xff] 0.0
      %57 = vst [vmem:[#allocation2 + $0xa8] sm:$0xff] 0.0
      %58 = vst [vmem:[#allocation2 + $0xb0] sm:$0xff] 0.0
      %59 = vst [vmem:[#allocation2 + $0xb8] sm:$0xff] 0.0
      %60 = vst [vmem:[#allocation2 + $0xc0] sm:$0xff] 0.0
      %61 = vst [vmem:[#allocation2 + $0xc8] sm:$0xff] 0.0
      %62 = vst [vmem:[#allocation2 + $0xd0] sm:$0xff] 0.0
      %63 = vst [vmem:[#allocation2 + $0xd8] sm:$0xff] 0.0
      %64 = vst [vmem:[#allocation2 + $0xe0] sm:$0xff] 0.0
      %65 = vst [vmem:[#allocation2 + $0xe8] sm:$0xff] 0.0
      %66 = vst [vmem:[#allocation2 + $0xf0] sm:$0xff] 0.0
      %67 = vst [vmem:[#allocation2 + $0xf8] sm:$0xff] 0.0
      %68 = vst [vmem:[#allocation2 + $0x100] sm:$0xff] 0.0
      %69 = vst [vmem:[#allocation2 + $0x108] sm:$0xff] 0.0
      %70 = vst [vmem:[#allocation2 + $0x110] sm:$0xff] 0.0
      %71 = vst [vmem:[#allocation2 + $0x118] sm:$0xff] 0.0
      %72 = vst [vmem:[#allocation2 + $0x120] sm:$0xff] 0.0
      %73 = vst [vmem:[#allocation2 + $0x128] sm:$0xff] 0.0
      %74 = vst [vmem:[#allocation2 + $0x130] sm:$0xff] 0.0
      %75 = vst [vmem:[#allocation2 + $0x138] sm:$0xff] 0.0
      %76 = vst [vmem:[#allocation2 + $0x140] sm:$0xff] 0.0
      %77 = vst [vmem:[#allocation2 + $0x148] sm:$0xff] 0.0
      %78 = vst [vmem:[#allocation2 + $0x150] sm:$0xff] 0.0
      %79 = vst [vmem:[#allocation2 + $0x158] sm:$0xff] 0.0
      %80 = vst [vmem:[#allocation2 + $0x160] sm:$0xff] 0.0
      %81 = vst [vmem:[#allocation2 + $0x168] sm:$0xff] 0.0
      %82 = vst [vmem:[#allocation2 + $0x170] sm:$0xff] 0.0
      %83 = vst [vmem:[#allocation2 + $0x178] sm:$0xff] 0.0
      %84 = vst [vmem:[#allocation2 + $0x180] sm:$0xff] 0.0
      %85 = vst [vmem:[#allocation2 + $0x188] sm:$0xff] 0.0
      %86 = vst [vmem:[#allocation2 + $0x190] sm:$0xff] 0.0
      %87 = vst [vmem:[#allocation2 + $0x198] sm:$0xff] 0.0
      %88 = vst [vmem:[#allocation2 + $0x1a0] sm:$0xff] 0.0
      %89 = vst [vmem:[#allocation2 + $0x1a8] sm:$0xff] 0.0
      %90 = vst [vmem:[#allocation2 + $0x1b0] sm:$0xff] 0.0
      %91 = vst [vmem:[#allocation2 + $0x1b8] sm:$0xff] 0.0
      %92 = vst [vmem:[#allocation2 + $0x1c0] sm:$0xff] 0.0
      %93 = vst [vmem:[#allocation2 + $0x1c8] sm:$0xff] 0.0
      %94 = vst [vmem:[#allocation2 + $0x1d0] sm:$0xff] 0.0
      %95 = vst [vmem:[#allocation2 + $0x1d8] sm:$0xff] 0.0
      %96 = vst [vmem:[#allocation2 + $0x1e0] sm:$0xff] 0.0
      %97 = vst [vmem:[#allocation2 + $0x1e8] sm:$0xff] 0.0
      %98 = vst [vmem:[#allocation2 + $0x1f0] sm:$0xff] 0.0
      %99 = vst [vmem:[#allocation2 + $0x1f8] sm:$0xff] 0.0
    $region25: #{gcn_forward.2} parent=1 // pred_fallthru
      _
    %s100 = smul.u32 0, 512
    %s101 = sshra.s32 %s100, 3
    %s102 = sand.u32 %s100, 7
    %s103 = smul.addr %s101, 4
    %s104 = scalar_lea.vmem %s1, %s103
    %v105 = vld [vmem:[%s104] sm:$0xf]
    %v106 = vld [vmem:[%s104 + $0x4] sm:$0xf]
    %v107 = vld [vmem:[%s104 + $0x8] sm:$0xf]
    %v108 = vld [vmem:[%s104 + $0xc] sm:$0xf]
    %v109 = vld [vmem:[%s104 + $0x10] sm:$0xf]
    %v110 = vld [vmem:[%s104 + $0x14] sm:$0xf]
    %v111 = vld [vmem:[%s104 + $0x18] sm:$0xf]
    %v112 = vld [vmem:[%s104 + $0x1c] sm:$0xf]
    %v113 = vld [vmem:[%s104 + $0x20] sm:$0xf]
    %v114 = vld [vmem:[%s104 + $0x24] sm:$0xf]
    %v115 = vld [vmem:[%s104 + $0x28] sm:$0xf]
    %v116 = vld [vmem:[%s104 + $0x2c] sm:$0xf]
    %v117 = vld [vmem:[%s104 + $0x30] sm:$0xf]
    %v118 = vld [vmem:[%s104 + $0x34] sm:$0xf]
    %v119 = vld [vmem:[%s104 + $0x38] sm:$0xf]
    %v120 = vld [vmem:[%s104 + $0x3c] sm:$0xf]
    %v121 = vld [vmem:[%s104 + $0x40] sm:$0xf]
    %v122 = vld [vmem:[%s104 + $0x44] sm:$0xf]
    %v123 = vld [vmem:[%s104 + $0x48] sm:$0xf]
    %v124 = vld [vmem:[%s104 + $0x4c] sm:$0xf]
    %v125 = vld [vmem:[%s104 + $0x50] sm:$0xf]
    %v126 = vld [vmem:[%s104 + $0x54] sm:$0xf]
    %v127 = vld [vmem:[%s104 + $0x58] sm:$0xf]
    %v128 = vld [vmem:[%s104 + $0x5c] sm:$0xf]
    %v129 = vld [vmem:[%s104 + $0x60] sm:$0xf]
    %v130 = vld [vmem:[%s104 + $0x64] sm:$0xf]
    %v131 = vld [vmem:[%s104 + $0x68] sm:$0xf]
    %v132 = vld [vmem:[%s104 + $0x6c] sm:$0xf]
    %v133 = vld [vmem:[%s104 + $0x70] sm:$0xf]
    %v134 = vld [vmem:[%s104 + $0x74] sm:$0xf]
    %v135 = vld [vmem:[%s104 + $0x78] sm:$0xf]
    %v136 = vld [vmem:[%s104 + $0x7c] sm:$0xf]
    %v137 = vld [vmem:[%s104 + $0x80] sm:$0xf]
    %v138 = vld [vmem:[%s104 + $0x84] sm:$0xf]
    %v139 = vld [vmem:[%s104 + $0x88] sm:$0xf]
    %v140 = vld [vmem:[%s104 + $0x8c] sm:$0xf]
    %v141 = vld [vmem:[%s104 + $0x90] sm:$0xf]
    %v142 = vld [vmem:[%s104 + $0x94] sm:$0xf]
    %v143 = vld [vmem:[%s104 + $0x98] sm:$0xf]
    %v144 = vld [vmem:[%s104 + $0x9c] sm:$0xf]
    %v145 = vld [vmem:[%s104 + $0xa0] sm:$0xf]
    %v146 = vld [vmem:[%s104 + $0xa4] sm:$0xf]
    %v147 = vld [vmem:[%s104 + $0xa8] sm:$0xf]
    %v148 = vld [vmem:[%s104 + $0xac] sm:$0xf]
    %v149 = vld [vmem:[%s104 + $0xb0] sm:$0xf]
    %v150 = vld [vmem:[%s104 + $0xb4] sm:$0xf]
    %v151 = vld [vmem:[%s104 + $0xb8] sm:$0xf]
    %v152 = vld [vmem:[%s104 + $0xbc] sm:$0xf]
    %v153 = vld [vmem:[%s104 + $0xc0] sm:$0xf]
    %v154 = vld [vmem:[%s104 + $0xc4] sm:$0xf]
    %v155 = vld [vmem:[%s104 + $0xc8] sm:$0xf]
    %v156 = vld [vmem:[%s104 + $0xcc] sm:$0xf]
    %v157 = vld [vmem:[%s104 + $0xd0] sm:$0xf]
    %v158 = vld [vmem:[%s104 + $0xd4] sm:$0xf]
    %v159 = vld [vmem:[%s104 + $0xd8] sm:$0xf]
    %v160 = vld [vmem:[%s104 + $0xdc] sm:$0xf]
    %v161 = vld [vmem:[%s104 + $0xe0] sm:$0xf]
    %v162 = vld [vmem:[%s104 + $0xe4] sm:$0xf]
    %v163 = vld [vmem:[%s104 + $0xe8] sm:$0xf]
    %v164 = vld [vmem:[%s104 + $0xec] sm:$0xf]
    %v165 = vld [vmem:[%s104 + $0xf0] sm:$0xf]
    %v166 = vld [vmem:[%s104 + $0xf4] sm:$0xf]
    %v167 = vld [vmem:[%s104 + $0xf8] sm:$0xf]
    %v168 = vld [vmem:[%s104 + $0xfc] sm:$0xf]
    %v169 = vld [vmem:[%s2] sm:$0xf]
    %v170 = vld [vmem:[%s2 + $0x4] sm:$0xf]
    %v171 = vld [vmem:[%s2 + $0x8] sm:$0xf]
    %v172 = vld [vmem:[%s2 + $0xc] sm:$0xf]
    %v173 = vld [vmem:[%s2 + $0x10] sm:$0xf]
    %v174 = vld [vmem:[%s2 + $0x14] sm:$0xf]
    %v175 = vld [vmem:[%s2 + $0x18] sm:$0xf]
    %v176 = vld [vmem:[%s2 + $0x1c] sm:$0xf]
    %v177 = vld [vmem:[%s2 + $0x20] sm:$0xf]
    %v178 = vld [vmem:[%s2 + $0x24] sm:$0xf]
    %v179 = vld [vmem:[%s2 + $0x28] sm:$0xf]
    %v180 = vld [vmem:[%s2 + $0x2c] sm:$0xf]
    %v181 = vld [vmem:[%s2 + $0x30] sm:$0xf]
    %v182 = vld [vmem:[%s2 + $0x34] sm:$0xf]
    %v183 = vld [vmem:[%s2 + $0x38] sm:$0xf]
    %v184 = vld [vmem:[%s2 + $0x3c] sm:$0xf]
    %v249 = vunpack.c.l.b16 %v105
    %v250 = vunpack.c.l.b16 %v106
    %v251 = vunpack.c.l.b16 %v107
    %v252 = vunpack.c.l.b16 %v108
    %v253 = vunpack.c.l.b16 %v109
    %v254 = vunpack.c.l.b16 %v110
    %v255 = vunpack.c.l.b16 %v111
    %v256 = vunpack.c.l.b16 %v112
    %v257 = vunpack.c.l.b16 %v113
    %v258 = vunpack.c.l.b16 %v114
    %v259 = vunpack.c.l.b16 %v115
    %v260 = vunpack.c.l.b16 %v116
    %v261 = vunpack.c.l.b16 %v117
    %v262 = vunpack.c.l.b16 %v118
    %v263 = vunpack.c.l.b16 %v119
    %v264 = vunpack.c.l.b16 %v120
    %v265 = vunpack.c.l.b16 %v121
    %v266 = vunpack.c.l.b16 %v122
    %v267 = vunpack.c.l.b16 %v123
    %v268 = vunpack.c.l.b16 %v124
    %v269 = vunpack.c.l.b16 %v125
    %v270 = vunpack.c.l.b16 %v126
    %v271 = vunpack.c.l.b16 %v127
    %v272 = vunpack.c.l.b16 %v128
    %v273 = vunpack.c.l.b16 %v129
    %v274 = vunpack.c.l.b16 %v130
    %v275 = vunpack.c.l.b16 %v131
    %v276 = vunpack.c.l.b16 %v132
    %v277 = vunpack.c.l.b16 %v133
    %v278 = vunpack.c.l.b16 %v134
    %v279 = vunpack.c.l.b16 %v135
    %v280 = vunpack.c.l.b16 %v136
    %v281 = vunpack.c.l.b16 %v137
    %v282 = vunpack.c.l.b16 %v138
    %v283 = vunpack.c.l.b16 %v139
    %v284 = vunpack.c.l.b16 %v140
    %v285 = vunpack.c.l.b16 %v141
    %v286 = vunpack.c.l.b16 %v142
    %v287 = vunpack.c.l.b16 %v143
    %v288 = vunpack.c.l.b16 %v144
    %v289 = vunpack.c.l.b16 %v145
    %v290 = vunpack.c.l.b16 %v146
    %v291 = vunpack.c.l.b16 %v147
    %v292 = vunpack.c.l.b16 %v148
    %v293 = vunpack.c.l.b16 %v149
    %v294 = vunpack.c.l.b16 %v150
    %v295 = vunpack.c.l.b16 %v151
    %v296 = vunpack.c.l.b16 %v152
    %v297 = vunpack.c.l.b16 %v153
    %v298 = vunpack.c.l.b16 %v154
    %v299 = vunpack.c.l.b16 %v155
    %v300 = vunpack.c.l.b16 %v156
    %v301 = vunpack.c.l.b16 %v157
    %v302 = vunpack.c.l.b16 %v158
    %v303 = vunpack.c.l.b16 %v159
    %v304 = vunpack.c.l.b16 %v160
    %v305 = vunpack.c.l.b16 %v161
    %v306 = vunpack.c.l.b16 %v162
    %v307 = vunpack.c.l.b16 %v163
    %v308 = vunpack.c.l.b16 %v164
    %v309 = vunpack.c.l.b16 %v165
    %v310 = vunpack.c.l.b16 %v166
    %v311 = vunpack.c.l.b16 %v167
    %v312 = vunpack.c.l.b16 %v168
    %v313 = vpack.c.b16 %v250, %v249
    %v314 = vpack.c.b16 %v252, %v251
    %v315 = vpack.c.b16 %v254, %v253
    %v316 = vpack.c.b16 %v256, %v255
    %v317 = vpack.c.b16 %v258, %v257
    %v318 = vpack.c.b16 %v260, %v259
    %v319 = vpack.c.b16 %v262, %v261
    %v320 = vpack.c.b16 %v264, %v263
    %v321 = vpack.c.b16 %v266, %v265
    %v322 = vpack.c.b16 %v268, %v267
    %v323 = vpack.c.b16 %v270, %v269
    %v324 = vpack.c.b16 %v272, %v271
    %v325 = vpack.c.b16 %v274, %v273
    %v326 = vpack.c.b16 %v276, %v275
    %v327 = vpack.c.b16 %v278, %v277
    %v328 = vpack.c.b16 %v280, %v279
    %v329 = vpack.c.b16 %v282, %v281
    %v330 = vpack.c.b16 %v284, %v283
    %v331 = vpack.c.b16 %v286, %v285
    %v332 = vpack.c.b16 %v288, %v287
    %v333 = vpack.c.b16 %v290, %v289
    %v334 = vpack.c.b16 %v292, %v291
    %v335 = vpack.c.b16 %v294, %v293
    %v336 = vpack.c.b16 %v296, %v295
    %v337 = vpack.c.b16 %v298, %v297
    %v338 = vpack.c.b16 %v300, %v299
    %v339 = vpack.c.b16 %v302, %v301
    %v340 = vpack.c.b16 %v304, %v303
    %v341 = vpack.c.b16 %v306, %v305
    %v342 = vpack.c.b16 %v308, %v307
    %v343 = vpack.c.b16 %v310, %v309
    %v344 = vpack.c.b16 %v312, %v311
    %v393 = vunpack.c.l.b16 %v169
    %v394 = vunpack.c.l.b16 %v170
    %v395 = vunpack.c.l.b16 %v171
    %v396 = vunpack.c.l.b16 %v172
    %v397 = vunpack.c.l.b16 %v173
    %v398 = vunpack.c.l.b16 %v174
    %v399 = vunpack.c.l.b16 %v175
    %v400 = vunpack.c.l.b16 %v176
    %v401 = vunpack.c.l.b16 %v177
    %v402 = vunpack.c.l.b16 %v178
    %v403 = vunpack.c.l.b16 %v179
    %v404 = vunpack.c.l.b16 %v180
    %v405 = vunpack.c.l.b16 %v181
    %v406 = vunpack.c.l.b16 %v182
    %v407 = vunpack.c.l.b16 %v183
    %v408 = vunpack.c.l.b16 %v184
    %v409 = vpack.c.b16 %v394, %v393
    %v410 = vpack.c.b16 %v396, %v395
    %v411 = vpack.c.b16 %v398, %v397
    %v412 = vpack.c.b16 %v400, %v399
    %v413 = vpack.c.b16 %v402, %v401
    %v414 = vpack.c.b16 %v404, %v403
    %v415 = vpack.c.b16 %v406, %v405
    %v416 = vpack.c.b16 %v408, %v407
    %425 = vmatprep.subr.bf16.mxu0 0
    %426 = vmatpush1.bf16.msra.mxu0 %v409
    %427 = vmatprep.subr.bf16.mxu0 0
    %428 = vmatpush1.bf16.msra.mxu0 %v410
    %429 = vmatprep.subr.bf16.mxu0 0
    %430 = vmatpush1.bf16.msra.mxu0 %v411
    %431 = vmatprep.subr.bf16.mxu0 0
    %432 = vmatpush1.bf16.msra.mxu0 %v412
    %433 = vmatprep.subr.bf16.mxu0 0
    %434 = vmatpush1.bf16.msra.mxu0 %v413
    %435 = vmatprep.subr.bf16.mxu0 0
    %436 = vmatpush1.bf16.msra.mxu0 %v414
    %437 = vmatprep.subr.bf16.mxu0 0
    %438 = vmatpush1.bf16.msra.mxu0 %v415
    %439 = vmatprep.subr.bf16.mxu0 0
    %440 = vmatpush1.bf16.msra.mxu0 %v416
    %441 = vmatprep.subr.bf16.mxu0 0
    %442 = vmatpush1.bf16.msra.mxu0 0
    %443 = vmatprep.subr.bf16.mxu0 0
    %444 = vmatpush1.bf16.msra.mxu0 0
    %445 = vmatprep.subr.bf16.mxu0 0
    %446 = vmatpush1.bf16.msra.mxu0 0
    %447 = vmatprep.subr.bf16.mxu0 0
    %448 = vmatpush1.bf16.msra.mxu0 0
    %449 = vmatprep.subr.bf16.mxu0 0
    %450 = vmatpush1.bf16.msra.mxu0 0
    %451 = vmatprep.subr.bf16.mxu0 0
    %452 = vmatpush1.bf16.msra.mxu0 0
    %453 = vmatprep.subr.bf16.mxu0 0
    %454 = vmatpush1.bf16.msra.mxu0 0
    %455 = vmatprep.subr.bf16.mxu0 0
    %456 = vmatpush1.bf16.msra.mxu0 0
    %457 = vmatprep.mubr.bf16.mxu0 0
    %458 = vmatmul.mubr.bf16.gmra.mrb[0].mxu0 %v313
    %v459 = vpop.f32.mrb[0].mxu0
    %v460 = vadd.f32 0.0, %v459
    %v461 = vpop.f32.mrb[0].mxu0
    %v462 = vpop.f32.mrb[0].mxu0
    %v463 = vadd.f32 0.0, %v462
    %v464 = vpop.f32.mrb[0].mxu0
    %465 = vmatprep.mubr.bf16.mxu0 0
    %466 = vmatmul.mubr.bf16.gmra.mrb[0].mxu0 %v314
    %v467 = vpop.f32.mrb[0].mxu0
    %v468 = vadd.f32 0.0, %v467
    %v469 = vpop.f32.mrb[0].mxu0
    %v470 = vpop.f32.mrb[0].mxu0
    %v471 = vadd.f32 0.0, %v470
    %v472 = vpop.f32.mrb[0].mxu0
    %473 = vmatprep.mubr.bf16.mxu0 0
    %474 = vmatmul.mubr.bf16.gmra.mrb[0].mxu0 %v315
    %v475 = vpop.f32.mrb[0].mxu0
    %v476 = vadd.f32 0.0, %v475
    %v477 = vpop.f32.mrb[0].mxu0
    %v478 = vpop.f32.mrb[0].mxu0
    %v479 = vadd.f32 0.0, %v478
    %v480 = vpop.f32.mrb[0].mxu0
    %481 = vmatprep.mubr.bf16.mxu0 0
    %482 = vmatmul.mubr.bf16.gmra.mrb[0].mxu0 %v316
    %v483 = vpop.f32.mrb[0].mxu0
    %v484 = vadd.f32 0.0, %v483
    %v485 = vpop.f32.mrb[0].mxu0
    %v486 = vpop.f32.mrb[0].mxu0
    %v487 = vadd.f32 0.0, %v486
    %v488 = vpop.f32.mrb[0].mxu0
    %489 = vmatprep.mubr.bf16.mxu0 0
    %490 = vmatmul.mubr.bf16.gmra.mrb[0].mxu0 %v317
    %v491 = vpop.f32.mrb[0].mxu0
    %v492 = vadd.f32 0.0, %v491
    %v493 = vpop.f32.mrb[0].mxu0
    %v494 = vpop.f32.mrb[0].mxu0
    %v495 = vadd.f32 0.0, %v494
    %v496 = vpop.f32.mrb[0].mxu0
    %497 = vmatprep.mubr.bf16.mxu0 0
    %498 = vmatmul.mubr.bf16.gmra.mrb[0].mxu0 %v318
    %v499 = vpop.f32.mrb[0].mxu0
    %v500 = vadd.f32 0.0, %v499
    %v501 = vpop.f32.mrb[0].mxu0
    %v502 = vpop.f32.mrb[0].mxu0
    %v503 = vadd.f32 0.0, %v502
    %v504 = vpop.f32.mrb[0].mxu0
    %505 = vmatprep.mubr.bf16.mxu0 0
    %506 = vmatmul.mubr.bf16.gmra.mrb[0].mxu0 %v319
    %v507 = vpop.f32.mrb[0].mxu0
    %v508 = vadd.f32 0.0, %v507
    %v509 = vpop.f32.mrb[0].mxu0
    %v510 = vpop.f32.mrb[0].mxu0
    %v511 = vadd.f32 0.0, %v510
    %v512 = vpop.f32.mrb[0].mxu0
    %513 = vmatprep.mubr.bf16.mxu0 0
    %514 = vmatmul.mubr.bf16.gmra.mrb[0].mxu0 %v320
    %v515 = vpop.f32.mrb[0].mxu0
    %v516 = vadd.f32 0.0, %v515
    %v517 = vpop.f32.mrb[0].mxu0
    %v518 = vpop.f32.mrb[0].mxu0
    %v519 = vadd.f32 0.0, %v518
    %v520 = vpop.f32.mrb[0].mxu0
    %521 = vmatprep.mubr.bf16.mxu0 0
    %522 = vmatmul.mubr.bf16.gmra.mrb[0].mxu0 %v321
    %v523 = vpop.f32.mrb[0].mxu0
    %v524 = vadd.f32 0.0, %v523
    %v525 = vpop.f32.mrb[0].mxu0
    %v526 = vpop.f32.mrb[0].mxu0
    %v527 = vadd.f32 0.0, %v526
    %v528 = vpop.f32.mrb[0].mxu0
    %529 = vmatprep.mubr.bf16.mxu0 0
    %530 = vmatmul.mubr.bf16.gmra.mrb[0].mxu0 %v322
    %v531 = vpop.f32.mrb[0].mxu0
    %v532 = vadd.f32 0.0, %v531
    %v533 = vpop.f32.mrb[0].mxu0
    %v534 = vpop.f32.mrb[0].mxu0
    %v535 = vadd.f32 0.0, %v534
    %v536 = vpop.f32.mrb[0].mxu0
    %537 = vmatprep.mubr.bf16.mxu0 0
    %538 = vmatmul.mubr.bf16.gmra.mrb[0].mxu0 %v323
    %v539 = vpop.f32.mrb[0].mxu0
    %v540 = vadd.f32 0.0, %v539
    %v541 = vpop.f32.mrb[0].mxu0
    %v542 = vpop.f32.mrb[0].mxu0
    %v543 = vadd.f32 0.0, %v542
    %v544 = vpop.f32.mrb[0].mxu0
    %545 = vmatprep.mubr.bf16.mxu0 0
    %546 = vmatmul.mubr.bf16.gmra.mrb[0].mxu0 %v324
    %v547 = vpop.f32.mrb[0].mxu0
    %v548 = vadd.f32 0.0, %v547
    %v549 = vpop.f32.mrb[0].mxu0
    %v550 = vpop.f32.mrb[0].mxu0
    %v551 = vadd.f32 0.0, %v550
    %v552 = vpop.f32.mrb[0].mxu0
    %553 = vmatprep.mubr.bf16.mxu0 0
    %554 = vmatmul.mubr.bf16.gmra.mrb[0].mxu0 %v325
    %v555 = vpop.f32.mrb[0].mxu0
    %v556 = vadd.f32 0.0, %v555
    %v557 = vpop.f32.mrb[0].mxu0
    %v558 = vpop.f32.mrb[0].mxu0
    %v559 = vadd.f32 0.0, %v558
    %v560 = vpop.f32.mrb[0].mxu0
    %561 = vmatprep.mubr.bf16.mxu0 0
    %562 = vmatmul.mubr.bf16.gmra.mrb[0].mxu0 %v326
    %v563 = vpop.f32.mrb[0].mxu0
    %v564 = vadd.f32 0.0, %v563
    %v565 = vpop.f32.mrb[0].mxu0
    %v566 = vpop.f32.mrb[0].mxu0
    %v567 = vadd.f32 0.0, %v566
    %v568 = vpop.f32.mrb[0].mxu0
    %569 = vmatprep.mubr.bf16.mxu0 0
    %570 = vmatmul.mubr.bf16.gmra.mrb[0].mxu0 %v327
    %v571 = vpop.f32.mrb[0].mxu0
    %v572 = vadd.f32 0.0, %v571
    %v573 = vpop.f32.mrb[0].mxu0
    %v574 = vpop.f32.mrb[0].mxu0
    %v575 = vadd.f32 0.0, %v574
    %v576 = vpop.f32.mrb[0].mxu0
    %577 = vmatprep.mubr.bf16.mxu0 0
    %578 = vmatmul.mubr.bf16.gmra.mrb[0].mxu0 %v328
    %v579 = vpop.f32.mrb[0].mxu0
    %v580 = vadd.f32 0.0, %v579
    %v581 = vpop.f32.mrb[0].mxu0
    %v582 = vpop.f32.mrb[0].mxu0
    %v583 = vadd.f32 0.0, %v582
    %v584 = vpop.f32.mrb[0].mxu0
    %585 = vmatprep.mubr.bf16.mxu0 0
    %586 = vmatmul.mubr.bf16.gmra.mrb[0].mxu0 %v329
    %v587 = vpop.f32.mrb[0].mxu0
    %v588 = vadd.f32 0.0, %v587
    %v589 = vpop.f32.mrb[0].mxu0
    %v590 = vpop.f32.mrb[0].mxu0
    %v591 = vadd.f32 0.0, %v590
    %v592 = vpop.f32.mrb[0].mxu0
    %593 = vmatprep.mubr.bf16.mxu0 0
    %594 = vmatmul.mubr.bf16.gmra.mrb[0].mxu0 %v330
    %v595 = vpop.f32.mrb[0].mxu0
    %v596 = vadd.f32 0.0, %v595
    %v597 = vpop.f32.mrb[0].mxu0
    %v598 = vpop.f32.mrb[0].mxu0
    %v599 = vadd.f32 0.0, %v598
    %v600 = vpop.f32.mrb[0].mxu0
    %601 = vmatprep.mubr.bf16.mxu0 0
    %602 = vmatmul.mubr.bf16.gmra.mrb[0].mxu0 %v331
    %v603 = vpop.f32.mrb[0].mxu0
    %v604 = vadd.f32 0.0, %v603
    %v605 = vpop.f32.mrb[0].mxu0
    %v606 = vpop.f32.mrb[0].mxu0
    %v607 = vadd.f32 0.0, %v606
    %v608 = vpop.f32.mrb[0].mxu0
    %609 = vmatprep.mubr.bf16.mxu0 0
    %610 = vmatmul.mubr.bf16.gmra.mrb[0].mxu0 %v332
    %v611 = vpop.f32.mrb[0].mxu0
    %v612 = vadd.f32 0.0, %v611
    %v613 = vpop.f32.mrb[0].mxu0
    %v614 = vpop.f32.mrb[0].mxu0
    %v615 = vadd.f32 0.0, %v614
    %v616 = vpop.f32.mrb[0].mxu0
    %617 = vmatprep.mubr.bf16.mxu0 0
    %618 = vmatmul.mubr.bf16.gmra.mrb[0].mxu0 %v333
    %v619 = vpop.f32.mrb[0].mxu0
    %v620 = vadd.f32 0.0, %v619
    %v621 = vpop.f32.mrb[0].mxu0
    %v622 = vpop.f32.mrb[0].mxu0
    %v623 = vadd.f32 0.0, %v622
    %v624 = vpop.f32.mrb[0].mxu0
    %625 = vmatprep.mubr.bf16.mxu0 0
    %626 = vmatmul.mubr.bf16.gmra.mrb[0].mxu0 %v334
    %v627 = vpop.f32.mrb[0].mxu0
    %v628 = vadd.f32 0.0, %v627
    %v629 = vpop.f32.mrb[0].mxu0
    %v630 = vpop.f32.mrb[0].mxu0
    %v631 = vadd.f32 0.0, %v630
    %v632 = vpop.f32.mrb[0].mxu0
    %633 = vmatprep.mubr.bf16.mxu0 0
    %634 = vmatmul.mubr.bf16.gmra.mrb[0].mxu0 %v335
    %v635 = vpop.f32.mrb[0].mxu0
    %v636 = vadd.f32 0.0, %v635
    %v637 = vpop.f32.mrb[0].mxu0
    %v638 = vpop.f32.mrb[0].mxu0
    %v639 = vadd.f32 0.0, %v638
    %v640 = vpop.f32.mrb[0].mxu0
    %641 = vmatprep.mubr.bf16.mxu0 0
    %642 = vmatmul.mubr.bf16.gmra.mrb[0].mxu0 %v336
    %v643 = vpop.f32.mrb[0].mxu0
    %v644 = vadd.f32 0.0, %v643
    %v645 = vpop.f32.mrb[0].mxu0
    %v646 = vpop.f32.mrb[0].mxu0
    %v647 = vadd.f32 0.0, %v646
    %v648 = vpop.f32.mrb[0].mxu0
    %649 = vmatprep.mubr.bf16.mxu0 0
    %650 = vmatmul.mubr.bf16.gmra.mrb[0].mxu0 %v337
    %v651 = vpop.f32.mrb[0].mxu0
    %v652 = vadd.f32 0.0, %v651
    %v653 = vpop.f32.mrb[0].mxu0
    %v654 = vpop.f32.mrb[0].mxu0
    %v655 = vadd.f32 0.0, %v654
    %v656 = vpop.f32.mrb[0].mxu0
    %657 = vmatprep.mubr.bf16.mxu0 0
    %658 = vmatmul.mubr.bf16.gmra.mrb[0].mxu0 %v338
    %v659 = vpop.f32.mrb[0].mxu0
    %v660 = vadd.f32 0.0, %v659
    %v661 = vpop.f32.mrb[0].mxu0
    %v662 = vpop.f32.mrb[0].mxu0
    %v663 = vadd.f32 0.0, %v662
    %v664 = vpop.f32.mrb[0].mxu0
    %665 = vmatprep.mubr.bf16.mxu0 0
    %666 = vmatmul.mubr.bf16.gmra.mrb[0].mxu0 %v339
    %v667 = vpop.f32.mrb[0].mxu0
    %v668 = vadd.f32 0.0, %v667
    %v669 = vpop.f32.mrb[0].mxu0
    %v670 = vpop.f32.mrb[0].mxu0
    %v671 = vadd.f32 0.0, %v670
    %v672 = vpop.f32.mrb[0].mxu0
    %673 = vmatprep.mubr.bf16.mxu0 0
    %674 = vmatmul.mubr.bf16.gmra.mrb[0].mxu0 %v340
    %v675 = vpop.f32.mrb[0].mxu0
    %v676 = vadd.f32 0.0, %v675
    %v677 = vpop.f32.mrb[0].mxu0
    %v678 = vpop.f32.mrb[0].mxu0
    %v679 = vadd.f32 0.0, %v678
    %v680 = vpop.f32.mrb[0].mxu0
    %681 = vmatprep.mubr.bf16.mxu0 0
    %682 = vmatmul.mubr.bf16.gmra.mrb[0].mxu0 %v341
    %v683 = vpop.f32.mrb[0].mxu0
    %v684 = vadd.f32 0.0, %v683
    %v685 = vpop.f32.mrb[0].mxu0
    %v686 = vpop.f32.mrb[0].mxu0
    %v687 = vadd.f32 0.0, %v686
    %v688 = vpop.f32.mrb[0].mxu0
    %689 = vmatprep.mubr.bf16.mxu0 0
    %690 = vmatmul.mubr.bf16.gmra.mrb[0].mxu0 %v342
    %v691 = vpop.f32.mrb[0].mxu0
    %v692 = vadd.f32 0.0, %v691
    %v693 = vpop.f32.mrb[0].mxu0
    %v694 = vpop.f32.mrb[0].mxu0
    %v695 = vadd.f32 0.0, %v694
    %v696 = vpop.f32.mrb[0].mxu0
    %697 = vmatprep.mubr.bf16.mxu0 0
    %698 = vmatmul.mubr.bf16.gmra.mrb[0].mxu0 %v343
    %v699 = vpop.f32.mrb[0].mxu0
    %v700 = vadd.f32 0.0, %v699
    %v701 = vpop.f32.mrb[0].mxu0
    %v702 = vpop.f32.mrb[0].mxu0
    %v703 = vadd.f32 0.0, %v702
    %v704 = vpop.f32.mrb[0].mxu0
    %705 = vmatprep.mubr.bf16.mxu0 0
    %706 = vmatmul.mubr.bf16.gmra.mrb[0].mxu0 %v344
    %v707 = vpop.f32.mrb[0].mxu0
    %v708 = vadd.f32 0.0, %v707
    %v709 = vpop.f32.mrb[0].mxu0
    %v710 = vpop.f32.mrb[0].mxu0
    %v711 = vadd.f32 0.0, %v710
    %v712 = vpop.f32.mrb[0].mxu0
    %713 = vdwg.mxu0
    %v714 = vpack.c.bf16 %v463, %v460
    %v715 = vpack.c.bf16 %v471, %v468
    %v716 = vpack.c.bf16 %v479, %v476
    %v717 = vpack.c.bf16 %v487, %v484
    %v718 = vpack.c.bf16 %v495, %v492
    %v719 = vpack.c.bf16 %v503, %v500
    %v720 = vpack.c.bf16 %v511, %v508
    %v721 = vpack.c.bf16 %v519, %v516
    %v722 = vpack.c.bf16 %v527, %v524
    %v723 = vpack.c.bf16 %v535, %v532
    %v724 = vpack.c.bf16 %v543, %v540
    %v725 = vpack.c.bf16 %v551, %v548
    %v726 = vpack.c.bf16 %v559, %v556
    %v727 = vpack.c.bf16 %v567, %v564
    %v728 = vpack.c.bf16 %v575, %v572
    %v729 = vpack.c.bf16 %v583, %v580
    %v730 = vpack.c.bf16 %v591, %v588
    %v731 = vpack.c.bf16 %v599, %v596
    %v732 = vpack.c.bf16 %v607, %v604
    %v733 = vpack.c.bf16 %v615, %v612
    %v734 = vpack.c.bf16 %v623, %v620
    %v735 = vpack.c.bf16 %v631, %v628
    %v736 = vpack.c.bf16 %v639, %v636
    %v737 = vpack.c.bf16 %v647, %v644
    %v738 = vpack.c.bf16 %v655, %v652
    %v739 = vpack.c.bf16 %v663, %v660
    %v740 = vpack.c.bf16 %v671, %v668
    %v741 = vpack.c.bf16 %v679, %v676
    %v742 = vpack.c.bf16 %v687, %v684
    %v743 = vpack.c.bf16 %v695, %v692
    %v744 = vpack.c.bf16 %v703, %v700
    %v745 = vpack.c.bf16 %v711, %v708
    %v746 = vld [vmem:[#allocation2] sm:$0xff]
    %v747 = vld [vmem:[#allocation2 + $0x8] sm:$0xff]
    %v748 = vld [vmem:[#allocation2 + $0x10] sm:$0xff]
    %v749 = vld [vmem:[#allocation2 + $0x18] sm:$0xff]
    %v750 = vld [vmem:[#allocation2 + $0x20] sm:$0xff]
    %v751 = vld [vmem:[#allocation2 + $0x28] sm:$0xff]
    %v752 = vld [vmem:[#allocation2 + $0x30] sm:$0xff]
    %v753 = vld [vmem:[#allocation2 + $0x38] sm:$0xff]
    %v754 = vld [vmem:[#allocation2 + $0x40] sm:$0xff]
    %v755 = vld [vmem:[#allocation2 + $0x48] sm:$0xff]
    %v756 = vld [vmem:[#allocation2 + $0x50] sm:$0xff]
    %v757 = vld [vmem:[#allocation2 + $0x58] sm:$0xff]
    %v758 = vld [vmem:[#allocation2 + $0x60] sm:$0xff]
    %v759 = vld [vmem:[#allocation2 + $0x68] sm:$0xff]
    %v760 = vld [vmem:[#allocation2 + $0x70] sm:$0xff]
    %v761 = vld [vmem:[#allocation2 + $0x78] sm:$0xff]
    %v762 = vld [vmem:[#allocation2 + $0x80] sm:$0xff]
    %v763 = vld [vmem:[#allocation2 + $0x88] sm:$0xff]
    %v764 = vld [vmem:[#allocation2 + $0x90] sm:$0xff]
    %v765 = vld [vmem:[#allocation2 + $0x98] sm:$0xff]
    %v766 = vld [vmem:[#allocation2 + $0xa0] sm:$0xff]
    %v767 = vld [vmem:[#allocation2 + $0xa8] sm:$0xff]
    %v768 = vld [vmem:[#allocation2 + $0xb0] sm:$0xff]
    %v769 = vld [vmem:[#allocation2 + $0xb8] sm:$0xff]
    %v770 = vld [vmem:[#allocation2 + $0xc0] sm:$0xff]
    %v771 = vld [vmem:[#allocation2 + $0xc8] sm:$0xff]
    %v772 = vld [vmem:[#allocation2 + $0xd0] sm:$0xff]
    %v773 = vld [vmem:[#allocation2 + $0xd8] sm:$0xff]
    %v774 = vld [vmem:[#allocation2 + $0xe0] sm:$0xff]
    %v775 = vld [vmem:[#allocation2 + $0xe8] sm:$0xff]
    %v776 = vld [vmem:[#allocation2 + $0xf0] sm:$0xff]
    %v777 = vld [vmem:[#allocation2 + $0xf8] sm:$0xff]
    %v778 = vld [vmem:[#allocation2 + $0x100] sm:$0xff]
    %v779 = vld [vmem:[#allocation2 + $0x108] sm:$0xff]
    %v780 = vld [vmem:[#allocation2 + $0x110] sm:$0xff]
    %v781 = vld [vmem:[#allocation2 + $0x118] sm:$0xff]
    %v782 = vld [vmem:[#allocation2 + $0x120] sm:$0xff]
    %v783 = vld [vmem:[#allocation2 + $0x128] sm:$0xff]
    %v784 = vld [vmem:[#allocation2 + $0x130] sm:$0xff]
    %v785 = vld [vmem:[#allocation2 + $0x138] sm:$0xff]
    %v786 = vld [vmem:[#allocation2 + $0x140] sm:$0xff]
    %v787 = vld [vmem:[#allocation2 + $0x148] sm:$0xff]
    %v788 = vld [vmem:[#allocation2 + $0x150] sm:$0xff]
    %v789 = vld [vmem:[#allocation2 + $0x158] sm:$0xff]
    %v790 = vld [vmem:[#allocation2 + $0x160] sm:$0xff]
    %v791 = vld [vmem:[#allocation2 + $0x168] sm:$0xff]
    %v792 = vld [vmem:[#allocation2 + $0x170] sm:$0xff]
    %v793 = vld [vmem:[#allocation2 + $0x178] sm:$0xff]
    %v794 = vld [vmem:[#allocation2 + $0x180] sm:$0xff]
    %v795 = vld [vmem:[#allocation2 + $0x188] sm:$0xff]
    %v796 = vld [vmem:[#allocation2 + $0x190] sm:$0xff]
    %v797 = vld [vmem:[#allocation2 + $0x198] sm:$0xff]
    %v798 = vld [vmem:[#allocation2 + $0x1a0] sm:$0xff]
    %v799 = vld [vmem:[#allocation2 + $0x1a8] sm:$0xff]
    %v800 = vld [vmem:[#allocation2 + $0x1b0] sm:$0xff]
    %v801 = vld [vmem:[#allocation2 + $0x1b8] sm:$0xff]
    %v802 = vld [vmem:[#allocation2 + $0x1c0] sm:$0xff]
    %v803 = vld [vmem:[#allocation2 + $0x1c8] sm:$0xff]
    %v804 = vld [vmem:[#allocation2 + $0x1d0] sm:$0xff]
    %v805 = vld [vmem:[#allocation2 + $0x1d8] sm:$0xff]
    %v806 = vld [vmem:[#allocation2 + $0x1e0] sm:$0xff]
    %v807 = vld [vmem:[#allocation2 + $0x1e8] sm:$0xff]
    %v808 = vld [vmem:[#allocation2 + $0x1f0] sm:$0xff]
    %v809 = vld [vmem:[#allocation2 + $0x1f8] sm:$0xff]
    %v810 = vld [vmem:[#allocation3] sm:$0xff]
    %v811 = vld [vmem:[#allocation3 + $0x8] sm:$0xff]
    %v812 = vld [vmem:[#allocation3 + $0x10] sm:$0xff]
    %v813 = vld [vmem:[#allocation3 + $0x18] sm:$0xff]
    %v814 = vld [vmem:[#allocation3 + $0x20] sm:$0xff]
    %v815 = vld [vmem:[#allocation3 + $0x28] sm:$0xff]
    %v816 = vld [vmem:[#allocation3 + $0x30] sm:$0xff]
    %v817 = vld [vmem:[#allocation3 + $0x38] sm:$0xff]
    %v818 = vld [vmem:[#allocation3 + $0x40] sm:$0xff]
    %v819 = vld [vmem:[#allocation3 + $0x48] sm:$0xff]
    %v820 = vld [vmem:[#allocation3 + $0x50] sm:$0xff]
    %v821 = vld [vmem:[#allocation3 + $0x58] sm:$0xff]
    %v822 = vld [vmem:[#allocation3 + $0x60] sm:$0xff]
    %v823 = vld [vmem:[#allocation3 + $0x68] sm:$0xff]
    %v824 = vld [vmem:[#allocation3 + $0x70] sm:$0xff]
    %v825 = vld [vmem:[#allocation3 + $0x78] sm:$0xff]
    %v826 = vld [vmem:[#allocation3 + $0x80] sm:$0xff]
    %v827 = vld [vmem:[#allocation3 + $0x88] sm:$0xff]
    %v828 = vld [vmem:[#allocation3 + $0x90] sm:$0xff]
    %v829 = vld [vmem:[#allocation3 + $0x98] sm:$0xff]
    %v830 = vld [vmem:[#allocation3 + $0xa0] sm:$0xff]
    %v831 = vld [vmem:[#allocation3 + $0xa8] sm:$0xff]
    %v832 = vld [vmem:[#allocation3 + $0xb0] sm:$0xff]
    %v833 = vld [vmem:[#allocation3 + $0xb8] sm:$0xff]
    %v834 = vld [vmem:[#allocation3 + $0xc0] sm:$0xff]
    %v835 = vld [vmem:[#allocation3 + $0xc8] sm:$0xff]
    %v836 = vld [vmem:[#allocation3 + $0xd0] sm:$0xff]
    %v837 = vld [vmem:[#allocation3 + $0xd8] sm:$0xff]
    %v838 = vld [vmem:[#allocation3 + $0xe0] sm:$0xff]
    %v839 = vld [vmem:[#allocation3 + $0xe8] sm:$0xff]
    %v840 = vld [vmem:[#allocation3 + $0xf0] sm:$0xff]
    %v841 = vld [vmem:[#allocation3 + $0xf8] sm:$0xff]
    %v842 = vld [vmem:[#allocation3 + $0x100] sm:$0xff]
    %v843 = vld [vmem:[#allocation3 + $0x108] sm:$0xff]
    %v844 = vld [vmem:[#allocation3 + $0x110] sm:$0xff]
    %v845 = vld [vmem:[#allocation3 + $0x118] sm:$0xff]
    %v846 = vld [vmem:[#allocation3 + $0x120] sm:$0xff]
    %v847 = vld [vmem:[#allocation3 + $0x128] sm:$0xff]
    %v848 = vld [vmem:[#allocation3 + $0x130] sm:$0xff]
    %v849 = vld [vmem:[#allocation3 + $0x138] sm:$0xff]
    %v850 = vld [vmem:[#allocation3 + $0x140] sm:$0xff]
    %v851 = vld [vmem:[#allocation3 + $0x148] sm:$0xff]
    %v852 = vld [vmem:[#allocation3 + $0x150] sm:$0xff]
    %v853 = vld [vmem:[#allocation3 + $0x158] sm:$0xff]
    %v854 = vld [vmem:[#allocation3 + $0x160] sm:$0xff]
    %v855 = vld [vmem:[#allocation3 + $0x168] sm:$0xff]
    %v856 = vld [vmem:[#allocation3 + $0x170] sm:$0xff]
    %v857 = vld [vmem:[#allocation3 + $0x178] sm:$0xff]
    %v858 = vld [vmem:[#allocation3 + $0x180] sm:$0xff]
    %v859 = vld [vmem:[#allocation3 + $0x188] sm:$0xff]
    %v860 = vld [vmem:[#allocation3 + $0x190] sm:$0xff]
    %v861 = vld [vmem:[#allocation3 + $0x198] sm:$0xff]
    %v862 = vld [vmem:[#allocation3 + $0x1a0] sm:$0xff]
    %v863 = vld [vmem:[#allocation3 + $0x1a8] sm:$0xff]
    %v864 = vld [vmem:[#allocation3 + $0x1b0] sm:$0xff]
    %v865 = vld [vmem:[#allocation3 + $0x1b8] sm:$0xff]
    %v866 = vld [vmem:[#allocation3 + $0x1c0] sm:$0xff]
    %v867 = vld [vmem:[#allocation3 + $0x1c8] sm:$0xff]
    %v868 = vld [vmem:[#allocation3 + $0x1d0] sm:$0xff]
    %v869 = vld [vmem:[#allocation3 + $0x1d8] sm:$0xff]
    %v870 = vld [vmem:[#allocation3 + $0x1e0] sm:$0xff]
    %v871 = vld [vmem:[#allocation3 + $0x1e8] sm:$0xff]
    %v872 = vld [vmem:[#allocation3 + $0x1f0] sm:$0xff]
    %v873 = vld [vmem:[#allocation3 + $0x1f8] sm:$0xff]
    %v874 = vld [vmem:[#allocation3 + $0x200] sm:$0xff]
    %v875 = vld [vmem:[#allocation3 + $0x208] sm:$0xff]
    %v876 = vld [vmem:[#allocation3 + $0x210] sm:$0xff]
    %v877 = vld [vmem:[#allocation3 + $0x218] sm:$0xff]
    %v878 = vld [vmem:[#allocation3 + $0x220] sm:$0xff]
    %v879 = vld [vmem:[#allocation3 + $0x228] sm:$0xff]
    %v880 = vld [vmem:[#allocation3 + $0x230] sm:$0xff]
    %v881 = vld [vmem:[#allocation3 + $0x238] sm:$0xff]
    %v882 = vld [vmem:[#allocation3 + $0x240] sm:$0xff]
    %v883 = vld [vmem:[#allocation3 + $0x248] sm:$0xff]
    %v884 = vld [vmem:[#allocation3 + $0x250] sm:$0xff]
    %v885 = vld [vmem:[#allocation3 + $0x258] sm:$0xff]
    %v886 = vld [vmem:[#allocation3 + $0x260] sm:$0xff]
    %v887 = vld [vmem:[#allocation3 + $0x268] sm:$0xff]
    %v888 = vld [vmem:[#allocation3 + $0x270] sm:$0xff]
    %v889 = vld [vmem:[#allocation3 + $0x278] sm:$0xff]
    %v890 = vld [vmem:[#allocation3 + $0x280] sm:$0xff]
    %v891 = vld [vmem:[#allocation3 + $0x288] sm:$0xff]
    %v892 = vld [vmem:[#allocation3 + $0x290] sm:$0xff]
    %v893 = vld [vmem:[#allocation3 + $0x298] sm:$0xff]
    %v894 = vld [vmem:[#allocation3 + $0x2a0] sm:$0xff]
    %v895 = vld [vmem:[#allocation3 + $0x2a8] sm:$0xff]
    %v896 = vld [vmem:[#allocation3 + $0x2b0] sm:$0xff]
    %v897 = vld [vmem:[#allocation3 + $0x2b8] sm:$0xff]
    %v898 = vld [vmem:[#allocation3 + $0x2c0] sm:$0xff]
    %v899 = vld [vmem:[#allocation3 + $0x2c8] sm:$0xff]
    %v900 = vld [vmem:[#allocation3 + $0x2d0] sm:$0xff]
    %v901 = vld [vmem:[#allocation3 + $0x2d8] sm:$0xff]
    %v902 = vld [vmem:[#allocation3 + $0x2e0] sm:$0xff]
    %v903 = vld [vmem:[#allocation3 + $0x2e8] sm:$0xff]
    %v904 = vld [vmem:[#allocation3 + $0x2f0] sm:$0xff]
    %v905 = vld [vmem:[#allocation3 + $0x2f8] sm:$0xff]
    %v906 = vld [vmem:[#allocation3 + $0x300] sm:$0xff]
    %v907 = vld [vmem:[#allocation3 + $0x308] sm:$0xff]
    %v908 = vld [vmem:[#allocation3 + $0x310] sm:$0xff]
    %v909 = vld [vmem:[#allocation3 + $0x318] sm:$0xff]
    %v910 = vld [vmem:[#allocation3 + $0x320] sm:$0xff]
    %v911 = vld [vmem:[#allocation3 + $0x328] sm:$0xff]
    %v912 = vld [vmem:[#allocation3 + $0x330] sm:$0xff]
    %v913 = vld [vmem:[#allocation3 + $0x338] sm:$0xff]
    %v914 = vld [vmem:[#allocation3 + $0x340] sm:$0xff]
    %v915 = vld [vmem:[#allocation3 + $0x348] sm:$0xff]
    %v916 = vld [vmem:[#allocation3 + $0x350] sm:$0xff]
    %v917 = vld [vmem:[#allocation3 + $0x358] sm:$0xff]
    %v918 = vld [vmem:[#allocation3 + $0x360] sm:$0xff]
    %v919 = vld [vmem:[#allocation3 + $0x368] sm:$0xff]
    %v920 = vld [vmem:[#allocation3 + $0x370] sm:$0xff]
    %v921 = vld [vmem:[#allocation3 + $0x378] sm:$0xff]
    %v922 = vld [vmem:[#allocation3 + $0x380] sm:$0xff]
    %v923 = vld [vmem:[#allocation3 + $0x388] sm:$0xff]
    %v924 = vld [vmem:[#allocation3 + $0x390] sm:$0xff]
    %v925 = vld [vmem:[#allocation3 + $0x398] sm:$0xff]
    %v926 = vld [vmem:[#allocation3 + $0x3a0] sm:$0xff]
    %v927 = vld [vmem:[#allocation3 + $0x3a8] sm:$0xff]
    %v928 = vld [vmem:[#allocation3 + $0x3b0] sm:$0xff]
    %v929 = vld [vmem:[#allocation3 + $0x3b8] sm:$0xff]
    %v930 = vld [vmem:[#allocation3 + $0x3c0] sm:$0xff]
    %v931 = vld [vmem:[#allocation3 + $0x3c8] sm:$0xff]
    %v932 = vld [vmem:[#allocation3 + $0x3d0] sm:$0xff]
    %v933 = vld [vmem:[#allocation3 + $0x3d8] sm:$0xff]
    %v934 = vld [vmem:[#allocation3 + $0x3e0] sm:$0xff]
    %v935 = vld [vmem:[#allocation3 + $0x3e8] sm:$0xff]
    %v936 = vld [vmem:[#allocation3 + $0x3f0] sm:$0xff]
    %v937 = vld [vmem:[#allocation3 + $0x3f8] sm:$0xff]
    %v1066 = vunpack.c.l.b16 %v810
    %v1067 = vunpack.c.h.b16 %v810
    %v1068 = vunpack.c.l.b16 %v811
    %v1069 = vunpack.c.h.b16 %v811
    %v1070 = vunpack.c.l.b16 %v812
    %v1071 = vunpack.c.h.b16 %v812
    %v1072 = vunpack.c.l.b16 %v813
    %v1073 = vunpack.c.h.b16 %v813
    %v1074 = vunpack.c.l.b16 %v814
    %v1075 = vunpack.c.h.b16 %v814
    %v1076 = vunpack.c.l.b16 %v815
    %v1077 = vunpack.c.h.b16 %v815
    %v1078 = vunpack.c.l.b16 %v816
    %v1079 = vunpack.c.h.b16 %v816
    %v1080 = vunpack.c.l.b16 %v817
    %v1081 = vunpack.c.h.b16 %v817
    %v1082 = vunpack.c.l.b16 %v818
    %v1083 = vunpack.c.h.b16 %v818
    %v1084 = vunpack.c.l.b16 %v819
    %v1085 = vunpack.c.h.b16 %v819
    %v1086 = vunpack.c.l.b16 %v820
    %v1087 = vunpack.c.h.b16 %v820
    %v1088 = vunpack.c.l.b16 %v821
    %v1089 = vunpack.c.h.b16 %v821
    %v1090 = vunpack.c.l.b16 %v822
    %v1091 = vunpack.c.h.b16 %v822
    %v1092 = vunpack.c.l.b16 %v823
    %v1093 = vunpack.c.h.b16 %v823
    %v1094 = vunpack.c.l.b16 %v824
    %v1095 = vunpack.c.h.b16 %v824
    %v1096 = vunpack.c.l.b16 %v825
    %v1097 = vunpack.c.h.b16 %v825
    %v1098 = vunpack.c.l.b16 %v826
    %v1099 = vunpack.c.h.b16 %v826
    %v1100 = vunpack.c.l.b16 %v827
    %v1101 = vunpack.c.h.b16 %v827
    %v1102 = vunpack.c.l.b16 %v828
    %v1103 = vunpack.c.h.b16 %v828
    %v1104 = vunpack.c.l.b16 %v829
    %v1105 = vunpack.c.h.b16 %v829
    %v1106 = vunpack.c.l.b16 %v830
    %v1107 = vunpack.c.h.b16 %v830
    %v1108 = vunpack.c.l.b16 %v831
    %v1109 = vunpack.c.h.b16 %v831
    %v1110 = vunpack.c.l.b16 %v832
    %v1111 = vunpack.c.h.b16 %v832
    %v1112 = vunpack.c.l.b16 %v833
    %v1113 = vunpack.c.h.b16 %v833
    %v1114 = vunpack.c.l.b16 %v834
    %v1115 = vunpack.c.h.b16 %v834
    %v1116 = vunpack.c.l.b16 %v835
    %v1117 = vunpack.c.h.b16 %v835
    %v1118 = vunpack.c.l.b16 %v836
    %v1119 = vunpack.c.h.b16 %v836
    %v1120 = vunpack.c.l.b16 %v837
    %v1121 = vunpack.c.h.b16 %v837
    %v1122 = vunpack.c.l.b16 %v838
    %v1123 = vunpack.c.h.b16 %v838
    %v1124 = vunpack.c.l.b16 %v839
    %v1125 = vunpack.c.h.b16 %v839
    %v1126 = vunpack.c.l.b16 %v840
    %v1127 = vunpack.c.h.b16 %v840
    %v1128 = vunpack.c.l.b16 %v841
    %v1129 = vunpack.c.h.b16 %v841
    %v1130 = vunpack.c.l.b16 %v842
    %v1131 = vunpack.c.h.b16 %v842
    %v1132 = vunpack.c.l.b16 %v843
    %v1133 = vunpack.c.h.b16 %v843
    %v1134 = vunpack.c.l.b16 %v844
    %v1135 = vunpack.c.h.b16 %v844
    %v1136 = vunpack.c.l.b16 %v845
    %v1137 = vunpack.c.h.b16 %v845
    %v1138 = vunpack.c.l.b16 %v846
    %v1139 = vunpack.c.h.b16 %v846
    %v1140 = vunpack.c.l.b16 %v847
    %v1141 = vunpack.c.h.b16 %v847
    %v1142 = vunpack.c.l.b16 %v848
    %v1143 = vunpack.c.h.b16 %v848
    %v1144 = vunpack.c.l.b16 %v849
    %v1145 = vunpack.c.h.b16 %v849
    %v1146 = vunpack.c.l.b16 %v850
    %v1147 = vunpack.c.h.b16 %v850
    %v1148 = vunpack.c.l.b16 %v851
    %v1149 = vunpack.c.h.b16 %v851
    %v1150 = vunpack.c.l.b16 %v852
    %v1151 = vunpack.c.h.b16 %v852
    %v1152 = vunpack.c.l.b16 %v853
    %v1153 = vunpack.c.h.b16 %v853
    %v1154 = vunpack.c.l.b16 %v854
    %v1155 = vunpack.c.h.b16 %v854
    %v1156 = vunpack.c.l.b16 %v855
    %v1157 = vunpack.c.h.b16 %v855
    %v1158 = vunpack.c.l.b16 %v856
    %v1159 = vunpack.c.h.b16 %v856
    %v1160 = vunpack.c.l.b16 %v857
    %v1161 = vunpack.c.h.b16 %v857
    %v1162 = vunpack.c.l.b16 %v858
    %v1163 = vunpack.c.h.b16 %v858
    %v1164 = vunpack.c.l.b16 %v859
    %v1165 = vunpack.c.h.b16 %v859
    %v1166 = vunpack.c.l.b16 %v860
    %v1167 = vunpack.c.h.b16 %v860
    %v1168 = vunpack.c.l.b16 %v861
    %v1169 = vunpack.c.h.b16 %v861
    %v1170 = vunpack.c.l.b16 %v862
    %v1171 = vunpack.c.h.b16 %v862
    %v1172 = vunpack.c.l.b16 %v863
    %v1173 = vunpack.c.h.b16 %v863
    %v1174 = vunpack.c.l.b16 %v864
    %v1175 = vunpack.c.h.b16 %v864
    %v1176 = vunpack.c.l.b16 %v865
    %v1177 = vunpack.c.h.b16 %v865
    %v1178 = vunpack.c.l.b16 %v866
    %v1179 = vunpack.c.h.b16 %v866
    %v1180 = vunpack.c.l.b16 %v867
    %v1181 = vunpack.c.h.b16 %v867
    %v1182 = vunpack.c.l.b16 %v868
    %v1183 = vunpack.c.h.b16 %v868
    %v1184 = vunpack.c.l.b16 %v869
    %v1185 = vunpack.c.h.b16 %v869
    %v1186 = vunpack.c.l.b16 %v870
    %v1187 = vunpack.c.h.b16 %v870
    %v1188 = vunpack.c.l.b16 %v871
    %v1189 = vunpack.c.h.b16 %v871
    %v1190 = vunpack.c.l.b16 %v872
    %v1191 = vunpack.c.h.b16 %v872
    %v1192 = vunpack.c.l.b16 %v873
    %v1193 = vunpack.c.h.b16 %v873
    %v1194 = vunpack.c.l.b16 %v874
    %v1195 = vunpack.c.h.b16 %v874
    %v1196 = vunpack.c.l.b16 %v875
    %v1197 = vunpack.c.h.b16 %v875
    %v1198 = vunpack.c.l.b16 %v876
    %v1199 = vunpack.c.h.b16 %v876
    %v1200 = vunpack.c.l.b16 %v877
    %v1201 = vunpack.c.h.b16 %v877
    %v1202 = vunpack.c.l.b16 %v878
    %v1203 = vunpack.c.h.b16 %v878
    %v1204 = vunpack.c.l.b16 %v879
    %v1205 = vunpack.c.h.b16 %v879
    %v1206 = vunpack.c.l.b16 %v880
    %v1207 = vunpack.c.h.b16 %v880
    %v1208 = vunpack.c.l.b16 %v881
    %v1209 = vunpack.c.h.b16 %v881
    %v1210 = vunpack.c.l.b16 %v882
    %v1211 = vunpack.c.h.b16 %v882
    %v1212 = vunpack.c.l.b16 %v883
    %v1213 = vunpack.c.h.b16 %v883
    %v1214 = vunpack.c.l.b16 %v884
    %v1215 = vunpack.c.h.b16 %v884
    %v1216 = vunpack.c.l.b16 %v885
    %v1217 = vunpack.c.h.b16 %v885
    %v1218 = vunpack.c.l.b16 %v886
    %v1219 = vunpack.c.h.b16 %v886
    %v1220 = vunpack.c.l.b16 %v887
    %v1221 = vunpack.c.h.b16 %v887
    %v1222 = vunpack.c.l.b16 %v888
    %v1223 = vunpack.c.h.b16 %v888
    %v1224 = vunpack.c.l.b16 %v889
    %v1225 = vunpack.c.h.b16 %v889
    %v1226 = vunpack.c.l.b16 %v890
    %v1227 = vunpack.c.h.b16 %v890
    %v1228 = vunpack.c.l.b16 %v891
    %v1229 = vunpack.c.h.b16 %v891
    %v1230 = vunpack.c.l.b16 %v892
    %v1231 = vunpack.c.h.b16 %v892
    %v1232 = vunpack.c.l.b16 %v893
    %v1233 = vunpack.c.h.b16 %v893
    %v1234 = vunpack.c.l.b16 %v894
    %v1235 = vunpack.c.h.b16 %v894
    %v1236 = vunpack.c.l.b16 %v895
    %v1237 = vunpack.c.h.b16 %v895
    %v1238 = vunpack.c.l.b16 %v896
    %v1239 = vunpack.c.h.b16 %v896
    %v1240 = vunpack.c.l.b16 %v897
    %v1241 = vunpack.c.h.b16 %v897
    %v1242 = vunpack.c.l.b16 %v898
    %v1243 = vunpack.c.h.b16 %v898
    %v1244 = vunpack.c.l.b16 %v899
    %v1245 = vunpack.c.h.b16 %v899
    %v1246 = vunpack.c.l.b16 %v900
    %v1247 = vunpack.c.h.b16 %v900
    %v1248 = vunpack.c.l.b16 %v901
    %v1249 = vunpack.c.h.b16 %v901
    %v1250 = vunpack.c.l.b16 %v902
    %v1251 = vunpack.c.h.b16 %v902
    %v1252 = vunpack.c.l.b16 %v903
    %v1253 = vunpack.c.h.b16 %v903
    %v1254 = vunpack.c.l.b16 %v904
    %v1255 = vunpack.c.h.b16 %v904
    %v1256 = vunpack.c.l.b16 %v905
    %v1257 = vunpack.c.h.b16 %v905
    %v1258 = vunpack.c.l.b16 %v906
    %v1259 = vunpack.c.h.b16 %v906
    %v1260 = vunpack.c.l.b16 %v907
    %v1261 = vunpack.c.h.b16 %v907
    %v1262 = vunpack.c.l.b16 %v908
    %v1263 = vunpack.c.h.b16 %v908
    %v1264 = vunpack.c.l.b16 %v909
    %v1265 = vunpack.c.h.b16 %v909
    %v1266 = vunpack.c.l.b16 %v910
    %v1267 = vunpack.c.h.b16 %v910
    %v1268 = vunpack.c.l.b16 %v911
    %v1269 = vunpack.c.h.b16 %v911
    %v1270 = vunpack.c.l.b16 %v912
    %v1271 = vunpack.c.h.b16 %v912
    %v1272 = vunpack.c.l.b16 %v913
    %v1273 = vunpack.c.h.b16 %v913
    %v1274 = vunpack.c.l.b16 %v914
    %v1275 = vunpack.c.h.b16 %v914
    %v1276 = vunpack.c.l.b16 %v915
    %v1277 = vunpack.c.h.b16 %v915
    %v1278 = vunpack.c.l.b16 %v916
    %v1279 = vunpack.c.h.b16 %v916
    %v1280 = vunpack.c.l.b16 %v917
    %v1281 = vunpack.c.h.b16 %v917
    %v1282 = vunpack.c.l.b16 %v918
    %v1283 = vunpack.c.h.b16 %v918
    %v1284 = vunpack.c.l.b16 %v919
    %v1285 = vunpack.c.h.b16 %v919
    %v1286 = vunpack.c.l.b16 %v920
    %v1287 = vunpack.c.h.b16 %v920
    %v1288 = vunpack.c.l.b16 %v921
    %v1289 = vunpack.c.h.b16 %v921
    %v1290 = vunpack.c.l.b16 %v922
    %v1291 = vunpack.c.h.b16 %v922
    %v1292 = vunpack.c.l.b16 %v923
    %v1293 = vunpack.c.h.b16 %v923
    %v1294 = vunpack.c.l.b16 %v924
    %v1295 = vunpack.c.h.b16 %v924
    %v1296 = vunpack.c.l.b16 %v925
    %v1297 = vunpack.c.h.b16 %v925
    %v1298 = vunpack.c.l.b16 %v926
    %v1299 = vunpack.c.h.b16 %v926
    %v1300 = vunpack.c.l.b16 %v927
    %v1301 = vunpack.c.h.b16 %v927
    %v1302 = vunpack.c.l.b16 %v928
    %v1303 = vunpack.c.h.b16 %v928
    %v1304 = vunpack.c.l.b16 %v929
    %v1305 = vunpack.c.h.b16 %v929
    %v1306 = vunpack.c.l.b16 %v930
    %v1307 = vunpack.c.h.b16 %v930
    %v1308 = vunpack.c.l.b16 %v931
    %v1309 = vunpack.c.h.b16 %v931
    %v1310 = vunpack.c.l.b16 %v932
    %v1311 = vunpack.c.h.b16 %v932
    %v1312 = vunpack.c.l.b16 %v933
    %v1313 = vunpack.c.h.b16 %v933
    %v1314 = vunpack.c.l.b16 %v934
    %v1315 = vunpack.c.h.b16 %v934
    %v1316 = vunpack.c.l.b16 %v935
    %v1317 = vunpack.c.h.b16 %v935
    %v1318 = vunpack.c.l.b16 %v936
    %v1319 = vunpack.c.h.b16 %v936
    %v1320 = vunpack.c.l.b16 %v937
    %v1321 = vunpack.c.h.b16 %v937
    %v1322 = vpack.c.b16 %v1070, %v1066
    %v1323 = vpack.c.b16 %v1071, %v1067
    %v1324 = vpack.c.b16 %v1072, %v1068
    %v1325 = vpack.c.b16 %v1073, %v1069
    %v1326 = vpack.c.b16 %v1078, %v1074
    %v1327 = vpack.c.b16 %v1079, %v1075
    %v1328 = vpack.c.b16 %v1080, %v1076
    %v1329 = vpack.c.b16 %v1081, %v1077
    %v1330 = vpack.c.b16 %v1086, %v1082
    %v1331 = vpack.c.b16 %v1087, %v1083
    %v1332 = vpack.c.b16 %v1088, %v1084
    %v1333 = vpack.c.b16 %v1089, %v1085
    %v1334 = vpack.c.b16 %v1094, %v1090
    %v1335 = vpack.c.b16 %v1095, %v1091
    %v1336 = vpack.c.b16 %v1096, %v1092
    %v1337 = vpack.c.b16 %v1097, %v1093
    %v1338 = vpack.c.b16 %v1102, %v1098
    %v1339 = vpack.c.b16 %v1103, %v1099
    %v1340 = vpack.c.b16 %v1104, %v1100
    %v1341 = vpack.c.b16 %v1105, %v1101
    %v1342 = vpack.c.b16 %v1110, %v1106
    %v1343 = vpack.c.b16 %v1111, %v1107
    %v1344 = vpack.c.b16 %v1112, %v1108
    %v1345 = vpack.c.b16 %v1113, %v1109
    %v1346 = vpack.c.b16 %v1118, %v1114
    %v1347 = vpack.c.b16 %v1119, %v1115
    %v1348 = vpack.c.b16 %v1120, %v1116
    %v1349 = vpack.c.b16 %v1121, %v1117
    %v1350 = vpack.c.b16 %v1126, %v1122
    %v1351 = vpack.c.b16 %v1127, %v1123
    %v1352 = vpack.c.b16 %v1128, %v1124
    %v1353 = vpack.c.b16 %v1129, %v1125
    %v1354 = vpack.c.b16 %v1134, %v1130
    %v1355 = vpack.c.b16 %v1135, %v1131
    %v1356 = vpack.c.b16 %v1136, %v1132
    %v1357 = vpack.c.b16 %v1137, %v1133
    %v1358 = vpack.c.b16 %v1142, %v1138
    %v1359 = vpack.c.b16 %v1143, %v1139
    %v1360 = vpack.c.b16 %v1144, %v1140
    %v1361 = vpack.c.b16 %v1145, %v1141
    %v1362 = vpack.c.b16 %v1150, %v1146
    %v1363 = vpack.c.b16 %v1151, %v1147
    %v1364 = vpack.c.b16 %v1152, %v1148
    %v1365 = vpack.c.b16 %v1153, %v1149
    %v1366 = vpack.c.b16 %v1158, %v1154
    %v1367 = vpack.c.b16 %v1159, %v1155
    %v1368 = vpack.c.b16 %v1160, %v1156
    %v1369 = vpack.c.b16 %v1161, %v1157
    %v1370 = vpack.c.b16 %v1166, %v1162
    %v1371 = vpack.c.b16 %v1167, %v1163
    %v1372 = vpack.c.b16 %v1168, %v1164
    %v1373 = vpack.c.b16 %v1169, %v1165
    %v1374 = vpack.c.b16 %v1174, %v1170
    %v1375 = vpack.c.b16 %v1175, %v1171
    %v1376 = vpack.c.b16 %v1176, %v1172
    %v1377 = vpack.c.b16 %v1177, %v1173
    %v1378 = vpack.c.b16 %v1182, %v1178
    %v1379 = vpack.c.b16 %v1183, %v1179
    %v1380 = vpack.c.b16 %v1184, %v1180
    %v1381 = vpack.c.b16 %v1185, %v1181
    %v1382 = vpack.c.b16 %v1190, %v1186
    %v1383 = vpack.c.b16 %v1191, %v1187
    %v1384 = vpack.c.b16 %v1192, %v1188
    %v1385 = vpack.c.b16 %v1193, %v1189
    %v1386 = vpack.c.b16 %v1198, %v1194
    %v1387 = vpack.c.b16 %v1199, %v1195
    %v1388 = vpack.c.b16 %v1200, %v1196
    %v1389 = vpack.c.b16 %v1201, %v1197
    %v1390 = vpack.c.b16 %v1206, %v1202
    %v1391 = vpack.c.b16 %v1207, %v1203
    %v1392 = vpack.c.b16 %v1208, %v1204
    %v1393 = vpack.c.b16 %v1209, %v1205
    %v1394 = vpack.c.b16 %v1214, %v1210
    %v1395 = vpack.c.b16 %v1215, %v1211
    %v1396 = vpack.c.b16 %v1216, %v1212
    %v1397 = vpack.c.b16 %v1217, %v1213
    %v1398 = vpack.c.b16 %v1222, %v1218
    %v1399 = vpack.c.b16 %v1223, %v1219
    %v1400 = vpack.c.b16 %v1224, %v1220
    %v1401 = vpack.c.b16 %v1225, %v1221
    %v1402 = vpack.c.b16 %v1230, %v1226
    %v1403 = vpack.c.b16 %v1231, %v1227
    %v1404 = vpack.c.b16 %v1232, %v1228
    %v1405 = vpack.c.b16 %v1233, %v1229
    %v1406 = vpack.c.b16 %v1238, %v1234
    %v1407 = vpack.c.b16 %v1239, %v1235
    %v1408 = vpack.c.b16 %v1240, %v1236
    %v1409 = vpack.c.b16 %v1241, %v1237
    %v1410 = vpack.c.b16 %v1246, %v1242
    %v1411 = vpack.c.b16 %v1247, %v1243
    %v1412 = vpack.c.b16 %v1248, %v1244
    %v1413 = vpack.c.b16 %v1249, %v1245
    %v1414 = vpack.c.b16 %v1254, %v1250
    %v1415 = vpack.c.b16 %v1255, %v1251
    %v1416 = vpack.c.b16 %v1256, %v1252
    %v1417 = vpack.c.b16 %v1257, %v1253
    %v1418 = vpack.c.b16 %v1262, %v1258
    %v1419 = vpack.c.b16 %v1263, %v1259
    %v1420 = vpack.c.b16 %v1264, %v1260
    %v1421 = vpack.c.b16 %v1265, %v1261
    %v1422 = vpack.c.b16 %v1270, %v1266
    %v1423 = vpack.c.b16 %v1271, %v1267
    %v1424 = vpack.c.b16 %v1272, %v1268
    %v1425 = vpack.c.b16 %v1273, %v1269
    %v1426 = vpack.c.b16 %v1278, %v1274
    %v1427 = vpack.c.b16 %v1279, %v1275
    %v1428 = vpack.c.b16 %v1280, %v1276
    %v1429 = vpack.c.b16 %v1281, %v1277
    %v1430 = vpack.c.b16 %v1286, %v1282
    %v1431 = vpack.c.b16 %v1287, %v1283
    %v1432 = vpack.c.b16 %v1288, %v1284
    %v1433 = vpack.c.b16 %v1289, %v1285
    %v1434 = vpack.c.b16 %v1294, %v1290
    %v1435 = vpack.c.b16 %v1295, %v1291
    %v1436 = vpack.c.b16 %v1296, %v1292
    %v1437 = vpack.c.b16 %v1297, %v1293
    %v1438 = vpack.c.b16 %v1302, %v1298
    %v1439 = vpack.c.b16 %v1303, %v1299
    %v1440 = vpack.c.b16 %v1304, %v1300
    %v1441 = vpack.c.b16 %v1305, %v1301
    %v1442 = vpack.c.b16 %v1310, %v1306
    %v1443 = vpack.c.b16 %v1311, %v1307
    %v1444 = vpack.c.b16 %v1312, %v1308
    %v1445 = vpack.c.b16 %v1313, %v1309
    %v1446 = vpack.c.b16 %v1318, %v1314
    %v1447 = vpack.c.b16 %v1319, %v1315
    %v1448 = vpack.c.b16 %v1320, %v1316
    %v1449 = vpack.c.b16 %v1321, %v1317
    %1578 = vmatprep.subr.bf16.mxu0 0
    %1579 = vmatpush1.bf16.msra.mxu0 %v714
    %1580 = vmatprep.subr.bf16.mxu0 0
    %1581 = vmatpush1.bf16.msra.mxu0 %v715
    %1582 = vmatprep.subr.bf16.mxu0 0
    %1583 = vmatpush1.bf16.msra.mxu0 %v716
    %1584 = vmatprep.subr.bf16.mxu0 0
    %1585 = vmatpush1.bf16.msra.mxu0 %v717
    %1586 = vmatprep.subr.bf16.mxu0 0
    %1587 = vmatpush1.bf16.msra.mxu0 %v718
    %1588 = vmatprep.subr.bf16.mxu0 0
    %1589 = vmatpush1.bf16.msra.mxu0 %v719
    %1590 = vmatprep.subr.bf16.mxu0 0
    %1591 = vmatpush1.bf16.msra.mxu0 %v720
    %1592 = vmatprep.subr.bf16.mxu0 0
    %1593 = vmatpush1.bf16.msra.mxu0 %v721
    %1594 = vmatprep.subr.bf16.mxu0 0
    %1595 = vmatpush1.bf16.msra.mxu0 %v722
    %1596 = vmatprep.subr.bf16.mxu0 0
    %1597 = vmatpush1.bf16.msra.mxu0 %v723
    %1598 = vmatprep.subr.bf16.mxu0 0
    %1599 = vmatpush1.bf16.msra.mxu0 %v724
    %1600 = vmatprep.subr.bf16.mxu0 0
    %1601 = vmatpush1.bf16.msra.mxu0 %v725
    %1602 = vmatprep.subr.bf16.mxu0 0
    %1603 = vmatpush1.bf16.msra.mxu0 %v726
    %1604 = vmatprep.subr.bf16.mxu0 0
    %1605 = vmatpush1.bf16.msra.mxu0 %v727
    %1606 = vmatprep.subr.bf16.mxu0 0
    %1607 = vmatpush1.bf16.msra.mxu0 %v728
    %1608 = vmatprep.subr.bf16.mxu0 0
    %1609 = vmatpush1.bf16.msra.mxu0 %v729
    %1610 = vmatprep.mubr.bf16.mxu0 %v1323
    %1611 = vmatmul.mubr.bf16.gmra.mrb[0].mxu0 %v1322
    %v1612 = vpop.f32.mrb[0].mxu0
    %v1613 = vadd.f32 0.0, %v1612
    %v1614 = vpop.f32.mrb[0].mxu0
    %v1615 = vpop.f32.mrb[0].mxu0
    %v1616 = vadd.f32 0.0, %v1615
    %v1617 = vpop.f32.mrb[0].mxu0
    %1618 = vmatprep.mubr.bf16.mxu0 %v1327
    %1619 = vmatmul.mubr.bf16.gmra.mrb[0].mxu0 %v1326
    %v1620 = vpop.f32.mrb[0].mxu0
    %v1621 = vadd.f32 0.0, %v1620
    %v1622 = vpop.f32.mrb[0].mxu0
    %v1623 = vpop.f32.mrb[0].mxu0
    %v1624 = vadd.f32 0.0, %v1623
    %v1625 = vpop.f32.mrb[0].mxu0
    %1626 = vmatprep.mubr.bf16.mxu0 %v1331
    %1627 = vmatmul.mubr.bf16.gmra.mrb[0].mxu0 %v1330
    %v1628 = vpop.f32.mrb[0].mxu0
    %v1629 = vadd.f32 0.0, %v1628
    %v1630 = vpop.f32.mrb[0].mxu0
    %v1631 = vpop.f32.mrb[0].mxu0
    %v1632 = vadd.f32 0.0, %v1631
    %v1633 = vpop.f32.mrb[0].mxu0
    %1634 = vmatprep.mubr.bf16.mxu0 %v1335
    %1635 = vmatmul.mubr.bf16.gmra.mrb[0].mxu0 %v1334
    %v1636 = vpop.f32.mrb[0].mxu0
    %v1637 = vadd.f32 0.0, %v1636
    %v1638 = vpop.f32.mrb[0].mxu0
    %v1639 = vpop.f32.mrb[0].mxu0
    %v1640 = vadd.f32 0.0, %v1639
    %v1641 = vpop.f32.mrb[0].mxu0
    %1642 = vmatprep.mubr.bf16.mxu0 %v1339
    %1643 = vmatmul.mubr.bf16.gmra.mrb[0].mxu0 %v1338
    %v1644 = vpop.f32.mrb[0].mxu0
    %v1645 = vadd.f32 0.0, %v1644
    %v1646 = vpop.f32.mrb[0].mxu0
    %v1647 = vpop.f32.mrb[0].mxu0
    %v1648 = vadd.f32 0.0, %v1647
    %v1649 = vpop.f32.mrb[0].mxu0
    %1650 = vmatprep.mubr.bf16.mxu0 %v1343
    %1651 = vmatmul.mubr.bf16.gmra.mrb[0].mxu0 %v1342
    %v1652 = vpop.f32.mrb[0].mxu0
    %v1653 = vadd.f32 0.0, %v1652
    %v1654 = vpop.f32.mrb[0].mxu0
    %v1655 = vpop.f32.mrb[0].mxu0
    %v1656 = vadd.f32 0.0, %v1655
    %v1657 = vpop.f32.mrb[0].mxu0
    %1658 = vmatprep.mubr.bf16.mxu0 %v1347
    %1659 = vmatmul.mubr.bf16.gmra.mrb[0].mxu0 %v1346
    %v1660 = vpop.f32.mrb[0].mxu0
    %v1661 = vadd.f32 0.0, %v1660
    %v1662 = vpop.f32.mrb[0].mxu0
    %v1663 = vpop.f32.mrb[0].mxu0
    %v1664 = vadd.f32 0.0, %v1663
    %v1665 = vpop.f32.mrb[0].mxu0
    %1666 = vmatprep.mubr.bf16.mxu0 %v1351
    %1667 = vmatmul.mubr.bf16.gmra.mrb[0].mxu0 %v1350
    %v1668 = vpop.f32.mrb[0].mxu0
    %v1669 = vadd.f32 0.0, %v1668
    %v1670 = vpop.f32.mrb[0].mxu0
    %v1671 = vpop.f32.mrb[0].mxu0
    %v1672 = vadd.f32 0.0, %v1671
    %v1673 = vpop.f32.mrb[0].mxu0
    %1674 = vmatprep.mubr.bf16.mxu0 %v1355
    %1675 = vmatmul.mubr.bf16.gmra.mrb[0].mxu0 %v1354
    %v1676 = vpop.f32.mrb[0].mxu0
    %v1677 = vadd.f32 0.0, %v1676
    %v1678 = vpop.f32.mrb[0].mxu0
    %v1679 = vpop.f32.mrb[0].mxu0
    %v1680 = vadd.f32 0.0, %v1679
    %v1681 = vpop.f32.mrb[0].mxu0
    %1682 = vmatprep.mubr.bf16.mxu0 %v1359
    %1683 = vmatmul.mubr.bf16.gmra.mrb[0].mxu0 %v1358
    %v1684 = vpop.f32.mrb[0].mxu0
    %v1685 = vadd.f32 0.0, %v1684
    %v1686 = vpop.f32.mrb[0].mxu0
    %v1687 = vpop.f32.mrb[0].mxu0
    %v1688 = vadd.f32 0.0, %v1687
    %v1689 = vpop.f32.mrb[0].mxu0
    %1690 = vmatprep.mubr.bf16.mxu0 %v1363
    %1691 = vmatmul.mubr.bf16.gmra.mrb[0].mxu0 %v1362
    %v1692 = vpop.f32.mrb[0].mxu0
    %v1693 = vadd.f32 0.0, %v1692
    %v1694 = vpop.f32.mrb[0].mxu0
    %v1695 = vpop.f32.mrb[0].mxu0
    %v1696 = vadd.f32 0.0, %v1695
    %v1697 = vpop.f32.mrb[0].mxu0
    %1698 = vmatprep.mubr.bf16.mxu0 %v1367
    %1699 = vmatmul.mubr.bf16.gmra.mrb[0].mxu0 %v1366
    %v1700 = vpop.f32.mrb[0].mxu0
    %v1701 = vadd.f32 0.0, %v1700
    %v1702 = vpop.f32.mrb[0].mxu0
    %v1703 = vpop.f32.mrb[0].mxu0
    %v1704 = vadd.f32 0.0, %v1703
    %v1705 = vpop.f32.mrb[0].mxu0
    %1706 = vmatprep.mubr.bf16.mxu0 %v1371
    %1707 = vmatmul.mubr.bf16.gmra.mrb[0].mxu0 %v1370
    %v1708 = vpop.f32.mrb[0].mxu0
    %v1709 = vadd.f32 0.0, %v1708
    %v1710 = vpop.f32.mrb[0].mxu0
    %v1711 = vpop.f32.mrb[0].mxu0
    %v1712 = vadd.f32 0.0, %v1711
    %v1713 = vpop.f32.mrb[0].mxu0
    %1714 = vmatprep.mubr.bf16.mxu0 %v1375
    %1715 = vmatmul.mubr.bf16.gmra.mrb[0].mxu0 %v1374
    %v1716 = vpop.f32.mrb[0].mxu0
    %v1717 = vadd.f32 0.0, %v1716
    %v1718 = vpop.f32.mrb[0].mxu0
    %v1719 = vpop.f32.mrb[0].mxu0
    %v1720 = vadd.f32 0.0, %v1719
    %v1721 = vpop.f32.mrb[0].mxu0
    %1722 = vmatprep.mubr.bf16.mxu0 %v1379
    %1723 = vmatmul.mubr.bf16.gmra.mrb[0].mxu0 %v1378
    %v1724 = vpop.f32.mrb[0].mxu0
    %v1725 = vadd.f32 0.0, %v1724
    %v1726 = vpop.f32.mrb[0].mxu0
    %v1727 = vpop.f32.mrb[0].mxu0
    %v1728 = vadd.f32 0.0, %v1727
    %v1729 = vpop.f32.mrb[0].mxu0
    %1730 = vmatprep.mubr.bf16.mxu0 %v1383
    %1731 = vmatmul.mubr.bf16.gmra.mrb[0].mxu0 %v1382
    %v1732 = vpop.f32.mrb[0].mxu0
    %v1733 = vadd.f32 0.0, %v1732
    %v1734 = vpop.f32.mrb[0].mxu0
    %v1735 = vpop.f32.mrb[0].mxu0
    %v1736 = vadd.f32 0.0, %v1735
    %v1737 = vpop.f32.mrb[0].mxu0
    %1738 = vmatprep.mubr.bf16.mxu0 %v1387
    %1739 = vmatmul.mubr.bf16.gmra.mrb[0].mxu0 %v1386
    %v1740 = vpop.f32.mrb[0].mxu0
    %v1741 = vadd.f32 0.0, %v1740
    %v1742 = vpop.f32.mrb[0].mxu0
    %v1743 = vpop.f32.mrb[0].mxu0
    %v1744 = vadd.f32 0.0, %v1743
    %v1745 = vpop.f32.mrb[0].mxu0
    %1746 = vmatprep.mubr.bf16.mxu0 %v1391
    %1747 = vmatmul.mubr.bf16.gmra.mrb[0].mxu0 %v1390
    %v1748 = vpop.f32.mrb[0].mxu0
    %v1749 = vadd.f32 0.0, %v1748
    %v1750 = vpop.f32.mrb[0].mxu0
    %v1751 = vpop.f32.mrb[0].mxu0
    %v1752 = vadd.f32 0.0, %v1751
    %v1753 = vpop.f32.mrb[0].mxu0
    %1754 = vmatprep.mubr.bf16.mxu0 %v1395
    %1755 = vmatmul.mubr.bf16.gmra.mrb[0].mxu0 %v1394
    %v1756 = vpop.f32.mrb[0].mxu0
    %v1757 = vadd.f32 0.0, %v1756
    %v1758 = vpop.f32.mrb[0].mxu0
    %v1759 = vpop.f32.mrb[0].mxu0
    %v1760 = vadd.f32 0.0, %v1759
    %v1761 = vpop.f32.mrb[0].mxu0
    %1762 = vmatprep.mubr.bf16.mxu0 %v1399
    %1763 = vmatmul.mubr.bf16.gmra.mrb[0].mxu0 %v1398
    %v1764 = vpop.f32.mrb[0].mxu0
    %v1765 = vadd.f32 0.0, %v1764
    %v1766 = vpop.f32.mrb[0].mxu0
    %v1767 = vpop.f32.mrb[0].mxu0
    %v1768 = vadd.f32 0.0, %v1767
    %v1769 = vpop.f32.mrb[0].mxu0
    %1770 = vmatprep.mubr.bf16.mxu0 %v1403
    %1771 = vmatmul.mubr.bf16.gmra.mrb[0].mxu0 %v1402
    %v1772 = vpop.f32.mrb[0].mxu0
    %v1773 = vadd.f32 0.0, %v1772
    %v1774 = vpop.f32.mrb[0].mxu0
    %v1775 = vpop.f32.mrb[0].mxu0
    %v1776 = vadd.f32 0.0, %v1775
    %v1777 = vpop.f32.mrb[0].mxu0
    %1778 = vmatprep.mubr.bf16.mxu0 %v1407
    %1779 = vmatmul.mubr.bf16.gmra.mrb[0].mxu0 %v1406
    %v1780 = vpop.f32.mrb[0].mxu0
    %v1781 = vadd.f32 0.0, %v1780
    %v1782 = vpop.f32.mrb[0].mxu0
    %v1783 = vpop.f32.mrb[0].mxu0
    %v1784 = vadd.f32 0.0, %v1783
    %v1785 = vpop.f32.mrb[0].mxu0
    %1786 = vmatprep.mubr.bf16.mxu0 %v1411
    %1787 = vmatmul.mubr.bf16.gmra.mrb[0].mxu0 %v1410
    %v1788 = vpop.f32.mrb[0].mxu0
    %v1789 = vadd.f32 0.0, %v1788
    %v1790 = vpop.f32.mrb[0].mxu0
    %v1791 = vpop.f32.mrb[0].mxu0
    %v1792 = vadd.f32 0.0, %v1791
    %v1793 = vpop.f32.mrb[0].mxu0
    %1794 = vmatprep.mubr.bf16.mxu0 %v1415
    %1795 = vmatmul.mubr.bf16.gmra.mrb[0].mxu0 %v1414
    %v1796 = vpop.f32.mrb[0].mxu0
    %v1797 = vadd.f32 0.0, %v1796
    %v1798 = vpop.f32.mrb[0].mxu0
    %v1799 = vpop.f32.mrb[0].mxu0
    %v1800 = vadd.f32 0.0, %v1799
    %v1801 = vpop.f32.mrb[0].mxu0
    %1802 = vmatprep.mubr.bf16.mxu0 %v1419
    %1803 = vmatmul.mubr.bf16.gmra.mrb[0].mxu0 %v1418
    %v1804 = vpop.f32.mrb[0].mxu0
    %v1805 = vadd.f32 0.0, %v1804
    %v1806 = vpop.f32.mrb[0].mxu0
    %v1807 = vpop.f32.mrb[0].mxu0
    %v1808 = vadd.f32 0.0, %v1807
    %v1809 = vpop.f32.mrb[0].mxu0
    %1810 = vmatprep.mubr.bf16.mxu0 %v1423
    %1811 = vmatmul.mubr.bf16.gmra.mrb[0].mxu0 %v1422
    %v1812 = vpop.f32.mrb[0].mxu0
    %v1813 = vadd.f32 0.0, %v1812
    %v1814 = vpop.f32.mrb[0].mxu0
    %v1815 = vpop.f32.mrb[0].mxu0
    %v1816 = vadd.f32 0.0, %v1815
    %v1817 = vpop.f32.mrb[0].mxu0
    %1818 = vmatprep.mubr.bf16.mxu0 %v1427
    %1819 = vmatmul.mubr.bf16.gmra.mrb[0].mxu0 %v1426
    %v1820 = vpop.f32.mrb[0].mxu0
    %v1821 = vadd.f32 0.0, %v1820
    %v1822 = vpop.f32.mrb[0].mxu0
    %v1823 = vpop.f32.mrb[0].mxu0
    %v1824 = vadd.f32 0.0, %v1823
    %v1825 = vpop.f32.mrb[0].mxu0
    %1826 = vmatprep.mubr.bf16.mxu0 %v1431
    %1827 = vmatmul.mubr.bf16.gmra.mrb[0].mxu0 %v1430
    %v1828 = vpop.f32.mrb[0].mxu0
    %v1829 = vadd.f32 0.0, %v1828
    %v1830 = vpop.f32.mrb[0].mxu0
    %v1831 = vpop.f32.mrb[0].mxu0
    %v1832 = vadd.f32 0.0, %v1831
    %v1833 = vpop.f32.mrb[0].mxu0
    %1834 = vmatprep.mubr.bf16.mxu0 %v1435
    %1835 = vmatmul.mubr.bf16.gmra.mrb[0].mxu0 %v1434
    %v1836 = vpop.f32.mrb[0].mxu0
    %v1837 = vadd.f32 0.0, %v1836
    %v1838 = vpop.f32.mrb[0].mxu0
    %v1839 = vpop.f32.mrb[0].mxu0
    %v1840 = vadd.f32 0.0, %v1839
    %v1841 = vpop.f32.mrb[0].mxu0
    %1842 = vmatprep.mubr.bf16.mxu0 %v1439
    %1843 = vmatmul.mubr.bf16.gmra.mrb[0].mxu0 %v1438
    %v1844 = vpop.f32.mrb[0].mxu0
    %v1845 = vadd.f32 0.0, %v1844
    %v1846 = vpop.f32.mrb[0].mxu0
    %v1847 = vpop.f32.mrb[0].mxu0
    %v1848 = vadd.f32 0.0, %v1847
    %v1849 = vpop.f32.mrb[0].mxu0
    %1850 = vmatprep.mubr.bf16.mxu0 %v1443
    %1851 = vmatmul.mubr.bf16.gmra.mrb[0].mxu0 %v1442
    %v1852 = vpop.f32.mrb[0].mxu0
    %v1853 = vadd.f32 0.0, %v1852
    %v1854 = vpop.f32.mrb[0].mxu0
    %v1855 = vpop.f32.mrb[0].mxu0
    %v1856 = vadd.f32 0.0, %v1855
    %v1857 = vpop.f32.mrb[0].mxu0
    %1858 = vmatprep.mubr.bf16.mxu0 %v1447
    %1859 = vmatmul.mubr.bf16.gmra.mrb[0].mxu0 %v1446
    %v1860 = vpop.f32.mrb[0].mxu0
    %v1861 = vadd.f32 0.0, %v1860
    %v1862 = vpop.f32.mrb[0].mxu0
    %v1863 = vpop.f32.mrb[0].mxu0
    %v1864 = vadd.f32 0.0, %v1863
    %v1865 = vpop.f32.mrb[0].mxu0
    %1866 = vdwg.mxu0
    %1867 = vmatprep.subr.bf16.mxu0 0
    %1868 = vmatpush1.bf16.msra.mxu0 %v730
    %1869 = vmatprep.subr.bf16.mxu0 0
    %1870 = vmatpush1.bf16.msra.mxu0 %v731
    %1871 = vmatprep.subr.bf16.mxu0 0
    %1872 = vmatpush1.bf16.msra.mxu0 %v732
    %1873 = vmatprep.subr.bf16.mxu0 0
    %1874 = vmatpush1.bf16.msra.mxu0 %v733
    %1875 = vmatprep.subr.bf16.mxu0 0
    %1876 = vmatpush1.bf16.msra.mxu0 %v734
    %1877 = vmatprep.subr.bf16.mxu0 0
    %1878 = vmatpush1.bf16.msra.mxu0 %v735
    %1879 = vmatprep.subr.bf16.mxu0 0
    %1880 = vmatpush1.bf16.msra.mxu0 %v736
    %1881 = vmatprep.subr.bf16.mxu0 0
    %1882 = vmatpush1.bf16.msra.mxu0 %v737
    %1883 = vmatprep.subr.bf16.mxu0 0
    %1884 = vmatpush1.bf16.msra.mxu0 %v738
    %1885 = vmatprep.subr.bf16.mxu0 0
    %1886 = vmatpush1.bf16.msra.mxu0 %v739
    %1887 = vmatprep.subr.bf16.mxu0 0
    %1888 = vmatpush1.bf16.msra.mxu0 %v740
    %1889 = vmatprep.subr.bf16.mxu0 0
    %1890 = vmatpush1.bf16.msra.mxu0 %v741
    %1891 = vmatprep.subr.bf16.mxu0 0
    %1892 = vmatpush1.bf16.msra.mxu0 %v742
    %1893 = vmatprep.subr.bf16.mxu0 0
    %1894 = vmatpush1.bf16.msra.mxu0 %v743
    %1895 = vmatprep.subr.bf16.mxu0 0
    %1896 = vmatpush1.bf16.msra.mxu0 %v744
    %1897 = vmatprep.subr.bf16.mxu0 0
    %1898 = vmatpush1.bf16.msra.mxu0 %v745
    %1899 = vmatprep.mubr.bf16.mxu0 %v1325
    %1900 = vmatmul.mubr.bf16.gmra.mrb[0].mxu0 %v1324
    %v1901 = vpop.f32.mrb[0].mxu0
    %v1902 = vadd.f32 %v1613, %v1901
    %v1903 = vpop.f32.mrb[0].mxu0
    %v1904 = vpop.f32.mrb[0].mxu0
    %v1905 = vadd.f32 %v1616, %v1904
    %v1906 = vpop.f32.mrb[0].mxu0
    %1907 = vmatprep.mubr.bf16.mxu0 %v1329
    %1908 = vmatmul.mubr.bf16.gmra.mrb[0].mxu0 %v1328
    %v1909 = vpop.f32.mrb[0].mxu0
    %v1910 = vadd.f32 %v1621, %v1909
    %v1911 = vpop.f32.mrb[0].mxu0
    %v1912 = vpop.f32.mrb[0].mxu0
    %v1913 = vadd.f32 %v1624, %v1912
    %v1914 = vpop.f32.mrb[0].mxu0
    %1915 = vmatprep.mubr.bf16.mxu0 %v1333
    %1916 = vmatmul.mubr.bf16.gmra.mrb[0].mxu0 %v1332
    %v1917 = vpop.f32.mrb[0].mxu0
    %v1918 = vadd.f32 %v1629, %v1917
    %v1919 = vpop.f32.mrb[0].mxu0
    %v1920 = vpop.f32.mrb[0].mxu0
    %v1921 = vadd.f32 %v1632, %v1920
    %v1922 = vpop.f32.mrb[0].mxu0
    %1923 = vmatprep.mubr.bf16.mxu0 %v1337
    %1924 = vmatmul.mubr.bf16.gmra.mrb[0].mxu0 %v1336
    %v1925 = vpop.f32.mrb[0].mxu0
    %v1926 = vadd.f32 %v1637, %v1925
    %v1927 = vpop.f32.mrb[0].mxu0
    %v1928 = vpop.f32.mrb[0].mxu0
    %v1929 = vadd.f32 %v1640, %v1928
    %v1930 = vpop.f32.mrb[0].mxu0
    %1931 = vmatprep.mubr.bf16.mxu0 %v1341
    %1932 = vmatmul.mubr.bf16.gmra.mrb[0].mxu0 %v1340
    %v1933 = vpop.f32.mrb[0].mxu0
    %v1934 = vadd.f32 %v1645, %v1933
    %v1935 = vpop.f32.mrb[0].mxu0
    %v1936 = vpop.f32.mrb[0].mxu0
    %v1937 = vadd.f32 %v1648, %v1936
    %v1938 = vpop.f32.mrb[0].mxu0
    %1939 = vmatprep.mubr.bf16.mxu0 %v1345
    %1940 = vmatmul.mubr.bf16.gmra.mrb[0].mxu0 %v1344
    %v1941 = vpop.f32.mrb[0].mxu0
    %v1942 = vadd.f32 %v1653, %v1941
    %v1943 = vpop.f32.mrb[0].mxu0
    %v1944 = vpop.f32.mrb[0].mxu0
    %v1945 = vadd.f32 %v1656, %v1944
    %v1946 = vpop.f32.mrb[0].mxu0
    %1947 = vmatprep.mubr.bf16.mxu0 %v1349
    %1948 = vmatmul.mubr.bf16.gmra.mrb[0].mxu0 %v1348
    %v1949 = vpop.f32.mrb[0].mxu0
    %v1950 = vadd.f32 %v1661, %v1949
    %v1951 = vpop.f32.mrb[0].mxu0
    %v1952 = vpop.f32.mrb[0].mxu0
    %v1953 = vadd.f32 %v1664, %v1952
    %v1954 = vpop.f32.mrb[0].mxu0
    %1955 = vmatprep.mubr.bf16.mxu0 %v1353
    %1956 = vmatmul.mubr.bf16.gmra.mrb[0].mxu0 %v1352
    %v1957 = vpop.f32.mrb[0].mxu0
    %v1958 = vadd.f32 %v1669, %v1957
    %v1959 = vpop.f32.mrb[0].mxu0
    %v1960 = vpop.f32.mrb[0].mxu0
    %v1961 = vadd.f32 %v1672, %v1960
    %v1962 = vpop.f32.mrb[0].mxu0
    %1963 = vmatprep.mubr.bf16.mxu0 %v1357
    %1964 = vmatmul.mubr.bf16.gmra.mrb[0].mxu0 %v1356
    %v1965 = vpop.f32.mrb[0].mxu0
    %v1966 = vadd.f32 %v1677, %v1965
    %v1967 = vpop.f32.mrb[0].mxu0
    %v1968 = vpop.f32.mrb[0].mxu0
    %v1969 = vadd.f32 %v1680, %v1968
    %v1970 = vpop.f32.mrb[0].mxu0
    %1971 = vmatprep.mubr.bf16.mxu0 %v1361
    %1972 = vmatmul.mubr.bf16.gmra.mrb[0].mxu0 %v1360
    %v1973 = vpop.f32.mrb[0].mxu0
    %v1974 = vadd.f32 %v1685, %v1973
    %v1975 = vpop.f32.mrb[0].mxu0
    %v1976 = vpop.f32.mrb[0].mxu0
    %v1977 = vadd.f32 %v1688, %v1976
    %v1978 = vpop.f32.mrb[0].mxu0
    %1979 = vmatprep.mubr.bf16.mxu0 %v1365
    %1980 = vmatmul.mubr.bf16.gmra.mrb[0].mxu0 %v1364
    %v1981 = vpop.f32.mrb[0].mxu0
    %v1982 = vadd.f32 %v1693, %v1981
    %v1983 = vpop.f32.mrb[0].mxu0
    %v1984 = vpop.f32.mrb[0].mxu0
    %v1985 = vadd.f32 %v1696, %v1984
    %v1986 = vpop.f32.mrb[0].mxu0
    %1987 = vmatprep.mubr.bf16.mxu0 %v1369
    %1988 = vmatmul.mubr.bf16.gmra.mrb[0].mxu0 %v1368
    %v1989 = vpop.f32.mrb[0].mxu0
    %v1990 = vadd.f32 %v1701, %v1989
    %v1991 = vpop.f32.mrb[0].mxu0
    %v1992 = vpop.f32.mrb[0].mxu0
    %v1993 = vadd.f32 %v1704, %v1992
    %v1994 = vpop.f32.mrb[0].mxu0
    %1995 = vmatprep.mubr.bf16.mxu0 %v1373
    %1996 = vmatmul.mubr.bf16.gmra.mrb[0].mxu0 %v1372
    %v1997 = vpop.f32.mrb[0].mxu0
    %v1998 = vadd.f32 %v1709, %v1997
    %v1999 = vpop.f32.mrb[0].mxu0
    %v2000 = vpop.f32.mrb[0].mxu0
    %v2001 = vadd.f32 %v1712, %v2000
    %v2002 = vpop.f32.mrb[0].mxu0
    %2003 = vmatprep.mubr.bf16.mxu0 %v1377
    %2004 = vmatmul.mubr.bf16.gmra.mrb[0].mxu0 %v1376
    %v2005 = vpop.f32.mrb[0].mxu0
    %v2006 = vadd.f32 %v1717, %v2005
    %v2007 = vpop.f32.mrb[0].mxu0
    %v2008 = vpop.f32.mrb[0].mxu0
    %v2009 = vadd.f32 %v1720, %v2008
    %v2010 = vpop.f32.mrb[0].mxu0
    %2011 = vmatprep.mubr.bf16.mxu0 %v1381
    %2012 = vmatmul.mubr.bf16.gmra.mrb[0].mxu0 %v1380
    %v2013 = vpop.f32.mrb[0].mxu0
    %v2014 = vadd.f32 %v1725, %v2013
    %v2015 = vpop.f32.mrb[0].mxu0
    %v2016 = vpop.f32.mrb[0].mxu0
    %v2017 = vadd.f32 %v1728, %v2016
    %v2018 = vpop.f32.mrb[0].mxu0
    %2019 = vmatprep.mubr.bf16.mxu0 %v1385
    %2020 = vmatmul.mubr.bf16.gmra.mrb[0].mxu0 %v1384
    %v2021 = vpop.f32.mrb[0].mxu0
    %v2022 = vadd.f32 %v1733, %v2021
    %v2023 = vpop.f32.mrb[0].mxu0
    %v2024 = vpop.f32.mrb[0].mxu0
    %v2025 = vadd.f32 %v1736, %v2024
    %v2026 = vpop.f32.mrb[0].mxu0
    %2027 = vmatprep.mubr.bf16.mxu0 %v1389
    %2028 = vmatmul.mubr.bf16.gmra.mrb[0].mxu0 %v1388
    %v2029 = vpop.f32.mrb[0].mxu0
    %v2030 = vadd.f32 %v1741, %v2029
    %v2031 = vpop.f32.mrb[0].mxu0
    %v2032 = vpop.f32.mrb[0].mxu0
    %v2033 = vadd.f32 %v1744, %v2032
    %v2034 = vpop.f32.mrb[0].mxu0
    %2035 = vmatprep.mubr.bf16.mxu0 %v1393
    %2036 = vmatmul.mubr.bf16.gmra.mrb[0].mxu0 %v1392
    %v2037 = vpop.f32.mrb[0].mxu0
    %v2038 = vadd.f32 %v1749, %v2037
    %v2039 = vpop.f32.mrb[0].mxu0
    %v2040 = vpop.f32.mrb[0].mxu0
    %v2041 = vadd.f32 %v1752, %v2040
    %v2042 = vpop.f32.mrb[0].mxu0
    %2043 = vmatprep.mubr.bf16.mxu0 %v1397
    %2044 = vmatmul.mubr.bf16.gmra.mrb[0].mxu0 %v1396
    %v2045 = vpop.f32.mrb[0].mxu0
    %v2046 = vadd.f32 %v1757, %v2045
    %v2047 = vpop.f32.mrb[0].mxu0
    %v2048 = vpop.f32.mrb[0].mxu0
    %v2049 = vadd.f32 %v1760, %v2048
    %v2050 = vpop.f32.mrb[0].mxu0
    %2051 = vmatprep.mubr.bf16.mxu0 %v1401
    %2052 = vmatmul.mubr.bf16.gmra.mrb[0].mxu0 %v1400
    %v2053 = vpop.f32.mrb[0].mxu0
    %v2054 = vadd.f32 %v1765, %v2053
    %v2055 = vpop.f32.mrb[0].mxu0
    %v2056 = vpop.f32.mrb[0].mxu0
    %v2057 = vadd.f32 %v1768, %v2056
    %v2058 = vpop.f32.mrb[0].mxu0
    %2059 = vmatprep.mubr.bf16.mxu0 %v1405
    %2060 = vmatmul.mubr.bf16.gmra.mrb[0].mxu0 %v1404
    %v2061 = vpop.f32.mrb[0].mxu0
    %v2062 = vadd.f32 %v1773, %v2061
    %v2063 = vpop.f32.mrb[0].mxu0
    %v2064 = vpop.f32.mrb[0].mxu0
    %v2065 = vadd.f32 %v1776, %v2064
    %v2066 = vpop.f32.mrb[0].mxu0
    %2067 = vmatprep.mubr.bf16.mxu0 %v1409
    %2068 = vmatmul.mubr.bf16.gmra.mrb[0].mxu0 %v1408
    %v2069 = vpop.f32.mrb[0].mxu0
    %v2070 = vadd.f32 %v1781, %v2069
    %v2071 = vpop.f32.mrb[0].mxu0
    %v2072 = vpop.f32.mrb[0].mxu0
    %v2073 = vadd.f32 %v1784, %v2072
    %v2074 = vpop.f32.mrb[0].mxu0
    %2075 = vmatprep.mubr.bf16.mxu0 %v1413
    %2076 = vmatmul.mubr.bf16.gmra.mrb[0].mxu0 %v1412
    %v2077 = vpop.f32.mrb[0].mxu0
    %v2078 = vadd.f32 %v1789, %v2077
    %v2079 = vpop.f32.mrb[0].mxu0
    %v2080 = vpop.f32.mrb[0].mxu0
    %v2081 = vadd.f32 %v1792, %v2080
    %v2082 = vpop.f32.mrb[0].mxu0
    %2083 = vmatprep.mubr.bf16.mxu0 %v1417
    %2084 = vmatmul.mubr.bf16.gmra.mrb[0].mxu0 %v1416
    %v2085 = vpop.f32.mrb[0].mxu0
    %v2086 = vadd.f32 %v1797, %v2085
    %v2087 = vpop.f32.mrb[0].mxu0
    %v2088 = vpop.f32.mrb[0].mxu0
    %v2089 = vadd.f32 %v1800, %v2088
    %v2090 = vpop.f32.mrb[0].mxu0
    %2091 = vmatprep.mubr.bf16.mxu0 %v1421
    %2092 = vmatmul.mubr.bf16.gmra.mrb[0].mxu0 %v1420
    %v2093 = vpop.f32.mrb[0].mxu0
    %v2094 = vadd.f32 %v1805, %v2093
    %v2095 = vpop.f32.mrb[0].mxu0
    %v2096 = vpop.f32.mrb[0].mxu0
    %v2097 = vadd.f32 %v1808, %v2096
    %v2098 = vpop.f32.mrb[0].mxu0
    %2099 = vmatprep.mubr.bf16.mxu0 %v1425
    %2100 = vmatmul.mubr.bf16.gmra.mrb[0].mxu0 %v1424
    %v2101 = vpop.f32.mrb[0].mxu0
    %v2102 = vadd.f32 %v1813, %v2101
    %v2103 = vpop.f32.mrb[0].mxu0
    %v2104 = vpop.f32.mrb[0].mxu0
    %v2105 = vadd.f32 %v1816, %v2104
    %v2106 = vpop.f32.mrb[0].mxu0
    %2107 = vmatprep.mubr.bf16.mxu0 %v1429
    %2108 = vmatmul.mubr.bf16.gmra.mrb[0].mxu0 %v1428
    %v2109 = vpop.f32.mrb[0].mxu0
    %v2110 = vadd.f32 %v1821, %v2109
    %v2111 = vpop.f32.mrb[0].mxu0
    %v2112 = vpop.f32.mrb[0].mxu0
    %v2113 = vadd.f32 %v1824, %v2112
    %v2114 = vpop.f32.mrb[0].mxu0
    %2115 = vmatprep.mubr.bf16.mxu0 %v1433
    %2116 = vmatmul.mubr.bf16.gmra.mrb[0].mxu0 %v1432
    %v2117 = vpop.f32.mrb[0].mxu0
    %v2118 = vadd.f32 %v1829, %v2117
    %v2119 = vpop.f32.mrb[0].mxu0
    %v2120 = vpop.f32.mrb[0].mxu0
    %v2121 = vadd.f32 %v1832, %v2120
    %v2122 = vpop.f32.mrb[0].mxu0
    %2123 = vmatprep.mubr.bf16.mxu0 %v1437
    %2124 = vmatmul.mubr.bf16.gmra.mrb[0].mxu0 %v1436
    %v2125 = vpop.f32.mrb[0].mxu0
    %v2126 = vadd.f32 %v1837, %v2125
    %v2127 = vpop.f32.mrb[0].mxu0
    %v2128 = vpop.f32.mrb[0].mxu0
    %v2129 = vadd.f32 %v1840, %v2128
    %v2130 = vpop.f32.mrb[0].mxu0
    %2131 = vmatprep.mubr.bf16.mxu0 %v1441
    %2132 = vmatmul.mubr.bf16.gmra.mrb[0].mxu0 %v1440
    %v2133 = vpop.f32.mrb[0].mxu0
    %v2134 = vadd.f32 %v1845, %v2133
    %v2135 = vpop.f32.mrb[0].mxu0
    %v2136 = vpop.f32.mrb[0].mxu0
    %v2137 = vadd.f32 %v1848, %v2136
    %v2138 = vpop.f32.mrb[0].mxu0
    %2139 = vmatprep.mubr.bf16.mxu0 %v1445
    %2140 = vmatmul.mubr.bf16.gmra.mrb[0].mxu0 %v1444
    %v2141 = vpop.f32.mrb[0].mxu0
    %v2142 = vadd.f32 %v1853, %v2141
    %v2143 = vpop.f32.mrb[0].mxu0
    %v2144 = vpop.f32.mrb[0].mxu0
    %v2145 = vadd.f32 %v1856, %v2144
    %v2146 = vpop.f32.mrb[0].mxu0
    %2147 = vmatprep.mubr.bf16.mxu0 %v1449
    %2148 = vmatmul.mubr.bf16.gmra.mrb[0].mxu0 %v1448
    %v2149 = vpop.f32.mrb[0].mxu0
    %v2150 = vadd.f32 %v1861, %v2149
    %v2151 = vpop.f32.mrb[0].mxu0
    %v2152 = vpop.f32.mrb[0].mxu0
    %v2153 = vadd.f32 %v1864, %v2152
    %v2154 = vpop.f32.mrb[0].mxu0
    %2155 = vdwg.mxu0
    %v2156 = vadd.f32 %v746, %v1902
    %v2157 = vadd.f32 %v747, %v1905
    %v2158 = vadd.f32 %v748, %v1910
    %v2159 = vadd.f32 %v749, %v1913
    %v2160 = vadd.f32 %v750, %v1918
    %v2161 = vadd.f32 %v751, %v1921
    %v2162 = vadd.f32 %v752, %v1926
    %v2163 = vadd.f32 %v753, %v1929
    %v2164 = vadd.f32 %v754, %v1934
    %v2165 = vadd.f32 %v755, %v1937
    %v2166 = vadd.f32 %v756, %v1942
    %v2167 = vadd.f32 %v757, %v1945
    %v2168 = vadd.f32 %v758, %v1950
    %v2169 = vadd.f32 %v759, %v1953
    %v2170 = vadd.f32 %v760, %v1958
    %v2171 = vadd.f32 %v761, %v1961
    %v2172 = vadd.f32 %v762, %v1966
    %v2173 = vadd.f32 %v763, %v1969
    %v2174 = vadd.f32 %v764, %v1974
    %v2175 = vadd.f32 %v765, %v1977
    %v2176 = vadd.f32 %v766, %v1982
    %v2177 = vadd.f32 %v767, %v1985
    %v2178 = vadd.f32 %v768, %v1990
    %v2179 = vadd.f32 %v769, %v1993
    %v2180 = vadd.f32 %v770, %v1998
    %v2181 = vadd.f32 %v771, %v2001
    %v2182 = vadd.f32 %v772, %v2006
    %v2183 = vadd.f32 %v773, %v2009
    %v2184 = vadd.f32 %v774, %v2014
    %v2185 = vadd.f32 %v775, %v2017
    %v2186 = vadd.f32 %v776, %v2022
    %v2187 = vadd.f32 %v777, %v2025
    %v2188 = vadd.f32 %v778, %v2030
    %v2189 = vadd.f32 %v779, %v2033
    %v2190 = vadd.f32 %v780, %v2038
    %v2191 = vadd.f32 %v781, %v2041
    %v2192 = vadd.f32 %v782, %v2046
    %v2193 = vadd.f32 %v783, %v2049
    %v2194 = vadd.f32 %v784, %v2054
    %v2195 = vadd.f32 %v785, %v2057
    %v2196 = vadd.f32 %v786, %v2062
    %v2197 = vadd.f32 %v787, %v2065
    %v2198 = vadd.f32 %v788, %v2070
    %v2199 = vadd.f32 %v789, %v2073
    %v2200 = vadd.f32 %v790, %v2078
    %v2201 = vadd.f32 %v791, %v2081
    %v2202 = vadd.f32 %v792, %v2086
    %v2203 = vadd.f32 %v793, %v2089
    %v2204 = vadd.f32 %v794, %v2094
    %v2205 = vadd.f32 %v795, %v2097
    %v2206 = vadd.f32 %v796, %v2102
    %v2207 = vadd.f32 %v797, %v2105
    %v2208 = vadd.f32 %v798, %v2110
    %v2209 = vadd.f32 %v799, %v2113
    %v2210 = vadd.f32 %v800, %v2118
    %v2211 = vadd.f32 %v801, %v2121
    %v2212 = vadd.f32 %v802, %v2126
    %v2213 = vadd.f32 %v803, %v2129
    %v2214 = vadd.f32 %v804, %v2134
    %v2215 = vadd.f32 %v805, %v2137
    %v2216 = vadd.f32 %v806, %v2142
    %v2217 = vadd.f32 %v807, %v2145
    %v2218 = vadd.f32 %v808, %v2150
    %v2219 = vadd.f32 %v809, %v2153
    %2220 = vst [vmem:[#allocation2] sm:$0xff] %v2156
    %2221 = vst [vmem:[#allocation2 + $0x8] sm:$0xff] %v2157
    %2222 = vst [vmem:[#allocation2 + $0x10] sm:$0xff] %v2158
    %2223 = vst [vmem:[#allocation2 + $0x18] sm:$0xff] %v2159
    %2224 = vst [vmem:[#allocation2 + $0x20] sm:$0xff] %v2160
    %2225 = vst [vmem:[#allocation2 + $0x28] sm:$0xff] %v2161
    %2226 = vst [vmem:[#allocation2 + $0x30] sm:$0xff] %v2162
    %2227 = vst [vmem:[#allocation2 + $0x38] sm:$0xff] %v2163
    %2228 = vst [vmem:[#allocation2 + $0x40] sm:$0xff] %v2164
    %2229 = vst [vmem:[#allocation2 + $0x48] sm:$0xff] %v2165
    %2230 = vst [vmem:[#allocation2 + $0x50] sm:$0xff] %v2166
    %2231 = vst [vmem:[#allocation2 + $0x58] sm:$0xff] %v2167
    %2232 = vst [vmem:[#allocation2 + $0x60] sm:$0xff] %v2168
    %2233 = vst [vmem:[#allocation2 + $0x68] sm:$0xff] %v2169
    %2234 = vst [vmem:[#allocation2 + $0x70] sm:$0xff] %v2170
    %2235 = vst [vmem:[#allocation2 + $0x78] sm:$0xff] %v2171
    %2236 = vst [vmem:[#allocation2 + $0x80] sm:$0xff] %v2172
    %2237 = vst [vmem:[#allocation2 + $0x88] sm:$0xff] %v2173
    %2238 = vst [vmem:[#allocation2 + $0x90] sm:$0xff] %v2174
    %2239 = vst [vmem:[#allocation2 + $0x98] sm:$0xff] %v2175
    %2240 = vst [vmem:[#allocation2 + $0xa0] sm:$0xff] %v2176
    %2241 = vst [vmem:[#allocation2 + $0xa8] sm:$0xff] %v2177
    %2242 = vst [vmem:[#allocation2 + $0xb0] sm:$0xff] %v2178
    %2243 = vst [vmem:[#allocation2 + $0xb8] sm:$0xff] %v2179
    %2244 = vst [vmem:[#allocation2 + $0xc0] sm:$0xff] %v2180
    %2245 = vst [vmem:[#allocation2 + $0xc8] sm:$0xff] %v2181
    %2246 = vst [vmem:[#allocation2 + $0xd0] sm:$0xff] %v2182
    %2247 = vst [vmem:[#allocation2 + $0xd8] sm:$0xff] %v2183
    %2248 = vst [vmem:[#allocation2 + $0xe0] sm:$0xff] %v2184
    %2249 = vst [vmem:[#allocation2 + $0xe8] sm:$0xff] %v2185
    %2250 = vst [vmem:[#allocation2 + $0xf0] sm:$0xff] %v2186
    %2251 = vst [vmem:[#allocation2 + $0xf8] sm:$0xff] %v2187
    %2252 = vst [vmem:[#allocation2 + $0x100] sm:$0xff] %v2188
    %2253 = vst [vmem:[#allocation2 + $0x108] sm:$0xff] %v2189
    %2254 = vst [vmem:[#allocation2 + $0x110] sm:$0xff] %v2190
    %2255 = vst [vmem:[#allocation2 + $0x118] sm:$0xff] %v2191
    %2256 = vst [vmem:[#allocation2 + $0x120] sm:$0xff] %v2192
    %2257 = vst [vmem:[#allocation2 + $0x128] sm:$0xff] %v2193
    %2258 = vst [vmem:[#allocation2 + $0x130] sm:$0xff] %v2194
    %2259 = vst [vmem:[#allocation2 + $0x138] sm:$0xff] %v2195
    %2260 = vst [vmem:[#allocation2 + $0x140] sm:$0xff] %v2196
    %2261 = vst [vmem:[#allocation2 + $0x148] sm:$0xff] %v2197
    %2262 = vst [vmem:[#allocation2 + $0x150] sm:$0xff] %v2198
    %2263 = vst [vmem:[#allocation2 + $0x158] sm:$0xff] %v2199
    %2264 = vst [vmem:[#allocation2 + $0x160] sm:$0xff] %v2200
    %2265 = vst [vmem:[#allocation2 + $0x168] sm:$0xff] %v2201
    %2266 = vst [vmem:[#allocation2 + $0x170] sm:$0xff] %v2202
    %2267 = vst [vmem:[#allocation2 + $0x178] sm:$0xff] %v2203
    %2268 = vst [vmem:[#allocation2 + $0x180] sm:$0xff] %v2204
    %2269 = vst [vmem:[#allocation2 + $0x188] sm:$0xff] %v2205
    %2270 = vst [vmem:[#allocation2 + $0x190] sm:$0xff] %v2206
    %2271 = vst [vmem:[#allocation2 + $0x198] sm:$0xff] %v2207
    %2272 = vst [vmem:[#allocation2 + $0x1a0] sm:$0xff] %v2208
    %2273 = vst [vmem:[#allocation2 + $0x1a8] sm:$0xff] %v2209
    %2274 = vst [vmem:[#allocation2 + $0x1b0] sm:$0xff] %v2210
    %2275 = vst [vmem:[#allocation2 + $0x1b8] sm:$0xff] %v2211
    %2276 = vst [vmem:[#allocation2 + $0x1c0] sm:$0xff] %v2212
    %2277 = vst [vmem:[#allocation2 + $0x1c8] sm:$0xff] %v2213
    %2278 = vst [vmem:[#allocation2 + $0x1d0] sm:$0xff] %v2214
    %2279 = vst [vmem:[#allocation2 + $0x1d8] sm:$0xff] %v2215
    %2280 = vst [vmem:[#allocation2 + $0x1e0] sm:$0xff] %v2216
    %2281 = vst [vmem:[#allocation2 + $0x1e8] sm:$0xff] %v2217
    %2282 = vst [vmem:[#allocation2 + $0x1f0] sm:$0xff] %v2218
    %2283 = vst [vmem:[#allocation2 + $0x1f8] sm:$0xff] %v2219
    // Predicated region
    $region26: #{gcn_forward.2} parent=1 // pred_check
      %p2284 = pneg %p32
    $region27: #{gcn_forward.2} parent=1 // pred_check_branch
      %2286 = sbr.rel (%p2284) target = $region29
    $region28: #{gcn_forward.2} parent=1 // pred_region
      %v2287 = vld [vmem:[#allocation2] sm:$0xff]
      %v2288 = vld [vmem:[#allocation2 + $0x8] sm:$0xff]
      %v2289 = vld [vmem:[#allocation2 + $0x10] sm:$0xff]
      %v2290 = vld [vmem:[#allocation2 + $0x18] sm:$0xff]
      %v2291 = vld [vmem:[#allocation2 + $0x20] sm:$0xff]
      %v2292 = vld [vmem:[#allocation2 + $0x28] sm:$0xff]
      %v2293 = vld [vmem:[#allocation2 + $0x30] sm:$0xff]
      %v2294 = vld [vmem:[#allocation2 + $0x38] sm:$0xff]
      %v2295 = vld [vmem:[#allocation2 + $0x40] sm:$0xff]
      %v2296 = vld [vmem:[#allocation2 + $0x48] sm:$0xff]
      %v2297 = vld [vmem:[#allocation2 + $0x50] sm:$0xff]
      %v2298 = vld [vmem:[#allocation2 + $0x58] sm:$0xff]
      %v2299 = vld [vmem:[#allocation2 + $0x60] sm:$0xff]
      %v2300 = vld [vmem:[#allocation2 + $0x68] sm:$0xff]
      %v2301 = vld [vmem:[#allocation2 + $0x70] sm:$0xff]
      %v2302 = vld [vmem:[#allocation2 + $0x78] sm:$0xff]
      %v2303 = vld [vmem:[#allocation2 + $0x80] sm:$0xff]
      %v2304 = vld [vmem:[#allocation2 + $0x88] sm:$0xff]
      %v2305 = vld [vmem:[#allocation2 + $0x90] sm:$0xff]
      %v2306 = vld [vmem:[#allocation2 + $0x98] sm:$0xff]
      %v2307 = vld [vmem:[#allocation2 + $0xa0] sm:$0xff]
      %v2308 = vld [vmem:[#allocation2 + $0xa8] sm:$0xff]
      %v2309 = vld [vmem:[#allocation2 + $0xb0] sm:$0xff]
      %v2310 = vld [vmem:[#allocation2 + $0xb8] sm:$0xff]
      %v2311 = vld [vmem:[#allocation2 + $0xc0] sm:$0xff]
      %v2312 = vld [vmem:[#allocation2 + $0xc8] sm:$0xff]
      %v2313 = vld [vmem:[#allocation2 + $0xd0] sm:$0xff]
      %v2314 = vld [vmem:[#allocation2 + $0xd8] sm:$0xff]
      %v2315 = vld [vmem:[#allocation2 + $0xe0] sm:$0xff]
      %v2316 = vld [vmem:[#allocation2 + $0xe8] sm:$0xff]
      %v2317 = vld [vmem:[#allocation2 + $0xf0] sm:$0xff]
      %v2318 = vld [vmem:[#allocation2 + $0xf8] sm:$0xff]
      %v2319 = vld [vmem:[#allocation2 + $0x100] sm:$0xff]
      %v2320 = vld [vmem:[#allocation2 + $0x108] sm:$0xff]
      %v2321 = vld [vmem:[#allocation2 + $0x110] sm:$0xff]
      %v2322 = vld [vmem:[#allocation2 + $0x118] sm:$0xff]
      %v2323 = vld [vmem:[#allocation2 + $0x120] sm:$0xff]
      %v2324 = vld [vmem:[#allocation2 + $0x128] sm:$0xff]
      %v2325 = vld [vmem:[#allocation2 + $0x130] sm:$0xff]
      %v2326 = vld [vmem:[#allocation2 + $0x138] sm:$0xff]
      %v2327 = vld [vmem:[#allocation2 + $0x140] sm:$0xff]
      %v2328 = vld [vmem:[#allocation2 + $0x148] sm:$0xff]
      %v2329 = vld [vmem:[#allocation2 + $0x150] sm:$0xff]
      %v2330 = vld [vmem:[#allocation2 + $0x158] sm:$0xff]
      %v2331 = vld [vmem:[#allocation2 + $0x160] sm:$0xff]
      %v2332 = vld [vmem:[#allocation2 + $0x168] sm:$0xff]
      %v2333 = vld [vmem:[#allocation2 + $0x170] sm:$0xff]
      %v2334 = vld [vmem:[#allocation2 + $0x178] sm:$0xff]
      %v2335 = vld [vmem:[#allocation2 + $0x180] sm:$0xff]
      %v2336 = vld [vmem:[#allocation2 + $0x188] sm:$0xff]
      %v2337 = vld [vmem:[#allocation2 + $0x190] sm:$0xff]
      %v2338 = vld [vmem:[#allocation2 + $0x198] sm:$0xff]
      %v2339 = vld [vmem:[#allocation2 + $0x1a0] sm:$0xff]
      %v2340 = vld [vmem:[#allocation2 + $0x1a8] sm:$0xff]
      %v2341 = vld [vmem:[#allocation2 + $0x1b0] sm:$0xff]
      %v2342 = vld [vmem:[#allocation2 + $0x1b8] sm:$0xff]
      %v2343 = vld [vmem:[#allocation2 + $0x1c0] sm:$0xff]
      %v2344 = vld [vmem:[#allocation2 + $0x1c8] sm:$0xff]
      %v2345 = vld [vmem:[#allocation2 + $0x1d0] sm:$0xff]
      %v2346 = vld [vmem:[#allocation2 + $0x1d8] sm:$0xff]
      %v2347 = vld [vmem:[#allocation2 + $0x1e0] sm:$0xff]
      %v2348 = vld [vmem:[#allocation2 + $0x1e8] sm:$0xff]
      %v2349 = vld [vmem:[#allocation2 + $0x1f0] sm:$0xff]
      %v2350 = vld [vmem:[#allocation2 + $0x1f8] sm:$0xff]
      %v2351 = vld [vmem:[%s3] sm:$0x1]
      %v2353 = vlaneseq
      %v2354 = vshrl.u32 %v2353, 7
      %v2355 = vsub.s32 0, %v2354
      %v2356 = vrot.slane %v2351, %v2355
      %v2358 = vadd.f32 %v2287, %v2356
      %v2359 = vadd.f32 %v2288, %v2356
      %v2360 = vadd.f32 %v2289, %v2356
      %v2361 = vadd.f32 %v2290, %v2356
      %v2362 = vadd.f32 %v2291, %v2356
      %v2363 = vadd.f32 %v2292, %v2356
      %v2364 = vadd.f32 %v2293, %v2356
      %v2365 = vadd.f32 %v2294, %v2356
      %v2366 = vadd.f32 %v2295, %v2356
      %v2367 = vadd.f32 %v2296, %v2356
      %v2368 = vadd.f32 %v2297, %v2356
      %v2369 = vadd.f32 %v2298, %v2356
      %v2370 = vadd.f32 %v2299, %v2356
      %v2371 = vadd.f32 %v2300, %v2356
      %v2372 = vadd.f32 %v2301, %v2356
      %v2373 = vadd.f32 %v2302, %v2356
      %v2374 = vadd.f32 %v2303, %v2356
      %v2375 = vadd.f32 %v2304, %v2356
      %v2376 = vadd.f32 %v2305, %v2356
      %v2377 = vadd.f32 %v2306, %v2356
      %v2378 = vadd.f32 %v2307, %v2356
      %v2379 = vadd.f32 %v2308, %v2356
      %v2380 = vadd.f32 %v2309, %v2356
      %v2381 = vadd.f32 %v2310, %v2356
      %v2382 = vadd.f32 %v2311, %v2356
      %v2383 = vadd.f32 %v2312, %v2356
      %v2384 = vadd.f32 %v2313, %v2356
      %v2385 = vadd.f32 %v2314, %v2356
      %v2386 = vadd.f32 %v2315, %v2356
      %v2387 = vadd.f32 %v2316, %v2356
      %v2388 = vadd.f32 %v2317, %v2356
      %v2389 = vadd.f32 %v2318, %v2356
      %v2390 = vadd.f32 %v2319, %v2356
      %v2391 = vadd.f32 %v2320, %v2356
      %v2392 = vadd.f32 %v2321, %v2356
      %v2393 = vadd.f32 %v2322, %v2356
      %v2394 = vadd.f32 %v2323, %v2356
      %v2395 = vadd.f32 %v2324, %v2356
      %v2396 = vadd.f32 %v2325, %v2356
      %v2397 = vadd.f32 %v2326, %v2356
      %v2398 = vadd.f32 %v2327, %v2356
      %v2399 = vadd.f32 %v2328, %v2356
      %v2400 = vadd.f32 %v2329, %v2356
      %v2401 = vadd.f32 %v2330, %v2356
      %v2402 = vadd.f32 %v2331, %v2356
      %v2403 = vadd.f32 %v2332, %v2356
      %v2404 = vadd.f32 %v2333, %v2356
      %v2405 = vadd.f32 %v2334, %v2356
      %v2406 = vadd.f32 %v2335, %v2356
      %v2407 = vadd.f32 %v2336, %v2356
      %v2408 = vadd.f32 %v2337, %v2356
      %v2409 = vadd.f32 %v2338, %v2356
      %v2410 = vadd.f32 %v2339, %v2356
      %v2411 = vadd.f32 %v2340, %v2356
      %v2412 = vadd.f32 %v2341, %v2356
      %v2413 = vadd.f32 %v2342, %v2356
      %v2414 = vadd.f32 %v2343, %v2356
      %v2415 = vadd.f32 %v2344, %v2356
      %v2416 = vadd.f32 %v2345, %v2356
      %v2417 = vadd.f32 %v2346, %v2356
      %v2418 = vadd.f32 %v2347, %v2356
      %v2419 = vadd.f32 %v2348, %v2356
      %v2420 = vadd.f32 %v2349, %v2356
      %v2421 = vadd.f32 %v2350, %v2356
      %v2422 = vmax.f32 %v2358, 0.0
      %v2423 = vmax.f32 %v2359, 0.0
      %v2424 = vmax.f32 %v2360, 0.0
      %v2425 = vmax.f32 %v2361, 0.0
      %v2426 = vmax.f32 %v2362, 0.0
      %v2427 = vmax.f32 %v2363, 0.0
      %v2428 = vmax.f32 %v2364, 0.0
      %v2429 = vmax.f32 %v2365, 0.0
      %v2430 = vmax.f32 %v2366, 0.0
      %v2431 = vmax.f32 %v2367, 0.0
      %v2432 = vmax.f32 %v2368, 0.0
      %v2433 = vmax.f32 %v2369, 0.0
      %v2434 = vmax.f32 %v2370, 0.0
      %v2435 = vmax.f32 %v2371, 0.0
      %v2436 = vmax.f32 %v2372, 0.0
      %v2437 = vmax.f32 %v2373, 0.0
      %v2438 = vmax.f32 %v2374, 0.0
      %v2439 = vmax.f32 %v2375, 0.0
      %v2440 = vmax.f32 %v2376, 0.0
      %v2441 = vmax.f32 %v2377, 0.0
      %v2442 = vmax.f32 %v2378, 0.0
      %v2443 = vmax.f32 %v2379, 0.0
      %v2444 = vmax.f32 %v2380, 0.0
      %v2445 = vmax.f32 %v2381, 0.0
      %v2446 = vmax.f32 %v2382, 0.0
      %v2447 = vmax.f32 %v2383, 0.0
      %v2448 = vmax.f32 %v2384, 0.0
      %v2449 = vmax.f32 %v2385, 0.0
      %v2450 = vmax.f32 %v2386, 0.0
      %v2451 = vmax.f32 %v2387, 0.0
      %v2452 = vmax.f32 %v2388, 0.0
      %v2453 = vmax.f32 %v2389, 0.0
      %v2454 = vmax.f32 %v2390, 0.0
      %v2455 = vmax.f32 %v2391, 0.0
      %v2456 = vmax.f32 %v2392, 0.0
      %v2457 = vmax.f32 %v2393, 0.0
      %v2458 = vmax.f32 %v2394, 0.0
      %v2459 = vmax.f32 %v2395, 0.0
      %v2460 = vmax.f32 %v2396, 0.0
      %v2461 = vmax.f32 %v2397, 0.0
      %v2462 = vmax.f32 %v2398, 0.0
      %v2463 = vmax.f32 %v2399, 0.0
      %v2464 = vmax.f32 %v2400, 0.0
      %v2465 = vmax.f32 %v2401, 0.0
      %v2466 = vmax.f32 %v2402, 0.0
      %v2467 = vmax.f32 %v2403, 0.0
      %v2468 = vmax.f32 %v2404, 0.0
      %v2469 = vmax.f32 %v2405, 0.0
      %v2470 = vmax.f32 %v2406, 0.0
      %v2471 = vmax.f32 %v2407, 0.0
      %v2472 = vmax.f32 %v2408, 0.0
      %v2473 = vmax.f32 %v2409, 0.0
      %v2474 = vmax.f32 %v2410, 0.0
      %v2475 = vmax.f32 %v2411, 0.0
      %v2476 = vmax.f32 %v2412, 0.0
      %v2477 = vmax.f32 %v2413, 0.0
      %v2478 = vmax.f32 %v2414, 0.0
      %v2479 = vmax.f32 %v2415, 0.0
      %v2480 = vmax.f32 %v2416, 0.0
      %v2481 = vmax.f32 %v2417, 0.0
      %v2482 = vmax.f32 %v2418, 0.0
      %v2483 = vmax.f32 %v2419, 0.0
      %v2484 = vmax.f32 %v2420, 0.0
      %v2485 = vmax.f32 %v2421, 0.0
      %v2486 = vpack.c.bf16 %v2423, %v2422
      %v2487 = vpack.c.bf16 %v2425, %v2424
      %v2488 = vpack.c.bf16 %v2427, %v2426
      %v2489 = vpack.c.bf16 %v2429, %v2428
      %v2490 = vpack.c.bf16 %v2431, %v2430
      %v2491 = vpack.c.bf16 %v2433, %v2432
      %v2492 = vpack.c.bf16 %v2435, %v2434
      %v2493 = vpack.c.bf16 %v2437, %v2436
      %v2494 = vpack.c.bf16 %v2439, %v2438
      %v2495 = vpack.c.bf16 %v2441, %v2440
      %v2496 = vpack.c.bf16 %v2443, %v2442
      %v2497 = vpack.c.bf16 %v2445, %v2444
      %v2498 = vpack.c.bf16 %v2447, %v2446
      %v2499 = vpack.c.bf16 %v2449, %v2448
      %v2500 = vpack.c.bf16 %v2451, %v2450
      %v2501 = vpack.c.bf16 %v2453, %v2452
      %v2502 = vpack.c.bf16 %v2455, %v2454
      %v2503 = vpack.c.bf16 %v2457, %v2456
      %v2504 = vpack.c.bf16 %v2459, %v2458
      %v2505 = vpack.c.bf16 %v2461, %v2460
      %v2506 = vpack.c.bf16 %v2463, %v2462
      %v2507 = vpack.c.bf16 %v2465, %v2464
      %v2508 = vpack.c.bf16 %v2467, %v2466
      %v2509 = vpack.c.bf16 %v2469, %v2468
      %v2510 = vpack.c.bf16 %v2471, %v2470
      %v2511 = vpack.c.bf16 %v2473, %v2472
      %v2512 = vpack.c.bf16 %v2475, %v2474
      %v2513 = vpack.c.bf16 %v2477, %v2476
      %v2514 = vpack.c.bf16 %v2479, %v2478
      %v2515 = vpack.c.bf16 %v2481, %v2480
      %v2516 = vpack.c.bf16 %v2483, %v2482
      %v2517 = vpack.c.bf16 %v2485, %v2484
      %v2550 = vunpack.c.l.b16 %v2486
      %v2551 = vunpack.c.h.b16 %v2486
      %v2552 = vunpack.c.l.b16 %v2487
      %v2553 = vunpack.c.h.b16 %v2487
      %v2554 = vunpack.c.l.b16 %v2488
      %v2555 = vunpack.c.h.b16 %v2488
      %v2556 = vunpack.c.l.b16 %v2489
      %v2557 = vunpack.c.h.b16 %v2489
      %v2558 = vunpack.c.l.b16 %v2490
      %v2559 = vunpack.c.h.b16 %v2490
      %v2560 = vunpack.c.l.b16 %v2491
      %v2561 = vunpack.c.h.b16 %v2491
      %v2562 = vunpack.c.l.b16 %v2492
      %v2563 = vunpack.c.h.b16 %v2492
      %v2564 = vunpack.c.l.b16 %v2493
      %v2565 = vunpack.c.h.b16 %v2493
      %v2566 = vunpack.c.l.b16 %v2494
      %v2567 = vunpack.c.h.b16 %v2494
      %v2568 = vunpack.c.l.b16 %v2495
      %v2569 = vunpack.c.h.b16 %v2495
      %v2570 = vunpack.c.l.b16 %v2496
      %v2571 = vunpack.c.h.b16 %v2496
      %v2572 = vunpack.c.l.b16 %v2497
      %v2573 = vunpack.c.h.b16 %v2497
      %v2574 = vunpack.c.l.b16 %v2498
      %v2575 = vunpack.c.h.b16 %v2498
      %v2576 = vunpack.c.l.b16 %v2499
      %v2577 = vunpack.c.h.b16 %v2499
      %v2578 = vunpack.c.l.b16 %v2500
      %v2579 = vunpack.c.h.b16 %v2500
      %v2580 = vunpack.c.l.b16 %v2501
      %v2581 = vunpack.c.h.b16 %v2501
      %v2582 = vunpack.c.l.b16 %v2502
      %v2583 = vunpack.c.h.b16 %v2502
      %v2584 = vunpack.c.l.b16 %v2503
      %v2585 = vunpack.c.h.b16 %v2503
      %v2586 = vunpack.c.l.b16 %v2504
      %v2587 = vunpack.c.h.b16 %v2504
      %v2588 = vunpack.c.l.b16 %v2505
      %v2589 = vunpack.c.h.b16 %v2505
      %v2590 = vunpack.c.l.b16 %v2506
      %v2591 = vunpack.c.h.b16 %v2506
      %v2592 = vunpack.c.l.b16 %v2507
      %v2593 = vunpack.c.h.b16 %v2507
      %v2594 = vunpack.c.l.b16 %v2508
      %v2595 = vunpack.c.h.b16 %v2508
      %v2596 = vunpack.c.l.b16 %v2509
      %v2597 = vunpack.c.h.b16 %v2509
      %v2598 = vunpack.c.l.b16 %v2510
      %v2599 = vunpack.c.h.b16 %v2510
      %v2600 = vunpack.c.l.b16 %v2511
      %v2601 = vunpack.c.h.b16 %v2511
      %v2602 = vunpack.c.l.b16 %v2512
      %v2603 = vunpack.c.h.b16 %v2512
      %v2604 = vunpack.c.l.b16 %v2513
      %v2605 = vunpack.c.h.b16 %v2513
      %v2606 = vunpack.c.l.b16 %v2514
      %v2607 = vunpack.c.h.b16 %v2514
      %v2608 = vunpack.c.l.b16 %v2515
      %v2609 = vunpack.c.h.b16 %v2515
      %v2610 = vunpack.c.l.b16 %v2516
      %v2611 = vunpack.c.h.b16 %v2516
      %v2612 = vunpack.c.l.b16 %v2517
      %v2613 = vunpack.c.h.b16 %v2517
      %v2614 = vpack.c.b16 %v2550, %v2550
      %v2615 = vpack.c.b16 %v2551, %v2551
      %v2616 = vpack.c.b16 %v2552, %v2552
      %v2617 = vpack.c.b16 %v2553, %v2553
      %v2618 = vpack.c.b16 %v2554, %v2554
      %v2619 = vpack.c.b16 %v2555, %v2555
      %v2620 = vpack.c.b16 %v2556, %v2556
      %v2621 = vpack.c.b16 %v2557, %v2557
      %v2622 = vpack.c.b16 %v2558, %v2558
      %v2623 = vpack.c.b16 %v2559, %v2559
      %v2624 = vpack.c.b16 %v2560, %v2560
      %v2625 = vpack.c.b16 %v2561, %v2561
      %v2626 = vpack.c.b16 %v2562, %v2562
      %v2627 = vpack.c.b16 %v2563, %v2563
      %v2628 = vpack.c.b16 %v2564, %v2564
      %v2629 = vpack.c.b16 %v2565, %v2565
      %v2630 = vpack.c.b16 %v2566, %v2566
      %v2631 = vpack.c.b16 %v2567, %v2567
      %v2632 = vpack.c.b16 %v2568, %v2568
      %v2633 = vpack.c.b16 %v2569, %v2569
      %v2634 = vpack.c.b16 %v2570, %v2570
      %v2635 = vpack.c.b16 %v2571, %v2571
      %v2636 = vpack.c.b16 %v2572, %v2572
      %v2637 = vpack.c.b16 %v2573, %v2573
      %v2638 = vpack.c.b16 %v2574, %v2574
      %v2639 = vpack.c.b16 %v2575, %v2575
      %v2640 = vpack.c.b16 %v2576, %v2576
      %v2641 = vpack.c.b16 %v2577, %v2577
      %v2642 = vpack.c.b16 %v2578, %v2578
      %v2643 = vpack.c.b16 %v2579, %v2579
      %v2644 = vpack.c.b16 %v2580, %v2580
      %v2645 = vpack.c.b16 %v2581, %v2581
      %v2646 = vpack.c.b16 %v2582, %v2582
      %v2647 = vpack.c.b16 %v2583, %v2583
      %v2648 = vpack.c.b16 %v2584, %v2584
      %v2649 = vpack.c.b16 %v2585, %v2585
      %v2650 = vpack.c.b16 %v2586, %v2586
      %v2651 = vpack.c.b16 %v2587, %v2587
      %v2652 = vpack.c.b16 %v2588, %v2588
      %v2653 = vpack.c.b16 %v2589, %v2589
      %v2654 = vpack.c.b16 %v2590, %v2590
      %v2655 = vpack.c.b16 %v2591, %v2591
      %v2656 = vpack.c.b16 %v2592, %v2592
      %v2657 = vpack.c.b16 %v2593, %v2593
      %v2658 = vpack.c.b16 %v2594, %v2594
      %v2659 = vpack.c.b16 %v2595, %v2595
      %v2660 = vpack.c.b16 %v2596, %v2596
      %v2661 = vpack.c.b16 %v2597, %v2597
      %v2662 = vpack.c.b16 %v2598, %v2598
      %v2663 = vpack.c.b16 %v2599, %v2599
      %v2664 = vpack.c.b16 %v2600, %v2600
      %v2665 = vpack.c.b16 %v2601, %v2601
      %v2666 = vpack.c.b16 %v2602, %v2602
      %v2667 = vpack.c.b16 %v2603, %v2603
      %v2668 = vpack.c.b16 %v2604, %v2604
      %v2669 = vpack.c.b16 %v2605, %v2605
      %v2670 = vpack.c.b16 %v2606, %v2606
      %v2671 = vpack.c.b16 %v2607, %v2607
      %v2672 = vpack.c.b16 %v2608, %v2608
      %v2673 = vpack.c.b16 %v2609, %v2609
      %v2674 = vpack.c.b16 %v2610, %v2610
      %v2675 = vpack.c.b16 %v2611, %v2611
      %v2676 = vpack.c.b16 %v2612, %v2612
      %v2677 = vpack.c.b16 %v2613, %v2613
      %2742 = vst [vmem:[%s4] sm:$0xf] %v2614
      %2743 = vst [vmem:[%s4 + $0x4] sm:$0xf] %v2615
      %2744 = vst [vmem:[%s4 + $0x8] sm:$0xf] %v2616
      %2745 = vst [vmem:[%s4 + $0xc] sm:$0xf] %v2617
      %2746 = vst [vmem:[%s4 + $0x10] sm:$0xf] %v2618
      %2747 = vst [vmem:[%s4 + $0x14] sm:$0xf] %v2619
      %2748 = vst [vmem:[%s4 + $0x18] sm:$0xf] %v2620
      %2749 = vst [vmem:[%s4 + $0x1c] sm:$0xf] %v2621
      %2750 = vst [vmem:[%s4 + $0x20] sm:$0xf] %v2622
      %2751 = vst [vmem:[%s4 + $0x24] sm:$0xf] %v2623
      %2752 = vst [vmem:[%s4 + $0x28] sm:$0xf] %v2624
      %2753 = vst [vmem:[%s4 + $0x2c] sm:$0xf] %v2625
      %2754 = vst [vmem:[%s4 + $0x30] sm:$0xf] %v2626
      %2755 = vst [vmem:[%s4 + $0x34] sm:$0xf] %v2627
      %2756 = vst [vmem:[%s4 + $0x38] sm:$0xf] %v2628
      %2757 = vst [vmem:[%s4 + $0x3c] sm:$0xf] %v2629
      %2758 = vst [vmem:[%s4 + $0x40] sm:$0xf] %v2630
      %2759 = vst [vmem:[%s4 + $0x44] sm:$0xf] %v2631
      %2760 = vst [vmem:[%s4 + $0x48] sm:$0xf] %v2632
      %2761 = vst [vmem:[%s4 + $0x4c] sm:$0xf] %v2633
      %2762 = vst [vmem:[%s4 + $0x50] sm:$0xf] %v2634
      %2763 = vst [vmem:[%s4 + $0x54] sm:$0xf] %v2635
      %2764 = vst [vmem:[%s4 + $0x58] sm:$0xf] %v2636
      %2765 = vst [vmem:[%s4 + $0x5c] sm:$0xf] %v2637
      %2766 = vst [vmem:[%s4 + $0x60] sm:$0xf] %v2638
      %2767 = vst [vmem:[%s4 + $0x64] sm:$0xf] %v2639
      %2768 = vst [vmem:[%s4 + $0x68] sm:$0xf] %v2640
      %2769 = vst [vmem:[%s4 + $0x6c] sm:$0xf] %v2641
      %2770 = vst [vmem:[%s4 + $0x70] sm:$0xf] %v2642
      %2771 = vst [vmem:[%s4 + $0x74] sm:$0xf] %v2643
      %2772 = vst [vmem:[%s4 + $0x78] sm:$0xf] %v2644
      %2773 = vst [vmem:[%s4 + $0x7c] sm:$0xf] %v2645
      %2774 = vst [vmem:[%s4 + $0x80] sm:$0xf] %v2646
      %2775 = vst [vmem:[%s4 + $0x84] sm:$0xf] %v2647
      %2776 = vst [vmem:[%s4 + $0x88] sm:$0xf] %v2648
      %2777 = vst [vmem:[%s4 + $0x8c] sm:$0xf] %v2649
      %2778 = vst [vmem:[%s4 + $0x90] sm:$0xf] %v2650
      %2779 = vst [vmem:[%s4 + $0x94] sm:$0xf] %v2651
      %2780 = vst [vmem:[%s4 + $0x98] sm:$0xf] %v2652
      %2781 = vst [vmem:[%s4 + $0x9c] sm:$0xf] %v2653
      %2782 = vst [vmem:[%s4 + $0xa0] sm:$0xf] %v2654
      %2783 = vst [vmem:[%s4 + $0xa4] sm:$0xf] %v2655
      %2784 = vst [vmem:[%s4 + $0xa8] sm:$0xf] %v2656
      %2785 = vst [vmem:[%s4 + $0xac] sm:$0xf] %v2657
      %2786 = vst [vmem:[%s4 + $0xb0] sm:$0xf] %v2658
      %2787 = vst [vmem:[%s4 + $0xb4] sm:$0xf] %v2659
      %2788 = vst [vmem:[%s4 + $0xb8] sm:$0xf] %v2660
      %2789 = vst [vmem:[%s4 + $0xbc] sm:$0xf] %v2661
      %2790 = vst [vmem:[%s4 + $0xc0] sm:$0xf] %v2662
      %2791 = vst [vmem:[%s4 + $0xc4] sm:$0xf] %v2663
      %2792 = vst [vmem:[%s4 + $0xc8] sm:$0xf] %v2664
      %2793 = vst [vmem:[%s4 + $0xcc] sm:$0xf] %v2665
      %2794 = vst [vmem:[%s4 + $0xd0] sm:$0xf] %v2666
      %2795 = vst [vmem:[%s4 + $0xd4] sm:$0xf] %v2667
      %2796 = vst [vmem:[%s4 + $0xd8] sm:$0xf] %v2668
      %2797 = vst [vmem:[%s4 + $0xdc] sm:$0xf] %v2669
      %2798 = vst [vmem:[%s4 + $0xe0] sm:$0xf] %v2670
      %2799 = vst [vmem:[%s4 + $0xe4] sm:$0xf] %v2671
      %2800 = vst [vmem:[%s4 + $0xe8] sm:$0xf] %v2672
      %2801 = vst [vmem:[%s4 + $0xec] sm:$0xf] %v2673
      %2802 = vst [vmem:[%s4 + $0xf0] sm:$0xf] %v2674
      %2803 = vst [vmem:[%s4 + $0xf4] sm:$0xf] %v2675
      %2804 = vst [vmem:[%s4 + $0xf8] sm:$0xf] %v2676
      %2805 = vst [vmem:[%s4 + $0xfc] sm:$0xf] %v2677
    $region29: #{gcn_forward.2} parent=1 // pred_fallthru
      _
    // Predicated region
    $region30: #{gcn_forward.2} parent=1 // pred_check
      _
    $region31: #{gcn_forward.2} parent=1 // pred_check_branch
      %2807 = sbr.rel (0) target = $region33
    $region32: #{gcn_forward.2} parent=1 // pred_region
      _
    $region33: #{gcn_forward.2} parent=1 // pred_fallthru
      _
    // Predicated region
    $region34: #{gcn_forward.2} parent=1 // pred_check
      _
    $region35: #{gcn_forward.2} parent=1 // pred_check_branch
      %2809 = sbr.rel (0) target = $region37
    $region36: #{gcn_forward.2} parent=1 // pred_region
      _
    $region37: #{gcn_forward.2} parent=1 // pred_fallthru
      _
    %2810 = vsyncpa [#allocation4], 1

</llo_original>
